<compile_context>
chip_gen: v5e
topology: v5e:2x2
jax: 0.10.0
libtpu: 0.0.40
codegen_flags: <defaults>
</compile_context>

<pallas_src>
import math
from functools import partial

import jax
import jax.numpy as jnp
from jax.experimental import pallas as pl
from jax.experimental.pallas import tpu as pltpu

EPS = 1e-5        # nn.LayerNorm default eps
NEG_INF = -1e30   # mask value for padded key positions


def _layernorm(x, g, b):
    """LayerNorm over the last axis (matches nn.LayerNorm)."""
    mu = jnp.mean(x, axis=-1, keepdims=True)
    xc = x - mu
    var = jnp.mean(xc * xc, axis=-1, keepdims=True)
    return xc * jax.lax.rsqrt(var + EPS) * g + b


def _gelu(x):
    c = math.sqrt(2.0 / math.pi)
    return 0.5 * x * (1.0 + jnp.tanh(c * (x + 0.044715 * x * x * x)))


def _extract_patches(x_nchw, patch_size):
    """(B,C,H,W) -> (B, num_patches, C*p*p); rows flattened in (c,i,j) order,
    patches in row-major (h',w') order == Conv2d(stride=p) + flatten(2).T."""
    B, C, H, W = x_nchw.shape
    p = patch_size
    hp, wp = H // p, W // p
    return (x_nchw.reshape(B, C, hp, p, wp, p)
            .transpose(0, 2, 4, 1, 3, 5)
            .reshape(B, hp * wp, C * p * p))


# ----------------------------------------------------------------------------
# Fused ViT kernel: patch embed -> depth x transformer block -> LN -> head
# ----------------------------------------------------------------------------
def vit_kernel(patches_ref, pw_ref, pb_ref, pos_ref, tail_ref,
               wqkv_ref, wo_ref, w1_ref, w2_ref, lvec_ref,
               normg_ref, normb_ref, headw_ref, headb_ref,
               out_ref, x_scr,
               *, num_heads, num_layers, num_patches, seq_valid, seq_pad, bblk):
    f32, bf16 = jnp.float32, jnp.bfloat16
    H, P, S, Bb = num_heads, num_patches, seq_pad, bblk
    E = pw_ref.shape[1]
    Hdn = w1_ref.shape[2]
    hd = E // H
    M = Bb * S
    layer = pl.program_id(1)

    # --- patch embedding (conv-as-matmul) + cls + pos: only before layer 0 ---
    @pl.when(layer == 0)
    def _embed():
        pt = patches_ref[...]                               # (Bb, P, K) bf16
        K = pt.shape[-1]
        proj = jnp.dot(pt.reshape(Bb * P, K), pw_ref[...],
                       preferred_element_type=f32).reshape(Bb, P, E)
        x_scr[:, 0:P, :] = proj + pb_ref[...] + pos_ref[...]
        # cls token (+ pos[0]) lives at row P; rows P+1..S-1 are zero padding.
        x_scr[:, P:S, :] = jnp.broadcast_to(tail_ref[...], (Bb, S - P, E))

    x = x_scr[...].reshape(M, E)                            # (Bb*S, E) f32, VMEM resident

    # packed per-layer small operands: one streamed DMA per layer step
    lv = lvec_ref[0]                                        # (8, Wpad) f32
    ln1_g, ln1_b = lv[0:1, 0:E], lv[1:2, 0:E]
    ln2_g, ln2_b = lv[2:3, 0:E], lv[3:4, 0:E]
    bo, b2 = lv[4:5, 0:E], lv[5:6, 0:E]
    bqkv = lv[6:7, 0:3 * E]
    b1 = lv[7:8, 0:Hdn]

    # --- multi-head self-attention (residual) ---
    xn = _layernorm(x, ln1_g, ln1_b)
    # fused QKV projection: one (M,E)@(E,3E) matmul; 1/sqrt(hd) folded into q cols.
    qkv = jnp.dot(xn.astype(bf16), wqkv_ref[0], preferred_element_type=f32) + bqkv

    ctx_parts = []
    for h in range(H):                                      # static unroll over heads
        qh = qkv[:, h * hd:(h + 1) * hd].reshape(Bb, S, hd).astype(bf16)
        kh = qkv[:, E + h * hd:E + (h + 1) * hd].reshape(Bb, S, hd).astype(bf16)
        vh = qkv[:, 2 * E + h * hd:2 * E + (h + 1) * hd].reshape(Bb, S, hd).astype(bf16)
        s = jnp.einsum('bqd,bkd->bqk', qh, kh, preferred_element_type=f32)
        if seq_valid != S:                                  # mask padded key positions
            kpos = jax.lax.broadcasted_iota(jnp.int32, s.shape, 2)
            s = jnp.where(kpos < seq_valid, s, NEG_INF)
        s = s - jnp.max(s, axis=-1, keepdims=True)
        e = jnp.exp(s)
        p = e / jnp.sum(e, axis=-1, keepdims=True)          # exact reciprocal (parity)
        ctx = jnp.einsum('bqk,bkd->bqd', p.astype(bf16), vh,
                         preferred_element_type=f32)        # (Bb, S, hd)
        ctx_parts.append(ctx.reshape(M, hd))
    ctx = jnp.concatenate(ctx_parts, axis=-1)               # (M, E), head-major columns
    # single out-projection contraction of depth E (not H matmuls of depth hd)
    attn = jnp.dot(ctx.astype(bf16), wo_ref[0], preferred_element_type=f32) + bo
    x = x + attn

    # --- MLP (residual) ---
    xn = _layernorm(x, ln2_g, ln2_b)
    h1 = _gelu(jnp.dot(xn.astype(bf16), w1_ref[0], preferred_element_type=f32) + b1)
    y = jnp.dot(h1.astype(bf16), w2_ref[0], preferred_element_type=f32) + b2
    x = x + y
    x_scr[...] = x.reshape(Bb, S, E)                        # stays in VMEM for next layer

    # --- final LayerNorm + classification head: after the last layer ---
    @pl.when(layer == num_layers - 1)
    def _head():
        rows = [x[bb * S + P: bb * S + P + 1, :] for bb in range(Bb)]  # cls rows
        cls = rows[0] if Bb == 1 else jnp.concatenate(rows, axis=0)    # (Bb, E)
        xh = _layernorm(cls, normg_ref[...], normb_ref[...])
        out_ref[0] = jnp.dot(xh.astype(bf16), headw_ref[...],
                             preferred_element_type=f32) + headb_ref[...]


def _vmem_budget(*, E, Hdn, K, P, S, Bblk, Cpad, Wpad):
    """Rough scoped-VMEM footprint with headroom, clamped to [32, 48] MiB."""
    bf2, f4 = 2, 4
    per_layer = 2 * (bf2 * (E * 3 * E + E * E + 2 * E * Hdn) + f4 * 8 * Wpad)  # double-buffered
    fixed = bf2 * (K * E + E * Cpad) + f4 * ((1 + P + (S - P) + 2) * E + Cpad)
    patches = 2 * bf2 * Bblk * P * K
    acts = f4 * Bblk * S * (6 * E + 2 * max(3 * E, Hdn) + 2 * S)               # scratch + temps
    total = per_layer + fixed + patches + acts + (8 << 20)
    return int(min(max(total, 32 << 20), 48 << 20))


def vit_forward(x_nchw, prep, *, patch_size, num_heads, num_layers, seq_pad,
                batch_block, num_classes):
    B = x_nchw.shape[0]
    Bblk = batch_block
    assert B % Bblk == 0, "batch must be divisible by the batch block"
    patches = _extract_patches(x_nchw, patch_size).astype(jnp.bfloat16)
    _, P, K = patches.shape
    E = prep['patch_w'].shape[1]
    Hdn = prep['w1'].shape[2]
    Cpad = prep['head_w'].shape[1]
    Wpad = prep['lvecs'].shape[2]
    L, H = num_layers, num_heads
    tail_rows = seq_pad - P

    def fixed(shape):            # loaded once, resident across the whole grid
        n = len(shape)
        return pl.BlockSpec(shape, lambda b, l, n=n: (0,) * n)

    def per_layer(shape):        # streamed (double-buffered) per depth step
        n = len(shape)
        return pl.BlockSpec((1,) + shape, lambda b, l, n=n: (l,) + (0,) * n)

    kernel = partial(vit_kernel, num_heads=H, num_layers=L, num_patches=P,
                     seq_valid=P + 1, seq_pad=seq_pad, bblk=Bblk)

    vmem_limit = _vmem_budget(E=E, Hdn=Hdn, K=K, P=P, S=seq_pad,
                              Bblk=Bblk, Cpad=Cpad, Wpad=Wpad)

    out = pl.pallas_call(
        kernel,
        out_shape=jax.ShapeDtypeStruct((B // Bblk, Bblk, Cpad), jnp.float32),
        grid_spec=pltpu.PrefetchScalarGridSpec(
            num_scalar_prefetch=0,
            grid=(B // Bblk, L),
            in_specs=[
                pl.BlockSpec((Bblk, P, K), lambda b, l: (b, 0, 0)),   # patches
                fixed((K, E)),                                        # patch proj weight
                fixed((1, E)),                                        # patch proj bias
                fixed((P, E)),                                        # pos embed (patch rows)
                fixed((tail_rows, E)),                                # [cls+pos0 ; zero pad]
                per_layer((E, 3 * E)),                                # fused qkv weight
                per_layer((E, E)),                                    # out-proj weight
                per_layer((E, Hdn)),                                  # mlp fc1 weight
                per_layer((Hdn, E)),                                  # mlp fc2 weight
                per_layer((8, Wpad)),                                 # packed LN/bias vectors
                fixed((1, E)), fixed((1, E)),                         # final norm gamma/beta
                fixed((E, Cpad)), fixed((1, Cpad)),                   # classifier (lane-padded)
            ],
            out_specs=pl.BlockSpec((1, Bblk, Cpad), lambda b, l: (b, 0, 0)),
            scratch_shapes=[pltpu.VMEM((Bblk, seq_pad, E), jnp.float32)],
        ),
        compiler_params=pltpu.CompilerParams(
            dimension_semantics=("parallel", "arbitrary"),
            vmem_limit_bytes=vmem_limit),
    )(patches, prep['patch_w'], prep['patch_b'], prep['pos_patch'], prep['tail'],
      prep['wqkv'], prep['wo'], prep['w1'], prep['w2'], prep['lvecs'],
      prep['norm_g'], prep['norm_b'], prep['head_w'], prep['head_b'])
    return out.reshape(B, Cpad)[:, :num_classes]


# ----------------------------------------------------------------------------
# Parameter handling: torch-layout init -> fused-kernel layout
# ----------------------------------------------------------------------------
def init_raw_params(key, *, img_size, patch_size, in_chans, num_classes,
                    embed_dim, depth, mlp_ratio):
    """Parameters in their PyTorch layouts (all fp32)."""
    P = (img_size // patch_size) ** 2
    hidden = int(embed_dim * mlp_ratio)
    std = 0.02
    ks = jax.random.split(key, 5 + depth)
    nrm = lambda k, shp: jax.random.normal(k, shp, jnp.float32) * std
    raw = dict(
        conv_w=nrm(ks[0], (embed_dim, in_chans, patch_size, patch_size)),
        conv_b=nrm(ks[1], (embed_dim,)),
        cls=jnp.zeros((embed_dim,), jnp.float32),              # torch init: zeros
        pos=jax.random.truncated_normal(ks[2], -2.0, 2.0,
                                        (P + 1, embed_dim), jnp.float32) * std,
        norm_w=jnp.ones((embed_dim,), jnp.float32),
        norm_b=jnp.zeros((embed_dim,), jnp.float32),
        head_w=nrm(ks[3], (num_classes, embed_dim)),
        head_b=nrm(ks[4], (num_classes,)),
        blocks=[],
    )
    for d in range(depth):
        bk = jax.random.split(ks[5 + d], 6)
        raw['blocks'].append(dict(
            ln1_w=jnp.ones((embed_dim,), jnp.float32),
            ln1_b=jnp.zeros((embed_dim,), jnp.float32),
            in_w=nrm(bk[0], (3 * embed_dim, embed_dim)),
            in_b=nrm(bk[1], (3 * embed_dim,)),
            out_w=nrm(bk[2], (embed_dim, embed_dim)),
            out_b=nrm(bk[3], (embed_dim,)),
            ln2_w=jnp.ones((embed_dim,), jnp.float32),
            ln2_b=jnp.zeros((embed_dim,), jnp.float32),
            fc1_w=nrm(bk[4], (hidden, embed_dim)),
            fc1_b=jnp.zeros((hidden,), jnp.float32),
            fc2_w=nrm(bk[5], (embed_dim, hidden)),
            fc2_b=jnp.zeros((embed_dim,), jnp.float32),
        ))
    return raw


def prepare_params(raw, *, num_heads, seq_pad, num_classes):
    """torch layouts -> fused-kernel layouts: per-layer stacking, fused qkv,
    attention scale folded into q, packed per-layer vectors, bf16 matmul weights,
    lane-padded classifier."""
    E = raw['cls'].shape[0]
    H = num_heads
    hd = E // H
    P = raw['pos'].shape[0] - 1
    Hdn = raw['blocks'][0]['fc1_w'].shape[0]
    scale = 1.0 / math.sqrt(hd)
    bf16 = jnp.bfloat16
    Wpad = ((max(3 * E, Hdn) + 127) // 128) * 128
    Cpad = ((num_classes + 127) // 128) * 128

    wqkv, wo, w1, w2, lvecs = [], [], [], [], []
    for blk in raw['blocks']:
        # torch in_proj rows: [q(E, head-major); k(E); v(E)] -> columns after .T
        in_w = jnp.concatenate([blk['in_w'][:E] * scale, blk['in_w'][E:]], axis=0)
        in_b = jnp.concatenate([blk['in_b'][:E] * scale, blk['in_b'][E:]])
        wqkv.append(in_w.T)                      # (E, 3E)
        wo.append(blk['out_w'].T)                # (E, E), rows head-major
        w1.append(blk['fc1_w'].T)                # (E, Hdn)
        w2.append(blk['fc2_w'].T)                # (Hdn, E)
        v = jnp.zeros((8, Wpad), jnp.float32)
        v = v.at[0, :E].set(blk['ln1_w']).at[1, :E].set(blk['ln1_b'])
        v = v.at[2, :E].set(blk['ln2_w']).at[3, :E].set(blk['ln2_b'])
        v = v.at[4, :E].set(blk['out_b']).at[5, :E].set(blk['fc2_b'])
        v = v.at[6, :3 * E].set(in_b).at[7, :Hdn].set(blk['fc1_b'])
        lvecs.append(v)

    head_w = jnp.zeros((E, Cpad), jnp.float32).at[:, :num_classes].set(raw['head_w'].T)
    head_b = jnp.zeros((1, Cpad), jnp.float32).at[0, :num_classes].set(raw['head_b'])
    tail = jnp.zeros((seq_pad - P, E), jnp.float32).at[0].set(raw['cls'] + raw['pos'][0])

    return dict(
        patch_w=raw['conv_w'].reshape(E, -1).T.astype(bf16),   # (C*p*p, E)
        patch_b=raw['conv_b'].reshape(1, E),
        pos_patch=raw['pos'][1:1 + P],
        tail=tail,
        wqkv=jnp.stack(wqkv).astype(bf16),
        wo=jnp.stack(wo).astype(bf16),
        w1=jnp.stack(w1).astype(bf16),
        w2=jnp.stack(w2).astype(bf16),
        lvecs=jnp.stack(lvecs),
        norm_g=raw['norm_w'].reshape(1, E),
        norm_b=raw['norm_b'].reshape(1, E),
        head_w=head_w.astype(bf16),
        head_b=head_b,
    )


# ----------------------------------------------------------------------------
# Pure-JAX fp32 reference (mirrors the PyTorch module, eval mode)
# ----------------------------------------------------------------------------
def vit_reference(x_nchw, raw, *, patch_size, num_heads):
    B = x_nchw.shape[0]
    E = raw['cls'].shape[0]
    H = num_heads
    hd = E // H
    patches = _extract_patches(x_nchw, patch_size)
    x = patches @ raw['conv_w'].reshape(E, -1).T + raw['conv_b']
    cls = jnp.broadcast_to(raw['cls'], (B, 1, E))
    x = jnp.concatenate([cls, x], axis=1) + raw['pos'][None]
    S = x.shape[1]
    for blk in raw['blocks']:
        xn = _layernorm(x, blk['ln1_w'], blk['ln1_b'])
        qkv = xn @ blk['in_w'].T + blk['in_b']
        q, k, v = jnp.split(qkv, 3, axis=-1)
        split = lambda t: t.reshape(B, S, H, hd).transpose(0, 2, 1, 3)
        qh, kh, vh = split(q), split(k), split(v)
        s = jnp.einsum('bhqd,bhkd->bhqk', qh, kh) / math.sqrt(hd)
        p_attn = jax.nn.softmax(s, axis=-1)
        oh = jnp.einsum('bhqk,bhkd->bhqd', p_attn, vh)
        o = oh.transpose(0, 2, 1, 3).reshape(B, S, E)
        x = x + (o @ blk['out_w'].T + blk['out_b'])
        xn = _layernorm(x, blk['ln2_w'], blk['ln2_b'])
        h1 = _gelu(xn @ blk['fc1_w'].T + blk['fc1_b'])
        x = x + (h1 @ blk['fc2_w'].T + blk['fc2_b'])
    x = _layernorm(x, raw['norm_w'], raw['norm_b'])
    return x[:, 0] @ raw['head_w'].T + raw['head_b']


if __name__ == "__main__":
    # small ViT: img 16x16, patch 4, 4 chans, embed 32, depth 2, 4 heads,
    # mlp_ratio 4 -> seq = 17 (padded to 24), hidden = 128, 10 classes.
    # batch 4 blocked by 2 -> 2 parallel grid steps (both v7x TCs busy),
    # 2 images' matmuls fused per step (M = 48 rows).
    img_size, patch_size, in_chans = 16, 4, 4
    num_classes, embed_dim, depth = 10, 32, 2
    num_heads, mlp_ratio = 4, 4.0
    batch, batch_block = 4, 2

    key = jax.random.PRNGKey(0)
    kx, kp = jax.random.split(key)
    x = jax.random.normal(kx, (batch, in_chans, img_size, img_size), jnp.float32)

    raw = init_raw_params(kp, img_size=img_size, patch_size=patch_size,
                          in_chans=in_chans, num_classes=num_classes,
                          embed_dim=embed_dim, depth=depth, mlp_ratio=mlp_ratio)
    num_patches = (img_size // patch_size) ** 2
    seq_pad = ((num_patches + 1 + 7) // 8) * 8          # 17 -> 24 (8-aligned rows)
    prep = prepare_params(raw, num_heads=num_heads, seq_pad=seq_pad,
                          num_classes=num_classes)

    fwd = jax.jit(partial(vit_forward, patch_size=patch_size, num_heads=num_heads,
                          num_layers=depth, seq_pad=seq_pad,
                          batch_block=batch_block, num_classes=num_classes))
    logits = jax.block_until_ready(fwd(x, prep))
    assert logits.shape == (batch, num_classes), logits.shape

    ref = vit_reference(x, raw, patch_size=patch_size, num_heads=num_heads)
    err = float(jnp.max(jnp.abs(logits - ref)))
    assert err < 5e-2, f"kernel deviates from fp32 reference: max abs err {err}"
    print("KERNEL_OK")
</pallas_src>

<mosaic_0001>
module attributes {stable_mosaic.version = 11 : i64} {
  func.func @vit_kernel(%arg0: i32, %arg1: i32, %arg2: memref<2x16x64xbf16, #tpu.memory_space<vmem>>, %arg3: memref<64x32xbf16, #tpu.memory_space<vmem>>, %arg4: memref<1x32xf32, #tpu.memory_space<vmem>>, %arg5: memref<16x32xf32, #tpu.memory_space<vmem>>, %arg6: memref<8x32xf32, #tpu.memory_space<vmem>>, %arg7: memref<1x32x96xbf16, #tpu.memory_space<vmem>>, %arg8: memref<1x32x32xbf16, #tpu.memory_space<vmem>>, %arg9: memref<1x32x128xbf16, #tpu.memory_space<vmem>>, %arg10: memref<1x128x32xbf16, #tpu.memory_space<vmem>>, %arg11: memref<1x8x128xf32, #tpu.memory_space<vmem>>, %arg12: memref<1x32xf32, #tpu.memory_space<vmem>>, %arg13: memref<1x32xf32, #tpu.memory_space<vmem>>, %arg14: memref<32x128xbf16, #tpu.memory_space<vmem>>, %arg15: memref<1x128xf32, #tpu.memory_space<vmem>>, %arg16: memref<1x2x128xf32, #tpu.memory_space<vmem>>, %arg17: memref<2x24x32xf32, #tpu.memory_space<vmem>>) attributes {dimension_semantics = [#tpu.dimension_semantics<parallel>, #tpu.dimension_semantics<arbitrary>], iteration_bounds = array<i64: 2, 2>, scalar_prefetch = 0 : i64, scratch_operands = 1 : i64, tpu.core_type = #tpu.core_type<tc>, window_params = [{transform_indices = @transform_0, window_bounds = array<i64: 2, 16, 64>}, {pipeline_mode = #tpu.pipeline_mode<synchronous>, transform_indices = @transform_1, window_bounds = array<i64: 64, 32>}, {pipeline_mode = #tpu.pipeline_mode<synchronous>, transform_indices = @transform_2, window_bounds = array<i64: 1, 32>}, {pipeline_mode = #tpu.pipeline_mode<synchronous>, transform_indices = @transform_3, window_bounds = array<i64: 16, 32>}, {pipeline_mode = #tpu.pipeline_mode<synchronous>, transform_indices = @transform_4, window_bounds = array<i64: 8, 32>}, {transform_indices = @transform_5, window_bounds = array<i64: 1, 32, 96>}, {transform_indices = @transform_6, window_bounds = array<i64: 1, 32, 32>}, {transform_indices = @transform_7, window_bounds = array<i64: 1, 32, 128>}, {transform_indices = @transform_8, window_bounds = array<i64: 1, 128, 32>}, {transform_indices = @transform_9, window_bounds = array<i64: 1, 8, 128>}, {pipeline_mode = #tpu.pipeline_mode<synchronous>, transform_indices = @transform_10, window_bounds = array<i64: 1, 32>}, {pipeline_mode = #tpu.pipeline_mode<synchronous>, transform_indices = @transform_11, window_bounds = array<i64: 1, 32>}, {pipeline_mode = #tpu.pipeline_mode<synchronous>, transform_indices = @transform_12, window_bounds = array<i64: 32, 128>}, {pipeline_mode = #tpu.pipeline_mode<synchronous>, transform_indices = @transform_13, window_bounds = array<i64: 1, 128>}, {transform_indices = @transform_14, window_bounds = array<i64: 1, 2, 128>}]} {
    %c0_i32 = arith.constant 0 : i32
    %0 = arith.cmpi eq, %arg1, %c0_i32 : i32
    %1 = arith.extui %0 : i1 to i32
    %c0_i32_0 = arith.constant 0 : i32
    %2 = arith.cmpi ne, %1, %c0_i32_0 : i32
    scf.if %2 {
      %c0_62 = arith.constant 0 : index
      %c0_63 = arith.constant 0 : index
      %c0_64 = arith.constant 0 : index
      %208 = vector.load %arg2[%c0_62, %c0_63, %c0_64] : memref<2x16x64xbf16, #tpu.memory_space<vmem>>, vector<2x16x64xbf16>
      %209 = vector.shape_cast %208 : vector<2x16x64xbf16> to vector<32x64xbf16>
      %c0_65 = arith.constant 0 : index
      %c0_66 = arith.constant 0 : index
      %210 = vector.load %arg3[%c0_65, %c0_66] : memref<64x32xbf16, #tpu.memory_space<vmem>>, vector<64x32xbf16>
      %cst_67 = arith.constant dense<0.000000e+00> : vector<32x32xf32>
      %211 = tpu.matmul %209, %210, %cst_67 {dimension_numbers = #tpu.dot_dimension_numbers<[1], [0], [0], [1], [0, 0, 1, 1], [], []>} : vector<32x64xbf16>, vector<64x32xbf16>, vector<32x32xf32> -> vector<32x32xf32>
      %212 = vector.shape_cast %211 : vector<32x32xf32> to vector<2x16x32xf32>
      %c0_68 = arith.constant 0 : index
      %c0_69 = arith.constant 0 : index
      %213 = vector.load %arg4[%c0_68, %c0_69] : memref<1x32xf32, #tpu.memory_space<vmem>>, vector<1x32xf32>
      %214 = vector.shape_cast %213 : vector<1x32xf32> to vector<1x1x32xf32>
      %215 = vector.broadcast %214 : vector<1x1x32xf32> to vector<2x16x32xf32>
      %216 = arith.addf %212, %215 : vector<2x16x32xf32>
      %c0_70 = arith.constant 0 : index
      %c0_71 = arith.constant 0 : index
      %217 = vector.load %arg5[%c0_70, %c0_71] : memref<16x32xf32, #tpu.memory_space<vmem>>, vector<16x32xf32>
      %218 = vector.shape_cast %217 : vector<16x32xf32> to vector<1x16x32xf32>
      %219 = vector.broadcast %218 : vector<1x16x32xf32> to vector<2x16x32xf32>
      %220 = arith.addf %216, %219 : vector<2x16x32xf32>
      %c0_72 = arith.constant 0 : index
      %c0_73 = arith.constant 0 : index
      %c0_74 = arith.constant 0 : index
      %221 = vector.load %arg17[%c0_72, %c0_73, %c0_74] : memref<2x24x32xf32, #tpu.memory_space<vmem>>, vector<2x16x32xf32>
      tpu.vector_store %arg17[%c0_72, %c0_73, %c0_74], %220 {strides = array<i32>} : memref<2x24x32xf32, #tpu.memory_space<vmem>>, vector<2x16x32xf32>,
      %c0_75 = arith.constant 0 : index
      %c0_76 = arith.constant 0 : index
      %222 = vector.load %arg6[%c0_75, %c0_76] : memref<8x32xf32, #tpu.memory_space<vmem>>, vector<8x32xf32>
      %223 = vector.shape_cast %222 : vector<8x32xf32> to vector<1x8x32xf32>
      %224 = vector.broadcast %223 : vector<1x8x32xf32> to vector<2x8x32xf32>
      %c0_77 = arith.constant 0 : index
      %c16 = arith.constant 16 : index
      %c0_78 = arith.constant 0 : index
      %225 = vector.load %arg17[%c0_77, %c16, %c0_78] : memref<2x24x32xf32, #tpu.memory_space<vmem>>, vector<2x8x32xf32>
      tpu.vector_store %arg17[%c0_77, %c16, %c0_78], %224 {strides = array<i32>} : memref<2x24x32xf32, #tpu.memory_space<vmem>>, vector<2x8x32xf32>,
    } else {
    }
    %c0 = arith.constant 0 : index
    %c0_1 = arith.constant 0 : index
    %c0_2 = arith.constant 0 : index
    %3 = vector.load %arg17[%c0, %c0_1, %c0_2] : memref<2x24x32xf32, #tpu.memory_space<vmem>>, vector<2x24x32xf32>
    %4 = vector.shape_cast %3 : vector<2x24x32xf32> to vector<48x32xf32>
    %c0_3 = arith.constant 0 : index
    %c0_4 = arith.constant 0 : index
    %c0_5 = arith.constant 0 : index
    %5 = vector.load %arg11[%c0_3, %c0_4, %c0_5] : memref<1x8x128xf32, #tpu.memory_space<vmem>>, vector<1x8x128xf32>
    %6 = vector.shape_cast %5 : vector<1x8x128xf32> to vector<8x128xf32>
    %7 = vector.extract_strided_slice %6 {offsets = [0, 0], sizes = [1, 32], strides = [1, 1]} : vector<8x128xf32> to vector<1x32xf32>
    %8 = vector.extract_strided_slice %6 {offsets = [1, 0], sizes = [1, 32], strides = [1, 1]} : vector<8x128xf32> to vector<1x32xf32>
    %9 = vector.extract_strided_slice %6 {offsets = [2, 0], sizes = [1, 32], strides = [1, 1]} : vector<8x128xf32> to vector<1x32xf32>
    %10 = vector.extract_strided_slice %6 {offsets = [3, 0], sizes = [1, 32], strides = [1, 1]} : vector<8x128xf32> to vector<1x32xf32>
    %11 = vector.extract_strided_slice %6 {offsets = [4, 0], sizes = [1, 32], strides = [1, 1]} : vector<8x128xf32> to vector<1x32xf32>
    %12 = vector.extract_strided_slice %6 {offsets = [5, 0], sizes = [1, 32], strides = [1, 1]} : vector<8x128xf32> to vector<1x32xf32>
    %13 = vector.extract_strided_slice %6 {offsets = [6, 0], sizes = [1, 96], strides = [1, 1]} : vector<8x128xf32> to vector<1x96xf32>
    %14 = vector.extract_strided_slice %6 {offsets = [7, 0], sizes = [1, 128], strides = [1, 1]} : vector<8x128xf32> to vector<1x128xf32>
    %cst = arith.constant dense<0.000000e+00> : vector<48xf32>
    %15 = vector.multi_reduction <add>, %4, %cst [1] : vector<48x32xf32> to vector<48xf32>
    %16 = vector.shape_cast %15 : vector<48xf32> to vector<48x1xf32>
    %cst_6 = arith.constant 3.200000e+01 : f32
    %17 = vector.broadcast %cst_6 : f32 to vector<48x1xf32>
    %18 = arith.divf %16, %17 : vector<48x1xf32>
    %19 = vector.broadcast %18 : vector<48x1xf32> to vector<48x32xf32>
    %20 = arith.subf %4, %19 : vector<48x32xf32>
    %21 = arith.mulf %20, %20 : vector<48x32xf32>
    %cst_7 = arith.constant dense<0.000000e+00> : vector<48xf32>
    %22 = vector.multi_reduction <add>, %21, %cst_7 [1] : vector<48x32xf32> to vector<48xf32>
    %23 = vector.shape_cast %22 : vector<48xf32> to vector<48x1xf32>
    %cst_8 = arith.constant 3.200000e+01 : f32
    %24 = vector.broadcast %cst_8 : f32 to vector<48x1xf32>
    %25 = arith.divf %23, %24 : vector<48x1xf32>
    %cst_9 = arith.constant 9.99999974E-6 : f32
    %26 = vector.broadcast %cst_9 : f32 to vector<48x1xf32>
    %27 = arith.addf %25, %26 : vector<48x1xf32>
    %28 = math.rsqrt %27 : vector<48x1xf32>
    %29 = vector.broadcast %28 : vector<48x1xf32> to vector<48x32xf32>
    %30 = arith.mulf %20, %29 : vector<48x32xf32>
    %31 = vector.broadcast %7 : vector<1x32xf32> to vector<48x32xf32>
    %32 = arith.mulf %30, %31 : vector<48x32xf32>
    %33 = vector.broadcast %8 : vector<1x32xf32> to vector<48x32xf32>
    %34 = arith.addf %32, %33 : vector<48x32xf32>
    %35 = arith.truncf %34 : vector<48x32xf32> to vector<48x32xbf16>
    %c0_10 = arith.constant 0 : index
    %c0_11 = arith.constant 0 : index
    %c0_12 = arith.constant 0 : index
    %36 = vector.load %arg7[%c0_10, %c0_11, %c0_12] : memref<1x32x96xbf16, #tpu.memory_space<vmem>>, vector<1x32x96xbf16>
    %37 = vector.shape_cast %36 : vector<1x32x96xbf16> to vector<32x96xbf16>
    %cst_13 = arith.constant dense<0.000000e+00> : vector<48x96xf32>
    %38 = tpu.matmul %35, %37, %cst_13 {dimension_numbers = #tpu.dot_dimension_numbers<[1], [0], [0], [1], [0, 0, 1, 1], [], []>} : vector<48x32xbf16>, vector<32x96xbf16>, vector<48x96xf32> -> vector<48x96xf32>
    %39 = vector.broadcast %13 : vector<1x96xf32> to vector<48x96xf32>
    %40 = arith.addf %38, %39 : vector<48x96xf32>
    %41 = vector.extract_strided_slice %40 {offsets = [0, 0], sizes = [48, 8], strides = [1, 1]} : vector<48x96xf32> to vector<48x8xf32>
    %42 = vector.shape_cast %41 : vector<48x8xf32> to vector<2x24x8xf32>
    %43 = arith.truncf %42 : vector<2x24x8xf32> to vector<2x24x8xbf16>
    %44 = vector.extract_strided_slice %40 {offsets = [0, 32], sizes = [48, 8], strides = [1, 1]} : vector<48x96xf32> to vector<48x8xf32>
    %45 = vector.shape_cast %44 : vector<48x8xf32> to vector<2x24x8xf32>
    %46 = arith.truncf %45 : vector<2x24x8xf32> to vector<2x24x8xbf16>
    %47 = vector.extract_strided_slice %40 {offsets = [0, 64], sizes = [48, 8], strides = [1, 1]} : vector<48x96xf32> to vector<48x8xf32>
    %48 = vector.shape_cast %47 : vector<48x8xf32> to vector<2x24x8xf32>
    %49 = arith.truncf %48 : vector<2x24x8xf32> to vector<2x24x8xbf16>
    "tpu.trace_start"() <{level = 10 : i32, message = "bqd,bkd->bqk"}> : () -> ()
    %cst_14 = arith.constant dense<0.000000e+00> : vector<2x24x24xf32>
    %50 = tpu.matmul %43, %46, %cst_14 {dimension_numbers = #tpu.dot_dimension_numbers<[2], [2], [1], [1], [0, 0, 0, 1, 1, 1], [0], [0]>} : vector<2x24x8xbf16>, vector<2x24x8xbf16>, vector<2x24x24xf32> -> vector<2x24x24xf32>
    "tpu.trace_stop"() : () -> ()
    %51 = tpu.iota {dimensions = array<i32: 2>} : vector<2x24x24xi32>
    %c17_i32 = arith.constant 17 : i32
    %52 = vector.broadcast %c17_i32 : i32 to vector<2x24x24xi32>
    %53 = arith.cmpi slt, %51, %52 : vector<2x24x24xi32>
    %cst_15 = arith.constant -1.000000e+30 : f32
    %54 = vector.broadcast %cst_15 : f32 to vector<2x24x24xf32>
    %55 = arith.select %53, %50, %54 : vector<2x24x24xi1>, vector<2x24x24xf32>
    %cst_16 = arith.constant dense<0xFF800000> : vector<2x24xf32>
    %56 = vector.multi_reduction <maximumf>, %55, %cst_16 [2] : vector<2x24x24xf32> to vector<2x24xf32>
    %57 = vector.shape_cast %56 : vector<2x24xf32> to vector<2x24x1xf32>
    %58 = vector.broadcast %57 : vector<2x24x1xf32> to vector<2x24x24xf32>
    %59 = arith.subf %55, %58 : vector<2x24x24xf32>
    %60 = math.exp %59 : vector<2x24x24xf32>
    %cst_17 = arith.constant dense<0.000000e+00> : vector<2x24xf32>
    %61 = vector.multi_reduction <add>, %60, %cst_17 [2] : vector<2x24x24xf32> to vector<2x24xf32>
    %62 = vector.shape_cast %61 : vector<2x24xf32> to vector<2x24x1xf32>
    %63 = vector.broadcast %62 : vector<2x24x1xf32> to vector<2x24x24xf32>
    %64 = arith.divf %60, %63 : vector<2x24x24xf32>
    %65 = arith.truncf %64 : vector<2x24x24xf32> to vector<2x24x24xbf16>
    "tpu.trace_start"() <{level = 10 : i32, message = "bqk,bkd->bqd"}> : () -> ()
    %cst_18 = arith.constant dense<0.000000e+00> : vector<2x24x8xf32>
    %66 = tpu.matmul %65, %49, %cst_18 {dimension_numbers = #tpu.dot_dimension_numbers<[2], [1], [1], [2], [0, 0, 0, 1, 1, 2], [0], [0]>} : vector<2x24x24xbf16>, vector<2x24x8xbf16>, vector<2x24x8xf32> -> vector<2x24x8xf32>
    "tpu.trace_stop"() : () -> ()
    %67 = vector.shape_cast %66 : vector<2x24x8xf32> to vector<48x8xf32>
    %68 = vector.extract_strided_slice %40 {offsets = [0, 8], sizes = [48, 8], strides = [1, 1]} : vector<48x96xf32> to vector<48x8xf32>
    %69 = vector.shape_cast %68 : vector<48x8xf32> to vector<2x24x8xf32>
    %70 = arith.truncf %69 : vector<2x24x8xf32> to vector<2x24x8xbf16>
    %71 = vector.extract_strided_slice %40 {offsets = [0, 40], sizes = [48, 8], strides = [1, 1]} : vector<48x96xf32> to vector<48x8xf32>
    %72 = vector.shape_cast %71 : vector<48x8xf32> to vector<2x24x8xf32>
    %73 = arith.truncf %72 : vector<2x24x8xf32> to vector<2x24x8xbf16>
    %74 = vector.extract_strided_slice %40 {offsets = [0, 72], sizes = [48, 8], strides = [1, 1]} : vector<48x96xf32> to vector<48x8xf32>
    %75 = vector.shape_cast %74 : vector<48x8xf32> to vector<2x24x8xf32>
    %76 = arith.truncf %75 : vector<2x24x8xf32> to vector<2x24x8xbf16>
    "tpu.trace_start"() <{level = 10 : i32, message = "bqd,bkd->bqk"}> : () -> ()
    %cst_19 = arith.constant dense<0.000000e+00> : vector<2x24x24xf32>
    %77 = tpu.matmul %70, %73, %cst_19 {dimension_numbers = #tpu.dot_dimension_numbers<[2], [2], [1], [1], [0, 0, 0, 1, 1, 1], [0], [0]>} : vector<2x24x8xbf16>, vector<2x24x8xbf16>, vector<2x24x24xf32> -> vector<2x24x24xf32>
    "tpu.trace_stop"() : () -> ()
    %78 = tpu.iota {dimensions = array<i32: 2>} : vector<2x24x24xi32>
    %c17_i32_20 = arith.constant 17 : i32
    %79 = vector.broadcast %c17_i32_20 : i32 to vector<2x24x24xi32>
    %80 = arith.cmpi slt, %78, %79 : vector<2x24x24xi32>
    %cst_21 = arith.constant -1.000000e+30 : f32
    %81 = vector.broadcast %cst_21 : f32 to vector<2x24x24xf32>
    %82 = arith.select %80, %77, %81 : vector<2x24x24xi1>, vector<2x24x24xf32>
    %cst_22 = arith.constant dense<0xFF800000> : vector<2x24xf32>
    %83 = vector.multi_reduction <maximumf>, %82, %cst_22 [2] : vector<2x24x24xf32> to vector<2x24xf32>
    %84 = vector.shape_cast %83 : vector<2x24xf32> to vector<2x24x1xf32>
    %85 = vector.broadcast %84 : vector<2x24x1xf32> to vector<2x24x24xf32>
    %86 = arith.subf %82, %85 : vector<2x24x24xf32>
    %87 = math.exp %86 : vector<2x24x24xf32>
    %cst_23 = arith.constant dense<0.000000e+00> : vector<2x24xf32>
    %88 = vector.multi_reduction <add>, %87, %cst_23 [2] : vector<2x24x24xf32> to vector<2x24xf32>
    %89 = vector.shape_cast %88 : vector<2x24xf32> to vector<2x24x1xf32>
    %90 = vector.broadcast %89 : vector<2x24x1xf32> to vector<2x24x24xf32>
    %91 = arith.divf %87, %90 : vector<2x24x24xf32>
    %92 = arith.truncf %91 : vector<2x24x24xf32> to vector<2x24x24xbf16>
    "tpu.trace_start"() <{level = 10 : i32, message = "bqk,bkd->bqd"}> : () -> ()
    %cst_24 = arith.constant dense<0.000000e+00> : vector<2x24x8xf32>
    %93 = tpu.matmul %92, %76, %cst_24 {dimension_numbers = #tpu.dot_dimension_numbers<[2], [1], [1], [2], [0, 0, 0, 1, 1, 2], [0], [0]>} : vector<2x24x24xbf16>, vector<2x24x8xbf16>, vector<2x24x8xf32> -> vector<2x24x8xf32>
    "tpu.trace_stop"() : () -> ()
    %94 = vector.shape_cast %93 : vector<2x24x8xf32> to vector<48x8xf32>
    %95 = vector.extract_strided_slice %40 {offsets = [0, 16], sizes = [48, 8], strides = [1, 1]} : vector<48x96xf32> to vector<48x8xf32>
    %96 = vector.shape_cast %95 : vector<48x8xf32> to vector<2x24x8xf32>
    %97 = arith.truncf %96 : vector<2x24x8xf32> to vector<2x24x8xbf16>
    %98 = vector.extract_strided_slice %40 {offsets = [0, 48], sizes = [48, 8], strides = [1, 1]} : vector<48x96xf32> to vector<48x8xf32>
    %99 = vector.shape_cast %98 : vector<48x8xf32> to vector<2x24x8xf32>
    %100 = arith.truncf %99 : vector<2x24x8xf32> to vector<2x24x8xbf16>
    %101 = vector.extract_strided_slice %40 {offsets = [0, 80], sizes = [48, 8], strides = [1, 1]} : vector<48x96xf32> to vector<48x8xf32>
    %102 = vector.shape_cast %101 : vector<48x8xf32> to vector<2x24x8xf32>
    %103 = arith.truncf %102 : vector<2x24x8xf32> to vector<2x24x8xbf16>
    "tpu.trace_start"() <{level = 10 : i32, message = "bqd,bkd->bqk"}> : () -> ()
    %cst_25 = arith.constant dense<0.000000e+00> : vector<2x24x24xf32>
    %104 = tpu.matmul %97, %100, %cst_25 {dimension_numbers = #tpu.dot_dimension_numbers<[2], [2], [1], [1], [0, 0, 0, 1, 1, 1], [0], [0]>} : vector<2x24x8xbf16>, vector<2x24x8xbf16>, vector<2x24x24xf32> -> vector<2x24x24xf32>
    "tpu.trace_stop"() : () -> ()
    %105 = tpu.iota {dimensions = array<i32: 2>} : vector<2x24x24xi32>
    %c17_i32_26 = arith.constant 17 : i32
    %106 = vector.broadcast %c17_i32_26 : i32 to vector<2x24x24xi32>
    %107 = arith.cmpi slt, %105, %106 : vector<2x24x24xi32>
    %cst_27 = arith.constant -1.000000e+30 : f32
    %108 = vector.broadcast %cst_27 : f32 to vector<2x24x24xf32>
    %109 = arith.select %107, %104, %108 : vector<2x24x24xi1>, vector<2x24x24xf32>
    %cst_28 = arith.constant dense<0xFF800000> : vector<2x24xf32>
    %110 = vector.multi_reduction <maximumf>, %109, %cst_28 [2] : vector<2x24x24xf32> to vector<2x24xf32>
    %111 = vector.shape_cast %110 : vector<2x24xf32> to vector<2x24x1xf32>
    %112 = vector.broadcast %111 : vector<2x24x1xf32> to vector<2x24x24xf32>
    %113 = arith.subf %109, %112 : vector<2x24x24xf32>
    %114 = math.exp %113 : vector<2x24x24xf32>
    %cst_29 = arith.constant dense<0.000000e+00> : vector<2x24xf32>
    %115 = vector.multi_reduction <add>, %114, %cst_29 [2] : vector<2x24x24xf32> to vector<2x24xf32>
    %116 = vector.shape_cast %115 : vector<2x24xf32> to vector<2x24x1xf32>
    %117 = vector.broadcast %116 : vector<2x24x1xf32> to vector<2x24x24xf32>
    %118 = arith.divf %114, %117 : vector<2x24x24xf32>
    %119 = arith.truncf %118 : vector<2x24x24xf32> to vector<2x24x24xbf16>
    "tpu.trace_start"() <{level = 10 : i32, message = "bqk,bkd->bqd"}> : () -> ()
    %cst_30 = arith.constant dense<0.000000e+00> : vector<2x24x8xf32>
    %120 = tpu.matmul %119, %103, %cst_30 {dimension_numbers = #tpu.dot_dimension_numbers<[2], [1], [1], [2], [0, 0, 0, 1, 1, 2], [0], [0]>} : vector<2x24x24xbf16>, vector<2x24x8xbf16>, vector<2x24x8xf32> -> vector<2x24x8xf32>
    "tpu.trace_stop"() : () -> ()
    %121 = vector.shape_cast %120 : vector<2x24x8xf32> to vector<48x8xf32>
    %122 = vector.extract_strided_slice %40 {offsets = [0, 24], sizes = [48, 8], strides = [1, 1]} : vector<48x96xf32> to vector<48x8xf32>
    %123 = vector.shape_cast %122 : vector<48x8xf32> to vector<2x24x8xf32>
    %124 = arith.truncf %123 : vector<2x24x8xf32> to vector<2x24x8xbf16>
    %125 = vector.extract_strided_slice %40 {offsets = [0, 56], sizes = [48, 8], strides = [1, 1]} : vector<48x96xf32> to vector<48x8xf32>
    %126 = vector.shape_cast %125 : vector<48x8xf32> to vector<2x24x8xf32>
    %127 = arith.truncf %126 : vector<2x24x8xf32> to vector<2x24x8xbf16>
    %128 = vector.extract_strided_slice %40 {offsets = [0, 88], sizes = [48, 8], strides = [1, 1]} : vector<48x96xf32> to vector<48x8xf32>
    %129 = vector.shape_cast %128 : vector<48x8xf32> to vector<2x24x8xf32>
    %130 = arith.truncf %129 : vector<2x24x8xf32> to vector<2x24x8xbf16>
    "tpu.trace_start"() <{level = 10 : i32, message = "bqd,bkd->bqk"}> : () -> ()
    %cst_31 = arith.constant dense<0.000000e+00> : vector<2x24x24xf32>
    %131 = tpu.matmul %124, %127, %cst_31 {dimension_numbers = #tpu.dot_dimension_numbers<[2], [2], [1], [1], [0, 0, 0, 1, 1, 1], [0], [0]>} : vector<2x24x8xbf16>, vector<2x24x8xbf16>, vector<2x24x24xf32> -> vector<2x24x24xf32>
    "tpu.trace_stop"() : () -> ()
    %132 = tpu.iota {dimensions = array<i32: 2>} : vector<2x24x24xi32>
    %c17_i32_32 = arith.constant 17 : i32
    %133 = vector.broadcast %c17_i32_32 : i32 to vector<2x24x24xi32>
    %134 = arith.cmpi slt, %132, %133 : vector<2x24x24xi32>
    %cst_33 = arith.constant -1.000000e+30 : f32
    %135 = vector.broadcast %cst_33 : f32 to vector<2x24x24xf32>
    %136 = arith.select %134, %131, %135 : vector<2x24x24xi1>, vector<2x24x24xf32>
    %cst_34 = arith.constant dense<0xFF800000> : vector<2x24xf32>
    %137 = vector.multi_reduction <maximumf>, %136, %cst_34 [2] : vector<2x24x24xf32> to vector<2x24xf32>
    %138 = vector.shape_cast %137 : vector<2x24xf32> to vector<2x24x1xf32>
    %139 = vector.broadcast %138 : vector<2x24x1xf32> to vector<2x24x24xf32>
    %140 = arith.subf %136, %139 : vector<2x24x24xf32>
    %141 = math.exp %140 : vector<2x24x24xf32>
    %cst_35 = arith.constant dense<0.000000e+00> : vector<2x24xf32>
    %142 = vector.multi_reduction <add>, %141, %cst_35 [2] : vector<2x24x24xf32> to vector<2x24xf32>
    %143 = vector.shape_cast %142 : vector<2x24xf32> to vector<2x24x1xf32>
    %144 = vector.broadcast %143 : vector<2x24x1xf32> to vector<2x24x24xf32>
    %145 = arith.divf %141, %144 : vector<2x24x24xf32>
    %146 = arith.truncf %145 : vector<2x24x24xf32> to vector<2x24x24xbf16>
    "tpu.trace_start"() <{level = 10 : i32, message = "bqk,bkd->bqd"}> : () -> ()
    %cst_36 = arith.constant dense<0.000000e+00> : vector<2x24x8xf32>
    %147 = tpu.matmul %146, %130, %cst_36 {dimension_numbers = #tpu.dot_dimension_numbers<[2], [1], [1], [2], [0, 0, 0, 1, 1, 2], [0], [0]>} : vector<2x24x24xbf16>, vector<2x24x8xbf16>, vector<2x24x8xf32> -> vector<2x24x8xf32>
    "tpu.trace_stop"() : () -> ()
    %148 = vector.shape_cast %147 : vector<2x24x8xf32> to vector<48x8xf32>
    %149 = tpu.concatenate %67, %94, %121, %148 in 1 : vector<48x8xf32>, vector<48x8xf32>, vector<48x8xf32>, vector<48x8xf32> -> vector<48x32xf32>
    %150 = arith.truncf %149 : vector<48x32xf32> to vector<48x32xbf16>
    %c0_37 = arith.constant 0 : index
    %c0_38 = arith.constant 0 : index
    %c0_39 = arith.constant 0 : index
    %151 = vector.load %arg8[%c0_37, %c0_38, %c0_39] : memref<1x32x32xbf16, #tpu.memory_space<vmem>>, vector<1x32x32xbf16>
    %152 = vector.shape_cast %151 : vector<1x32x32xbf16> to vector<32x32xbf16>
    %cst_40 = arith.constant dense<0.000000e+00> : vector<48x32xf32>
    %153 = tpu.matmul %150, %152, %cst_40 {dimension_numbers = #tpu.dot_dimension_numbers<[1], [0], [0], [1], [0, 0, 1, 1], [], []>} : vector<48x32xbf16>, vector<32x32xbf16>, vector<48x32xf32> -> vector<48x32xf32>
    %154 = vector.broadcast %11 : vector<1x32xf32> to vector<48x32xf32>
    %155 = arith.addf %153, %154 : vector<48x32xf32>
    %156 = arith.addf %4, %155 : vector<48x32xf32>
    %cst_41 = arith.constant dense<0.000000e+00> : vector<48xf32>
    %157 = vector.multi_reduction <add>, %156, %cst_41 [1] : vector<48x32xf32> to vector<48xf32>
    %158 = vector.shape_cast %157 : vector<48xf32> to vector<48x1xf32>
    %cst_42 = arith.constant 3.200000e+01 : f32
    %159 = vector.broadcast %cst_42 : f32 to vector<48x1xf32>
    %160 = arith.divf %158, %159 : vector<48x1xf32>
    %161 = vector.broadcast %160 : vector<48x1xf32> to vector<48x32xf32>
    %162 = arith.subf %156, %161 : vector<48x32xf32>
    %163 = arith.mulf %162, %162 : vector<48x32xf32>
    %cst_43 = arith.constant dense<0.000000e+00> : vector<48xf32>
    %164 = vector.multi_reduction <add>, %163, %cst_43 [1] : vector<48x32xf32> to vector<48xf32>
    %165 = vector.shape_cast %164 : vector<48xf32> to vector<48x1xf32>
    %cst_44 = arith.constant 3.200000e+01 : f32
    %166 = vector.broadcast %cst_44 : f32 to vector<48x1xf32>
    %167 = arith.divf %165, %166 : vector<48x1xf32>
    %cst_45 = arith.constant 9.99999974E-6 : f32
    %168 = vector.broadcast %cst_45 : f32 to vector<48x1xf32>
    %169 = arith.addf %167, %168 : vector<48x1xf32>
    %170 = math.rsqrt %169 : vector<48x1xf32>
    %171 = vector.broadcast %170 : vector<48x1xf32> to vector<48x32xf32>
    %172 = arith.mulf %162, %171 : vector<48x32xf32>
    %173 = vector.broadcast %9 : vector<1x32xf32> to vector<48x32xf32>
    %174 = arith.mulf %172, %173 : vector<48x32xf32>
    %175 = vector.broadcast %10 : vector<1x32xf32> to vector<48x32xf32>
    %176 = arith.addf %174, %175 : vector<48x32xf32>
    %177 = arith.truncf %176 : vector<48x32xf32> to vector<48x32xbf16>
    %c0_46 = arith.constant 0 : index
    %c0_47 = arith.constant 0 : index
    %c0_48 = arith.constant 0 : index
    %178 = vector.load %arg9[%c0_46, %c0_47, %c0_48] : memref<1x32x128xbf16, #tpu.memory_space<vmem>>, vector<1x32x128xbf16>
    %179 = vector.shape_cast %178 : vector<1x32x128xbf16> to vector<32x128xbf16>
    %cst_49 = arith.constant dense<0.000000e+00> : vector<48x128xf32>
    %180 = tpu.matmul %177, %179, %cst_49 {dimension_numbers = #tpu.dot_dimension_numbers<[1], [0], [0], [1], [0, 0, 1, 1], [], []>} : vector<48x32xbf16>, vector<32x128xbf16>, vector<48x128xf32> -> vector<48x128xf32>
    %181 = vector.broadcast %14 : vector<1x128xf32> to vector<48x128xf32>
    %182 = arith.addf %180, %181 : vector<48x128xf32>
    %cst_50 = arith.constant 5.000000e-01 : f32
    %183 = vector.broadcast %cst_50 : f32 to vector<48x128xf32>
    %184 = arith.mulf %183, %182 : vector<48x128xf32>
    %cst_51 = arith.constant 4.471500e-02 : f32
    %185 = vector.broadcast %cst_51 : f32 to vector<48x128xf32>
    %186 = arith.mulf %185, %182 : vector<48x128xf32>
    %187 = arith.mulf %186, %182 : vector<48x128xf32>
    %188 = arith.mulf %187, %182 : vector<48x128xf32>
    %189 = arith.addf %182, %188 : vector<48x128xf32>
    %cst_52 = arith.constant 0.797884583 : f32
    %190 = vector.broadcast %cst_52 : f32 to vector<48x128xf32>
    %191 = arith.mulf %190, %189 : vector<48x128xf32>
    %192 = math.tanh %191 : vector<48x128xf32>
    %cst_53 = arith.constant 1.000000e+00 : f32
    %193 = vector.broadcast %cst_53 : f32 to vector<48x128xf32>
    %194 = arith.addf %193, %192 : vector<48x128xf32>
    %195 = arith.mulf %184, %194 : vector<48x128xf32>
    %196 = arith.truncf %195 : vector<48x128xf32> to vector<48x128xbf16>
    %c0_54 = arith.constant 0 : index
    %c0_55 = arith.constant 0 : index
    %c0_56 = arith.constant 0 : index
    %197 = vector.load %arg10[%c0_54, %c0_55, %c0_56] : memref<1x128x32xbf16, #tpu.memory_space<vmem>>, vector<1x128x32xbf16>
    %198 = vector.shape_cast %197 : vector<1x128x32xbf16> to vector<128x32xbf16>
    %cst_57 = arith.constant dense<0.000000e+00> : vector<48x32xf32>
    %199 = tpu.matmul %196, %198, %cst_57 {dimension_numbers = #tpu.dot_dimension_numbers<[1], [0], [0], [1], [0, 0, 1, 1], [], []>} : vector<48x128xbf16>, vector<128x32xbf16>, vector<48x32xf32> -> vector<48x32xf32>
    %200 = vector.broadcast %12 : vector<1x32xf32> to vector<48x32xf32>
    %201 = arith.addf %199, %200 : vector<48x32xf32>
    %202 = arith.addf %156, %201 : vector<48x32xf32>
    %203 = vector.shape_cast %202 : vector<48x32xf32> to vector<2x24x32xf32>
    %c0_58 = arith.constant 0 : index
    %c0_59 = arith.constant 0 : index
    %c0_60 = arith.constant 0 : index
    %204 = vector.load %arg17[%c0_58, %c0_59, %c0_60] : memref<2x24x32xf32, #tpu.memory_space<vmem>>, vector<2x24x32xf32>
    tpu.vector_store %arg17[%c0_58, %c0_59, %c0_60], %203 {strides = array<i32>} : memref<2x24x32xf32, #tpu.memory_space<vmem>>, vector<2x24x32xf32>,
    %c1_i32 = arith.constant 1 : i32
    %205 = arith.cmpi eq, %arg1, %c1_i32 : i32
    %206 = arith.extui %205 : i1 to i32
    %c0_i32_61 = arith.constant 0 : i32
    %207 = arith.cmpi ne, %206, %c0_i32_61 : i32
    scf.if %207 {
      %208 = vector.extract_strided_slice %202 {offsets = [16, 0], sizes = [1, 32], strides = [1, 1]} : vector<48x32xf32> to vector<1x32xf32>
      %209 = vector.extract_strided_slice %202 {offsets = [40, 0], sizes = [1, 32], strides = [1, 1]} : vector<48x32xf32> to vector<1x32xf32>
      %210 = tpu.concatenate %208, %209 in 0 : vector<1x32xf32>, vector<1x32xf32> -> vector<2x32xf32>
      %c0_62 = arith.constant 0 : index
      %c0_63 = arith.constant 0 : index
      %211 = vector.load %arg12[%c0_62, %c0_63] : memref<1x32xf32, #tpu.memory_space<vmem>>, vector<1x32xf32>
      %c0_64 = arith.constant 0 : index
      %c0_65 = arith.constant 0 : index
      %212 = vector.load %arg13[%c0_64, %c0_65] : memref<1x32xf32, #tpu.memory_space<vmem>>, vector<1x32xf32>
      %cst_66 = arith.constant dense<0.000000e+00> : vector<2xf32>
      %213 = vector.multi_reduction <add>, %210, %cst_66 [1] : vector<2x32xf32> to vector<2xf32>
      %214 = vector.shape_cast %213 : vector<2xf32> to vector<2x1xf32>
      %cst_67 = arith.constant 3.200000e+01 : f32
      %215 = vector.broadcast %cst_67 : f32 to vector<2x1xf32>
      %216 = arith.divf %214, %215 : vector<2x1xf32>
      %217 = vector.broadcast %216 : vector<2x1xf32> to vector<2x32xf32>
      %218 = arith.subf %210, %217 : vector<2x32xf32>
      %219 = arith.mulf %218, %218 : vector<2x32xf32>
      %cst_68 = arith.constant dense<0.000000e+00> : vector<2xf32>
      %220 = vector.multi_reduction <add>, %219, %cst_68 [1] : vector<2x32xf32> to vector<2xf32>
      %221 = vector.shape_cast %220 : vector<2xf32> to vector<2x1xf32>
      %cst_69 = arith.constant 3.200000e+01 : f32
      %222 = vector.broadcast %cst_69 : f32 to vector<2x1xf32>
      %223 = arith.divf %221, %222 : vector<2x1xf32>
      %cst_70 = arith.constant 9.99999974E-6 : f32
      %224 = vector.broadcast %cst_70 : f32 to vector<2x1xf32>
      %225 = arith.addf %223, %224 : vector<2x1xf32>
      %226 = math.rsqrt %225 : vector<2x1xf32>
      %227 = vector.broadcast %226 : vector<2x1xf32> to vector<2x32xf32>
      %228 = arith.mulf %218, %227 : vector<2x32xf32>
      %229 = vector.broadcast %211 : vector<1x32xf32> to vector<2x32xf32>
      %230 = arith.mulf %228, %229 : vector<2x32xf32>
      %231 = vector.broadcast %212 : vector<1x32xf32> to vector<2x32xf32>
      %232 = arith.addf %230, %231 : vector<2x32xf32>
      %233 = arith.truncf %232 : vector<2x32xf32> to vector<2x32xbf16>
      %c0_71 = arith.constant 0 : index
      %c0_72 = arith.constant 0 : index
      %234 = vector.load %arg14[%c0_71, %c0_72] : memref<32x128xbf16, #tpu.memory_space<vmem>>, vector<32x128xbf16>
      %cst_73 = arith.constant dense<0.000000e+00> : vector<2x128xf32>
      %235 = tpu.matmul %233, %234, %cst_73 {dimension_numbers = #tpu.dot_dimension_numbers<[1], [0], [0], [1], [0, 0, 1, 1], [], []>} : vector<2x32xbf16>, vector<32x128xbf16>, vector<2x128xf32> -> vector<2x128xf32>
      %c0_74 = arith.constant 0 : index
      %c0_75 = arith.constant 0 : index
      %236 = vector.load %arg15[%c0_74, %c0_75] : memref<1x128xf32, #tpu.memory_space<vmem>>, vector<1x128xf32>
      %237 = vector.broadcast %236 : vector<1x128xf32> to vector<2x128xf32>
      %238 = arith.addf %235, %237 : vector<2x128xf32>
      %c0_76 = arith.constant 0 : index
      %c0_77 = arith.constant 0 : index
      %c0_78 = arith.constant 0 : index
      %239 = vector.load %arg16[%c0_76, %c0_77, %c0_78] : memref<1x2x128xf32, #tpu.memory_space<vmem>>, vector<1x2x128xf32>
      %240 = vector.shape_cast %239 : vector<1x2x128xf32> to vector<2x128xf32>
      %241 = vector.shape_cast %238 : vector<2x128xf32> to vector<1x2x128xf32>
      tpu.vector_store %arg16[%c0_76, %c0_77, %c0_78], %241 {strides = array<i32>} : memref<1x2x128xf32, #tpu.memory_space<vmem>>, vector<1x2x128xf32>,
    } else {
    }
    return
  }
  func.func @transform_0(%arg0: i32, %arg1: i32) -> (i32, i32, i32) {
    %c0_i32 = arith.constant 0 : i32
    %c0_i32_0 = arith.constant 0 : i32
    %c0_i32_1 = arith.constant 0 : i32
    return %arg0, %c0_i32, %c0_i32_0 : i32, i32, i32
  }
  func.func @transform_1(%arg0: i32, %arg1: i32) -> (i32, i32) {
    %c0_i32 = arith.constant 0 : i32
    %c0_i32_0 = arith.constant 0 : i32
    %c0_i32_1 = arith.constant 0 : i32
    return %c0_i32, %c0_i32_0 : i32, i32
  }
  func.func @transform_2(%arg0: i32, %arg1: i32) -> (i32, i32) {
    %c0_i32 = arith.constant 0 : i32
    %c0_i32_0 = arith.constant 0 : i32
    %c0_i32_1 = arith.constant 0 : i32
    return %c0_i32, %c0_i32_0 : i32, i32
  }
  func.func @transform_3(%arg0: i32, %arg1: i32) -> (i32, i32) {
    %c0_i32 = arith.constant 0 : i32
    %c0_i32_0 = arith.constant 0 : i32
    %c0_i32_1 = arith.constant 0 : i32
    return %c0_i32, %c0_i32_0 : i32, i32
  }
  func.func @transform_4(%arg0: i32, %arg1: i32) -> (i32, i32) {
    %c0_i32 = arith.constant 0 : i32
    %c0_i32_0 = arith.constant 0 : i32
    %c0_i32_1 = arith.constant 0 : i32
    return %c0_i32, %c0_i32_0 : i32, i32
  }
  func.func @transform_5(%arg0: i32, %arg1: i32) -> (i32, i32, i32) {
    %c0_i32 = arith.constant 0 : i32
    %c0_i32_0 = arith.constant 0 : i32
    %c0_i32_1 = arith.constant 0 : i32
    return %arg1, %c0_i32, %c0_i32_0 : i32, i32, i32
  }
  func.func @transform_6(%arg0: i32, %arg1: i32) -> (i32, i32, i32) {
    %c0_i32 = arith.constant 0 : i32
    %c0_i32_0 = arith.constant 0 : i32
    %c0_i32_1 = arith.constant 0 : i32
    return %arg1, %c0_i32, %c0_i32_0 : i32, i32, i32
  }
  func.func @transform_7(%arg0: i32, %arg1: i32) -> (i32, i32, i32) {
    %c0_i32 = arith.constant 0 : i32
    %c0_i32_0 = arith.constant 0 : i32
    %c0_i32_1 = arith.constant 0 : i32
    return %arg1, %c0_i32, %c0_i32_0 : i32, i32, i32
  }
  func.func @transform_8(%arg0: i32, %arg1: i32) -> (i32, i32, i32) {
    %c0_i32 = arith.constant 0 : i32
    %c0_i32_0 = arith.constant 0 : i32
    %c0_i32_1 = arith.constant 0 : i32
    return %arg1, %c0_i32, %c0_i32_0 : i32, i32, i32
  }
  func.func @transform_9(%arg0: i32, %arg1: i32) -> (i32, i32, i32) {
    %c0_i32 = arith.constant 0 : i32
    %c0_i32_0 = arith.constant 0 : i32
    %c0_i32_1 = arith.constant 0 : i32
    return %arg1, %c0_i32, %c0_i32_0 : i32, i32, i32
  }
  func.func @transform_10(%arg0: i32, %arg1: i32) -> (i32, i32) {
    %c0_i32 = arith.constant 0 : i32
    %c0_i32_0 = arith.constant 0 : i32
    %c0_i32_1 = arith.constant 0 : i32
    return %c0_i32, %c0_i32_0 : i32, i32
  }
  func.func @transform_11(%arg0: i32, %arg1: i32) -> (i32, i32) {
    %c0_i32 = arith.constant 0 : i32
    %c0_i32_0 = arith.constant 0 : i32
    %c0_i32_1 = arith.constant 0 : i32
    return %c0_i32, %c0_i32_0 : i32, i32
  }
  func.func @transform_12(%arg0: i32, %arg1: i32) -> (i32, i32) {
    %c0_i32 = arith.constant 0 : i32
    %c0_i32_0 = arith.constant 0 : i32
    %c0_i32_1 = arith.constant 0 : i32
    return %c0_i32, %c0_i32_0 : i32, i32
  }
  func.func @transform_13(%arg0: i32, %arg1: i32) -> (i32, i32) {
    %c0_i32 = arith.constant 0 : i32
    %c0_i32_0 = arith.constant 0 : i32
    %c0_i32_1 = arith.constant 0 : i32
    return %c0_i32, %c0_i32_0 : i32, i32
  }
  func.func @transform_14(%arg0: i32, %arg1: i32) -> (i32, i32, i32) {
    %c0_i32 = arith.constant 0 : i32
    %c0_i32_0 = arith.constant 0 : i32
    %c0_i32_1 = arith.constant 0 : i32
    return %arg0, %c0_i32, %c0_i32_0 : i32, i32, i32
  }
}

</mosaic_0001>

<llo_original>
// kernel: vit_forward.1
$region0: #{vit_forward.1}
  #allocation0 [shape = 'u32[]', space=smem, size = 0x4, offset = 0x4, fixed_abs, tag = 'smem constant byte address 0x4 - core index']
  #allocation1 [shape = 'u32[72,128]{1,0:T(1,128)}', space=vmem, size = 0x9000, scoped, tag = 'internal scratch']
  #allocation2 [shape = 'f32[2,24,32]{2,1,0:T(8,128)}', space=vmem, size = 0x6000, scoped, tag = 'scratch operand']
  %s0 = inlined_call_operand.vmem [shape: bf16[4,16,64], index: 0, kind: input, shape index: {}]
  %s1 = inlined_call_operand.vmem [shape: bf16[64,32], index: 1, kind: input, shape index: {}]
  %s2 = inlined_call_operand.vmem [shape: f32[1,32], index: 2, kind: input, shape index: {}]
  %s3 = inlined_call_operand.vmem [shape: f32[16,32], index: 3, kind: input, shape index: {}]
  %s4 = inlined_call_operand.vmem [shape: f32[8,32], index: 4, kind: input, shape index: {}]
  %s5 = inlined_call_operand.vmem [shape: bf16[2,32,96], index: 5, kind: input, shape index: {}]
  %s6 = inlined_call_operand.vmem [shape: bf16[2,32,32], index: 6, kind: input, shape index: {}]
  %s7 = inlined_call_operand.vmem [shape: bf16[2,32,128], index: 7, kind: input, shape index: {}]
  %s8 = inlined_call_operand.vmem [shape: bf16[2,128,32], index: 8, kind: input, shape index: {}]
  %s9 = inlined_call_operand.vmem [shape: f32[2,8,128], index: 9, kind: input, shape index: {}]
  %s10 = inlined_call_operand.vmem [shape: f32[1,32], index: 10, kind: input, shape index: {}]
  %s11 = inlined_call_operand.vmem [shape: f32[1,32], index: 11, kind: input, shape index: {}]
  %s12 = inlined_call_operand.vmem [shape: bf16[32,128], index: 12, kind: input, shape index: {}]
  %s13 = inlined_call_operand.vmem [shape: f32[1,128], index: 13, kind: input, shape index: {}]
  %s14 = inlined_call_operand.hbm [shape: f32[2,2,128], index: 14, kind: output, shape index: {}]
  %s15 = sld [smem:[#allocation0]]
  $region97: #{vit_forward.1} parent=0
    _
  %s17 = ssub.s32 1, %s15
  %s18 = scalar_select 0, %s17, %s15
  $region1: #{vit_forward.1} parent=0
    #allocation3 [shape = 'u8[2048]{0}', space=vmem, size = 0x800, scoped, tag = 'output window, operand 0']
    #allocation4 [shape = 's32[2]{0}', space=sflag, size = 0x8, scoped, tag = 'scoped memory for vit_forward.1']
    %19 = vsyncpa [#allocation4], 0
    %s20 = scalar_lea.sflag [#allocation4], 1
    %21 = vsyncpa %s20, 0
    loop: start=0, step=1, limit=6
    $region2: #{vit_forward.1} parent=1 // loop_pre_header
      _
    $region3: #{vit_forward.1} parent=1 // loop_header
      %s23 = sphi 0, %s27
      %p24 = scmp.ge.s32.totalorder %s23, 6
      %s30 = sphi 0, %s42
      %s31 = sphi 0, %s38
      %s32 = sphi 0, %s30
      %s33 = sphi 0, %s31
      %s34 = sphi 0, %s32
      %s35 = sphi 0, %s33
      %s45 = sphi 0, %s47
      %s48 = sphi 0, %s45
      %s49 = sphi 0, %s48
      %s65 = sphi 0, %s49
      %s69 = sphi 0, %s69
      %s71 = sphi 0, %s69
      %s72 = sphi 0, %s71
      %s86 = sphi 0, %s72
      %s90 = sphi 0, %s90
      %s92 = sphi 0, %s90
      %s93 = sphi 0, %s92
      %s107 = sphi 0, %s93
      %s111 = sphi 0, %s111
      %s113 = sphi 0, %s111
      %s114 = sphi 0, %s113
      %s128 = sphi 0, %s114
      %s132 = sphi 0, %s132
      %s134 = sphi 0, %s132
      %s135 = sphi 0, %s134
      %s149 = sphi 0, %s135
      %s155 = sphi 0, %s157
      %s158 = sphi 0, %s155
      %s159 = sphi 0, %s158
      %s175 = sphi 0, %s159
      %s181 = sphi 0, %s183
      %s184 = sphi 0, %s181
      %s185 = sphi 0, %s184
      %s201 = sphi 0, %s185
      %s207 = sphi 0, %s209
      %s210 = sphi 0, %s207
      %s211 = sphi 0, %s210
      %s227 = sphi 0, %s211
      %s233 = sphi 0, %s235
      %s236 = sphi 0, %s233
      %s237 = sphi 0, %s236
      %s253 = sphi 0, %s237
      %s259 = sphi 0, %s261
      %s262 = sphi 0, %s259
      %s263 = sphi 0, %s262
      %s279 = sphi 0, %s263
      %s283 = sphi 0, %s283
      %s285 = sphi 0, %s283
      %s286 = sphi 0, %s285
      %s300 = sphi 0, %s286
      %s304 = sphi 0, %s304
      %s306 = sphi 0, %s304
      %s307 = sphi 0, %s306
      %s321 = sphi 0, %s307
      %s325 = sphi 0, %s325
      %s327 = sphi 0, %s325
      %s328 = sphi 0, %s327
      %s342 = sphi 0, %s328
      %s346 = sphi 0, %s346
      %s348 = sphi 0, %s346
      %s349 = sphi 0, %s348
      %s363 = sphi 0, %s349
      %s369 = sphi 0, %s371
      %s372 = sphi 0, %s369
      %s373 = sphi 0, %s372
      %s389 = sphi 0, %s373
    $region4: #{vit_forward.1} parent=1 // loop_header_branch
      %26 = sbr.rel (%p24) target = $region8
    $region5: #{vit_forward.1} parent=1 // loop_body
      %s28 = ssub.s32 %s23, 1
      %s29 = ssub.s32 %s23, 2
      %s36 = sadd.s32 1, %s31
      %p37 = scmp.ge.s32.totalorder %s36, 2
      %s38 = scalar_select %p37, 0, %s36
      %s39 = sadd.s32 1, %s30
      %s40 = scalar_select %p37, %s39, %s30
      %p41 = scmp.ge.s32.totalorder %s40, 2
      %s42 = scalar_select %p41, 0, %s40
      %s43 = ssub.s32 %s30, %s42
      %p44 = scmp.eq.s32.totalorder %s43, 0
      %s46 = sadd.s32 %s45, 1
      %s47 = scalar_select %p44, %s45, %s46
      %p50 = pneg %p44
      %p51 = scmp.eq.s32.totalorder %s23, 3
      %p52 = por %p50, %p51
      %p53 = scmp.ne.s32.totalorder %s45, %s48
      %p54 = scmp.eq.s32.totalorder %s23, 0
      %p55 = por %p53, %p54
      %p56 = scmp.ne.s32.totalorder %s45, %s48
      %p57 = scmp.eq.s32.totalorder %s28, 3
      %p58 = por %p56, %p57
      %p59 = scmp.ne.s32.totalorder %s48, %s49
      %p60 = scmp.eq.s32.totalorder %s28, 0
      %p61 = por %p59, %p60
      %p62 = scmp.ne.s32.totalorder %s48, %s49
      %p63 = scmp.eq.s32.totalorder %s29, 3
      %p64 = por %p62, %p63
      %p66 = scmp.ne.s32.totalorder %s49, %s65
      %p67 = scmp.eq.s32.totalorder %s29, 0
      %p68 = por %p66, %p67
      %s70 = sadd.s32 %s69, 1
      %p73 = scmp.eq.s32.totalorder %s23, 3
      %p74 = scmp.ne.s32.totalorder %s69, %s71
      %p75 = scmp.eq.s32.totalorder %s23, 0
      %p76 = por %p74, %p75
      %p77 = scmp.ne.s32.totalorder %s69, %s71
      %p78 = scmp.eq.s32.totalorder %s28, 3
      %p79 = por %p77, %p78
      %p80 = scmp.ne.s32.totalorder %s71, %s72
      %p81 = scmp.eq.s32.totalorder %s28, 0
      %p82 = por %p80, %p81
      %p83 = scmp.ne.s32.totalorder %s71, %s72
      %p84 = scmp.eq.s32.totalorder %s29, 3
      %p85 = por %p83, %p84
      %p87 = scmp.ne.s32.totalorder %s72, %s86
      %p88 = scmp.eq.s32.totalorder %s29, 0
      %p89 = por %p87, %p88
      %s91 = sadd.s32 %s90, 1
      %p94 = scmp.eq.s32.totalorder %s23, 3
      %p95 = scmp.ne.s32.totalorder %s90, %s92
      %p96 = scmp.eq.s32.totalorder %s23, 0
      %p97 = por %p95, %p96
      %p98 = scmp.ne.s32.totalorder %s90, %s92
      %p99 = scmp.eq.s32.totalorder %s28, 3
      %p100 = por %p98, %p99
      %p101 = scmp.ne.s32.totalorder %s92, %s93
      %p102 = scmp.eq.s32.totalorder %s28, 0
      %p103 = por %p101, %p102
      %p104 = scmp.ne.s32.totalorder %s92, %s93
      %p105 = scmp.eq.s32.totalorder %s29, 3
      %p106 = por %p104, %p105
      %p108 = scmp.ne.s32.totalorder %s93, %s107
      %p109 = scmp.eq.s32.totalorder %s29, 0
      %p110 = por %p108, %p109
      %s112 = sadd.s32 %s111, 1
      %p115 = scmp.eq.s32.totalorder %s23, 3
      %p116 = scmp.ne.s32.totalorder %s111, %s113
      %p117 = scmp.eq.s32.totalorder %s23, 0
      %p118 = por %p116, %p117
      %p119 = scmp.ne.s32.totalorder %s111, %s113
      %p120 = scmp.eq.s32.totalorder %s28, 3
      %p121 = por %p119, %p120
      %p122 = scmp.ne.s32.totalorder %s113, %s114
      %p123 = scmp.eq.s32.totalorder %s28, 0
      %p124 = por %p122, %p123
      %p125 = scmp.ne.s32.totalorder %s113, %s114
      %p126 = scmp.eq.s32.totalorder %s29, 3
      %p127 = por %p125, %p126
      %p129 = scmp.ne.s32.totalorder %s114, %s128
      %p130 = scmp.eq.s32.totalorder %s29, 0
      %p131 = por %p129, %p130
      %s133 = sadd.s32 %s132, 1
      %p136 = scmp.eq.s32.totalorder %s23, 3
      %p137 = scmp.ne.s32.totalorder %s132, %s134
      %p138 = scmp.eq.s32.totalorder %s23, 0
      %p139 = por %p137, %p138
      %p140 = scmp.ne.s32.totalorder %s132, %s134
      %p141 = scmp.eq.s32.totalorder %s28, 3
      %p142 = por %p140, %p141
      %p143 = scmp.ne.s32.totalorder %s134, %s135
      %p144 = scmp.eq.s32.totalorder %s28, 0
      %p145 = por %p143, %p144
      %p146 = scmp.ne.s32.totalorder %s134, %s135
      %p147 = scmp.eq.s32.totalorder %s29, 3
      %p148 = por %p146, %p147
      %p150 = scmp.ne.s32.totalorder %s135, %s149
      %p151 = scmp.eq.s32.totalorder %s29, 0
      %p152 = por %p150, %p151
      %s153 = ssub.s32 %s31, %s38
      %p154 = scmp.eq.s32.totalorder %s153, 0
      %s156 = sadd.s32 %s155, 1
      %s157 = scalar_select %p154, %s155, %s156
      %p160 = pneg %p154
      %p161 = scmp.eq.s32.totalorder %s23, 3
      %p162 = por %p160, %p161
      %p163 = scmp.ne.s32.totalorder %s155, %s158
      %p164 = scmp.eq.s32.totalorder %s23, 0
      %p165 = por %p163, %p164
      %p166 = scmp.ne.s32.totalorder %s155, %s158
      %p167 = scmp.eq.s32.totalorder %s28, 3
      %p168 = por %p166, %p167
      %p169 = scmp.ne.s32.totalorder %s158, %s159
      %p170 = scmp.eq.s32.totalorder %s28, 0
      %p171 = por %p169, %p170
      %p172 = scmp.ne.s32.totalorder %s158, %s159
      %p173 = scmp.eq.s32.totalorder %s29, 3
      %p174 = por %p172, %p173
      %p176 = scmp.ne.s32.totalorder %s159, %s175
      %p177 = scmp.eq.s32.totalorder %s29, 0
      %p178 = por %p176, %p177
      %s179 = ssub.s32 %s31, %s38
      %p180 = scmp.eq.s32.totalorder %s179, 0
      %s182 = sadd.s32 %s181, 1
      %s183 = scalar_select %p180, %s181, %s182
      %p186 = pneg %p180
      %p187 = scmp.eq.s32.totalorder %s23, 3
      %p188 = por %p186, %p187
      %p189 = scmp.ne.s32.totalorder %s181, %s184
      %p190 = scmp.eq.s32.totalorder %s23, 0
      %p191 = por %p189, %p190
      %p192 = scmp.ne.s32.totalorder %s181, %s184
      %p193 = scmp.eq.s32.totalorder %s28, 3
      %p194 = por %p192, %p193
      %p195 = scmp.ne.s32.totalorder %s184, %s185
      %p196 = scmp.eq.s32.totalorder %s28, 0
      %p197 = por %p195, %p196
      %p198 = scmp.ne.s32.totalorder %s184, %s185
      %p199 = scmp.eq.s32.totalorder %s29, 3
      %p200 = por %p198, %p199
      %p202 = scmp.ne.s32.totalorder %s185, %s201
      %p203 = scmp.eq.s32.totalorder %s29, 0
      %p204 = por %p202, %p203
      %s205 = ssub.s32 %s31, %s38
      %p206 = scmp.eq.s32.totalorder %s205, 0
      %s208 = sadd.s32 %s207, 1
      %s209 = scalar_select %p206, %s207, %s208
      %p212 = pneg %p206
      %p213 = scmp.eq.s32.totalorder %s23, 3
      %p214 = por %p212, %p213
      %p215 = scmp.ne.s32.totalorder %s207, %s210
      %p216 = scmp.eq.s32.totalorder %s23, 0
      %p217 = por %p215, %p216
      %p218 = scmp.ne.s32.totalorder %s207, %s210
      %p219 = scmp.eq.s32.totalorder %s28, 3
      %p220 = por %p218, %p219
      %p221 = scmp.ne.s32.totalorder %s210, %s211
      %p222 = scmp.eq.s32.totalorder %s28, 0
      %p223 = por %p221, %p222
      %p224 = scmp.ne.s32.totalorder %s210, %s211
      %p225 = scmp.eq.s32.totalorder %s29, 3
      %p226 = por %p224, %p225
      %p228 = scmp.ne.s32.totalorder %s211, %s227
      %p229 = scmp.eq.s32.totalorder %s29, 0
      %p230 = por %p228, %p229
      %s231 = ssub.s32 %s31, %s38
      %p232 = scmp.eq.s32.totalorder %s231, 0
      %s234 = sadd.s32 %s233, 1
      %s235 = scalar_select %p232, %s233, %s234
      %p238 = pneg %p232
      %p239 = scmp.eq.s32.totalorder %s23, 3
      %p240 = por %p238, %p239
      %p241 = scmp.ne.s32.totalorder %s233, %s236
      %p242 = scmp.eq.s32.totalorder %s23, 0
      %p243 = por %p241, %p242
      %p244 = scmp.ne.s32.totalorder %s233, %s236
      %p245 = scmp.eq.s32.totalorder %s28, 3
      %p246 = por %p244, %p245
      %p247 = scmp.ne.s32.totalorder %s236, %s237
      %p248 = scmp.eq.s32.totalorder %s28, 0
      %p249 = por %p247, %p248
      %p250 = scmp.ne.s32.totalorder %s236, %s237
      %p251 = scmp.eq.s32.totalorder %s29, 3
      %p252 = por %p250, %p251
      %p254 = scmp.ne.s32.totalorder %s237, %s253
      %p255 = scmp.eq.s32.totalorder %s29, 0
      %p256 = por %p254, %p255
      %s257 = ssub.s32 %s31, %s38
      %p258 = scmp.eq.s32.totalorder %s257, 0
      %s260 = sadd.s32 %s259, 1
      %s261 = scalar_select %p258, %s259, %s260
      %p264 = pneg %p258
      %p265 = scmp.eq.s32.totalorder %s23, 3
      %p266 = por %p264, %p265
      %p267 = scmp.ne.s32.totalorder %s259, %s262
      %p268 = scmp.eq.s32.totalorder %s23, 0
      %p269 = por %p267, %p268
      %p270 = scmp.ne.s32.totalorder %s259, %s262
      %p271 = scmp.eq.s32.totalorder %s28, 3
      %p272 = por %p270, %p271
      %p273 = scmp.ne.s32.totalorder %s262, %s263
      %p274 = scmp.eq.s32.totalorder %s28, 0
      %p275 = por %p273, %p274
      %p276 = scmp.ne.s32.totalorder %s262, %s263
      %p277 = scmp.eq.s32.totalorder %s29, 3
      %p278 = por %p276, %p277
      %p280 = scmp.ne.s32.totalorder %s263, %s279
      %p281 = scmp.eq.s32.totalorder %s29, 0
      %p282 = por %p280, %p281
      %s284 = sadd.s32 %s283, 1
      %p287 = scmp.eq.s32.totalorder %s23, 3
      %p288 = scmp.ne.s32.totalorder %s283, %s285
      %p289 = scmp.eq.s32.totalorder %s23, 0
      %p290 = por %p288, %p289
      %p291 = scmp.ne.s32.totalorder %s283, %s285
      %p292 = scmp.eq.s32.totalorder %s28, 3
      %p293 = por %p291, %p292
      %p294 = scmp.ne.s32.totalorder %s285, %s286
      %p295 = scmp.eq.s32.totalorder %s28, 0
      %p296 = por %p294, %p295
      %p297 = scmp.ne.s32.totalorder %s285, %s286
      %p298 = scmp.eq.s32.totalorder %s29, 3
      %p299 = por %p297, %p298
      %p301 = scmp.ne.s32.totalorder %s286, %s300
      %p302 = scmp.eq.s32.totalorder %s29, 0
      %p303 = por %p301, %p302
      %s305 = sadd.s32 %s304, 1
      %p308 = scmp.eq.s32.totalorder %s23, 3
      %p309 = scmp.ne.s32.totalorder %s304, %s306
      %p310 = scmp.eq.s32.totalorder %s23, 0
      %p311 = por %p309, %p310
      %p312 = scmp.ne.s32.totalorder %s304, %s306
      %p313 = scmp.eq.s32.totalorder %s28, 3
      %p314 = por %p312, %p313
      %p315 = scmp.ne.s32.totalorder %s306, %s307
      %p316 = scmp.eq.s32.totalorder %s28, 0
      %p317 = por %p315, %p316
      %p318 = scmp.ne.s32.totalorder %s306, %s307
      %p319 = scmp.eq.s32.totalorder %s29, 3
      %p320 = por %p318, %p319
      %p322 = scmp.ne.s32.totalorder %s307, %s321
      %p323 = scmp.eq.s32.totalorder %s29, 0
      %p324 = por %p322, %p323
      %s326 = sadd.s32 %s325, 1
      %p329 = scmp.eq.s32.totalorder %s23, 3
      %p330 = scmp.ne.s32.totalorder %s325, %s327
      %p331 = scmp.eq.s32.totalorder %s23, 0
      %p332 = por %p330, %p331
      %p333 = scmp.ne.s32.totalorder %s325, %s327
      %p334 = scmp.eq.s32.totalorder %s28, 3
      %p335 = por %p333, %p334
      %p336 = scmp.ne.s32.totalorder %s327, %s328
      %p337 = scmp.eq.s32.totalorder %s28, 0
      %p338 = por %p336, %p337
      %p339 = scmp.ne.s32.totalorder %s327, %s328
      %p340 = scmp.eq.s32.totalorder %s29, 3
      %p341 = por %p339, %p340
      %p343 = scmp.ne.s32.totalorder %s328, %s342
      %p344 = scmp.eq.s32.totalorder %s29, 0
      %p345 = por %p343, %p344
      %s347 = sadd.s32 %s346, 1
      %p350 = scmp.eq.s32.totalorder %s23, 3
      %p351 = scmp.ne.s32.totalorder %s346, %s348
      %p352 = scmp.eq.s32.totalorder %s23, 0
      %p353 = por %p351, %p352
      %p354 = scmp.ne.s32.totalorder %s346, %s348
      %p355 = scmp.eq.s32.totalorder %s28, 3
      %p356 = por %p354, %p355
      %p357 = scmp.ne.s32.totalorder %s348, %s349
      %p358 = scmp.eq.s32.totalorder %s28, 0
      %p359 = por %p357, %p358
      %p360 = scmp.ne.s32.totalorder %s348, %s349
      %p361 = scmp.eq.s32.totalorder %s29, 3
      %p362 = por %p360, %p361
      %p364 = scmp.ne.s32.totalorder %s349, %s363
      %p365 = scmp.eq.s32.totalorder %s29, 0
      %p366 = por %p364, %p365
      %s367 = ssub.s32 %s30, %s42
      %p368 = scmp.eq.s32.totalorder %s367, 0
      %s370 = sadd.s32 %s369, 1
      %s371 = scalar_select %p368, %s369, %s370
      %p374 = pneg %p368
      %p375 = scmp.eq.s32.totalorder %s23, 3
      %p376 = por %p374, %p375
      %p377 = scmp.ne.s32.totalorder %s369, %s372
      %p378 = scmp.eq.s32.totalorder %s23, 0
      %p379 = por %p377, %p378
      %p380 = scmp.ne.s32.totalorder %s369, %s372
      %p381 = scmp.eq.s32.totalorder %s28, 3
      %p382 = por %p380, %p381
      %p383 = scmp.ne.s32.totalorder %s372, %s373
      %p384 = scmp.eq.s32.totalorder %s28, 0
      %p385 = por %p383, %p384
      %p386 = scmp.ne.s32.totalorder %s372, %s373
      %p387 = scmp.eq.s32.totalorder %s29, 3
      %p388 = por %p386, %p387
      %p390 = scmp.ne.s32.totalorder %s373, %s389
      %p391 = scmp.eq.s32.totalorder %s29, 0
      %p392 = por %p390, %p391
      %p393 = scmp.le.s32.totalorder 1, %s23
      %p394 = scmp.lt.s32.totalorder %s23, 5
      %p395 = pnand %p393, %p394
      %p396 = pneg %p395
      // Predicated region
      $region9: #{vit_forward.1} parent=5 // pred_check
        _
      $region10: #{vit_forward.1} parent=5 // pred_check_branch
        %398 = sbr.rel (%p395) target = $region12
      $region11: #{vit_forward.1} parent=5 // pred_region
        %s399 = ssub.s32 %s23, 1
        // Predicated region
        $region13: #{vit_forward.1} parent=11 // pred_check
          %p400 = pneg %p82
        $region14: #{vit_forward.1} parent=11 // pred_check_branch
          %402 = sbr.rel (%p400) target = $region16
        $region15: #{vit_forward.1} parent=11 // pred_region
          _
        $region16: #{vit_forward.1} parent=11 // pred_fallthru
          _
        // Predicated region
        $region17: #{vit_forward.1} parent=11 // pred_check
          %p403 = pneg %p103
        $region18: #{vit_forward.1} parent=11 // pred_check_branch
          %405 = sbr.rel (%p403) target = $region20
        $region19: #{vit_forward.1} parent=11 // pred_region
          _
        $region20: #{vit_forward.1} parent=11 // pred_fallthru
          _
        // Predicated region
        $region21: #{vit_forward.1} parent=11 // pred_check
          %p406 = pneg %p124
        $region22: #{vit_forward.1} parent=11 // pred_check_branch
          %408 = sbr.rel (%p406) target = $region24
        $region23: #{vit_forward.1} parent=11 // pred_region
          _
        $region24: #{vit_forward.1} parent=11 // pred_fallthru
          _
        // Predicated region
        $region25: #{vit_forward.1} parent=11 // pred_check
          %p409 = pneg %p145
        $region26: #{vit_forward.1} parent=11 // pred_check_branch
          %411 = sbr.rel (%p409) target = $region28
        $region27: #{vit_forward.1} parent=11 // pred_region
          _
        $region28: #{vit_forward.1} parent=11 // pred_fallthru
          _
        // Predicated region
        $region29: #{vit_forward.1} parent=11 // pred_check
          %p412 = pneg %p296
        $region30: #{vit_forward.1} parent=11 // pred_check_branch
          %414 = sbr.rel (%p412) target = $region32
        $region31: #{vit_forward.1} parent=11 // pred_region
          _
        $region32: #{vit_forward.1} parent=11 // pred_fallthru
          _
        // Predicated region
        $region33: #{vit_forward.1} parent=11 // pred_check
          %p415 = pneg %p317
        $region34: #{vit_forward.1} parent=11 // pred_check_branch
          %417 = sbr.rel (%p415) target = $region36
        $region35: #{vit_forward.1} parent=11 // pred_region
          _
        $region36: #{vit_forward.1} parent=11 // pred_fallthru
          _
        // Predicated region
        $region37: #{vit_forward.1} parent=11 // pred_check
          %p418 = pneg %p338
        $region38: #{vit_forward.1} parent=11 // pred_check_branch
          %420 = sbr.rel (%p418) target = $region40
        $region39: #{vit_forward.1} parent=11 // pred_region
          _
        $region40: #{vit_forward.1} parent=11 // pred_fallthru
          _
        // Predicated region
        $region41: #{vit_forward.1} parent=11 // pred_check
          %p421 = pneg %p359
        $region42: #{vit_forward.1} parent=11 // pred_check_branch
          %423 = sbr.rel (%p421) target = $region44
        $region43: #{vit_forward.1} parent=11 // pred_region
          _
        $region44: #{vit_forward.1} parent=11 // pred_fallthru
          _
      $region12: #{vit_forward.1} parent=5 // pred_fallthru
        _
      %p424 = scmp.lt.s32.totalorder %s23, 4
      // Predicated region
      $region45: #{vit_forward.1} parent=5 // pred_check
        %p425 = pneg %p424
      $region46: #{vit_forward.1} parent=5 // pred_check_branch
        %427 = sbr.rel (%p425) target = $region48
      $region47: #{vit_forward.1} parent=5 // pred_region
        // Predicated region
        $region49: #{vit_forward.1} parent=47 // pred_check
          %p428 = pneg %p55
        $region50: #{vit_forward.1} parent=47 // pred_check_branch
          %430 = sbr.rel (%p428) target = $region52
        $region51: #{vit_forward.1} parent=47 // pred_region
          %s431 = smul.u32 2, %s30
          %p432 = scmp.lt.s32.totalorder %s431, 3
          %s433 = scalar_select %p432, %s431, 3
          %s434 = smul.addr %s433, 2
          %s435 = smul.addr %s434, 4
          %s436 = scalar_lea.vmem %s0, %s435
          %s437 = smul.u32 2, %s30
        $region52: #{vit_forward.1} parent=47 // pred_fallthru
          _
        // Predicated region
        $region53: #{vit_forward.1} parent=47 // pred_check
          %p438 = pneg %p165
        $region54: #{vit_forward.1} parent=47 // pred_check_branch
          %440 = sbr.rel (%p438) target = $region56
        $region55: #{vit_forward.1} parent=47 // pred_region
          %p441 = scmp.lt.s32.totalorder %s31, 1
          %s442 = scalar_select %p441, %s31, 1
          %s443 = smul.addr %s442, 4
          %s444 = smul.addr %s443, 4
          %s445 = scalar_lea.vmem %s5, %s444
        $region56: #{vit_forward.1} parent=47 // pred_fallthru
          _
        // Predicated region
        $region57: #{vit_forward.1} parent=47 // pred_check
          %p446 = pneg %p191
        $region58: #{vit_forward.1} parent=47 // pred_check_branch
          %448 = sbr.rel (%p446) target = $region60
        $region59: #{vit_forward.1} parent=47 // pred_region
          %p449 = scmp.lt.s32.totalorder %s31, 1
          %s450 = scalar_select %p449, %s31, 1
          %s451 = smul.addr %s450, 4
          %s452 = smul.addr %s451, 4
          %s453 = scalar_lea.vmem %s6, %s452
        $region60: #{vit_forward.1} parent=47 // pred_fallthru
          _
        // Predicated region
        $region61: #{vit_forward.1} parent=47 // pred_check
          %p454 = pneg %p217
        $region62: #{vit_forward.1} parent=47 // pred_check_branch
          %456 = sbr.rel (%p454) target = $region64
        $region63: #{vit_forward.1} parent=47 // pred_region
          %p457 = scmp.lt.s32.totalorder %s31, 1
          %s458 = scalar_select %p457, %s31, 1
          %s459 = smul.addr %s458, 4
          %s460 = smul.addr %s459, 4
          %s461 = scalar_lea.vmem %s7, %s460
        $region64: #{vit_forward.1} parent=47 // pred_fallthru
          _
        // Predicated region
        $region65: #{vit_forward.1} parent=47 // pred_check
          %p462 = pneg %p243
        $region66: #{vit_forward.1} parent=47 // pred_check_branch
          %464 = sbr.rel (%p462) target = $region68
        $region67: #{vit_forward.1} parent=47 // pred_region
          %p465 = scmp.lt.s32.totalorder %s31, 1
          %s466 = scalar_select %p465, %s31, 1
          %s467 = smul.addr %s466, 16
          %s468 = smul.addr %s467, 4
          %s469 = scalar_lea.vmem %s8, %s468
        $region68: #{vit_forward.1} parent=47 // pred_fallthru
          _
        // Predicated region
        $region69: #{vit_forward.1} parent=47 // pred_check
          %p470 = pneg %p269
        $region70: #{vit_forward.1} parent=47 // pred_check_branch
          %472 = sbr.rel (%p470) target = $region72
        $region71: #{vit_forward.1} parent=47 // pred_region
          %p473 = scmp.lt.s32.totalorder %s31, 1
          %s474 = scalar_select %p473, %s31, 1
          %s475 = smul.addr %s474, 8
          %s476 = scalar_lea.vmem %s9, %s475
        $region72: #{vit_forward.1} parent=47 // pred_fallthru
          _
      $region48: #{vit_forward.1} parent=5 // pred_fallthru
        _
      %p477 = scmp.le.s32.totalorder 1, %s23
      %p478 = scmp.lt.s32.totalorder %s23, 5
      %p479 = pnand %p477, %p478
      %p480 = pneg %p479
      // Predicated region
      $region73: #{vit_forward.1} parent=5 // pred_check
        _
      $region74: #{vit_forward.1} parent=5 // pred_check_branch
        %482 = sbr.rel (%p479) target = $region76
      $region75: #{vit_forward.1} parent=5 // pred_region
        %s483 = ssub.s32 %s23, 1
        %s484 = smul.u32 2, %s32
        %p485 = scmp.lt.s32.totalorder %s484, 3
        %s486 = scalar_select %p485, %s484, 3
        %s487 = smul.addr %s486, 2
        %s488 = smul.addr %s487, 4
        %s489 = scalar_lea.vmem %s0, %s488
        %p490 = pneg %p61
        %p491 = pneg %p58
        %p492 = pneg %p82
        %p493 = pneg %p79
        %p494 = pneg %p103
        %p495 = pneg %p100
        %p496 = pneg %p124
        %p497 = pneg %p121
        %p498 = pneg %p145
        %p499 = pneg %p142
        %p500 = scmp.lt.s32.totalorder %s33, 1
        %s501 = scalar_select %p500, %s33, 1
        %s502 = smul.addr %s501, 4
        %s503 = smul.addr %s502, 4
        %s504 = scalar_lea.vmem %s5, %s503
        %p505 = pneg %p171
        %p506 = pneg %p168
        %p507 = scmp.lt.s32.totalorder %s33, 1
        %s508 = scalar_select %p507, %s33, 1
        %s509 = smul.addr %s508, 4
        %s510 = smul.addr %s509, 4
        %s511 = scalar_lea.vmem %s6, %s510
        %p512 = pneg %p197
        %p513 = pneg %p194
        %p514 = scmp.lt.s32.totalorder %s33, 1
        %s515 = scalar_select %p514, %s33, 1
        %s516 = smul.addr %s515, 4
        %s517 = smul.addr %s516, 4
        %s518 = scalar_lea.vmem %s7, %s517
        %p519 = pneg %p223
        %p520 = pneg %p220
        %p521 = scmp.lt.s32.totalorder %s33, 1
        %s522 = scalar_select %p521, %s33, 1
        %s523 = smul.addr %s522, 16
        %s524 = smul.addr %s523, 4
        %s525 = scalar_lea.vmem %s8, %s524
        %p526 = pneg %p249
        %p527 = pneg %p246
        %p528 = scmp.lt.s32.totalorder %s33, 1
        %s529 = scalar_select %p528, %s33, 1
        %s530 = smul.addr %s529, 8
        %s531 = scalar_lea.vmem %s9, %s530
        %p532 = pneg %p275
        %p533 = pneg %p272
        %p534 = pneg %p296
        %p535 = pneg %p293
        %p536 = pneg %p317
        %p537 = pneg %p314
        %p538 = pneg %p338
        %p539 = pneg %p335
        %p540 = pneg %p359
        %p541 = pneg %p356
        %p542 = pneg %p385
        %p543 = pneg %p382
        %s544 = sand.u32 %s372, 1
        %s545 = scalar_lea.sflag [#allocation4], %s544
        %s546 = sand.u32 %s372, 1
        %s547 = smul.addr %s546, 2
        %s548 = scalar_lea.vmem [#allocation3], %s547
        %s549 = smul.u32 2, %s32
        %p550 = scmp.lt.s32.totalorder %s549, 3
        %s551 = scalar_select %p550, %s549, 3
        %s552 = smul.addr %s551, 2
        %s553 = smul.addr %s552, 4
        %s554 = scalar_lea.vmem %s0, %s553
        %s555 = smul.u32 2, %s32
        %p556 = scmp.lt.s32.totalorder %s33, 1
        %s557 = scalar_select %p556, %s33, 1
        %s558 = smul.addr %s557, 4
        %s559 = smul.addr %s558, 4
        %s560 = scalar_lea.vmem %s5, %s559
        %p561 = scmp.lt.s32.totalorder %s33, 1
        %s562 = scalar_select %p561, %s33, 1
        %s563 = smul.addr %s562, 4
        %s564 = smul.addr %s563, 4
        %s565 = scalar_lea.vmem %s6, %s564
        %p566 = scmp.lt.s32.totalorder %s33, 1
        %s567 = scalar_select %p566, %s33, 1
        %s568 = smul.addr %s567, 4
        %s569 = smul.addr %s568, 4
        %s570 = scalar_lea.vmem %s7, %s569
        %p571 = scmp.lt.s32.totalorder %s33, 1
        %s572 = scalar_select %p571, %s33, 1
        %s573 = smul.addr %s572, 16
        %s574 = smul.addr %s573, 4
        %s575 = scalar_lea.vmem %s8, %s574
        %p576 = scmp.lt.s32.totalorder %s33, 1
        %s577 = scalar_select %p576, %s33, 1
        %s578 = smul.addr %s577, 8
        %s579 = scalar_lea.vmem %s9, %s578
        %p581 = scmp.eq.s32.totalorder %s33, 0
        // Predicated region
        $region77: #{vit_forward.1} parent=75 // pred_check
          %p582 = pneg %p581
        $region78: #{vit_forward.1} parent=75 // pred_check_branch
          %584 = sbr.rel (%p582) target = $region80
        $region79: #{vit_forward.1} parent=75 // pred_region
          %v585 = vld [vmem:[%s554] sm:$0xf]
          %v586 = vld [vmem:[%s554 + $0x4] sm:$0xf]
          %v587 = vld [vmem:[%s554 + $0x8] sm:$0xf]
          %v588 = vld [vmem:[%s554 + $0xc] sm:$0xf]
          %v589 = vld [vmem:[%s1] sm:$0xf]
          %v590 = vld [vmem:[%s1 + $0x4] sm:$0xf]
          %v591 = vld [vmem:[%s1 + $0x8] sm:$0xf]
          %v592 = vld [vmem:[%s1 + $0xc] sm:$0xf]
          %v593 = vld [vmem:[%s1 + $0x10] sm:$0xf]
          %v594 = vld [vmem:[%s1 + $0x14] sm:$0xf]
          %v595 = vld [vmem:[%s1 + $0x18] sm:$0xf]
          %v596 = vld [vmem:[%s1 + $0x1c] sm:$0xf]
          %v601 = vunpack.c.l.b16 %v585
          %v602 = vunpack.c.l.b16 %v586
          %v603 = vunpack.c.l.b16 %v587
          %v604 = vunpack.c.l.b16 %v588
          %v605 = vpack.c.b16 %v602, %v601
          %v606 = vpack.c.b16 %v604, %v603
          %v615 = vunpack.c.l.b16 %v589
          %v616 = vunpack.c.l.b16 %v590
          %v617 = vunpack.c.l.b16 %v591
          %v618 = vunpack.c.l.b16 %v592
          %v619 = vunpack.c.l.b16 %v593
          %v620 = vunpack.c.l.b16 %v594
          %v621 = vunpack.c.l.b16 %v595
          %v622 = vunpack.c.l.b16 %v596
          %v623 = vpack.c.b16 %v616, %v615
          %v624 = vpack.c.b16 %v618, %v617
          %v625 = vpack.c.b16 %v620, %v619
          %v626 = vpack.c.b16 %v622, %v621
          %vm631 = vcmask 523264
          %v633 = vsel %vm631, %v605, 0
          %v636 = vsel %vm631, %v606, 0
          %638 = vmatpush.bf16.msra.mxu0 0
          %639 = vmatpush.bf16.msra.mxu0 0
          %640 = vmatpush.bf16.msra.mxu0 0
          %641 = vmatpush.bf16.msra.mxu0 0
          %642 = vmatpush.bf16.msra.mxu0 %v626
          %643 = vmatpush.bf16.msra.mxu0 %v625
          %644 = vmatpush.bf16.msra.mxu0 %v624
          %645 = vmatpush.bf16.msra.mxu0 %v623
          %646 = vmatmul.bf16.gmra.mxu0 %v633
          %v647 = vpop.f32.mrf.mxu0
          %v648 = vadd.f32 0.0, %v647
          %v649 = vpop.f32.mrf.mxu0
          %v650 = vadd.f32 0.0, %v649
          %651 = vmatmul.bf16.gmra.mxu0 %v636
          %v652 = vpop.f32.mrf.mxu0
          %v653 = vadd.f32 0.0, %v652
          %v654 = vpop.f32.mrf.mxu0
          %v655 = vadd.f32 0.0, %v654
          %656 = vdwg.mxu0
          %v657 = vld [vmem:[%s2] sm:$0x1]
          %v659 = vperm.slane %v657, 0
          %v661 = vadd.f32 %v648, %v659
          %v662 = vadd.f32 %v650, %v659
          %v663 = vadd.f32 %v653, %v659
          %v664 = vadd.f32 %v655, %v659
          %v665 = vld [vmem:[%s3] sm:$0xff]
          %v666 = vld [vmem:[%s3 + $0x8] sm:$0xff]
          %v667 = vadd.f32 %v661, %v665
          %v668 = vadd.f32 %v662, %v666
          %v669 = vadd.f32 %v663, %v665
          %v670 = vadd.f32 %v664, %v666
          %vm671 = vcmask 261120
          %672 = vst.msk [vmem:[#allocation2] sm:$0xff] %vm671, %v667
          %673 = vst.msk [vmem:[#allocation2 + $0x8] sm:$0xff] %vm671, %v668
          %674 = vst.msk [vmem:[#allocation2 + $0x18] sm:$0xff] %vm671, %v669
          %675 = vst.msk [vmem:[#allocation2 + $0x20] sm:$0xff] %vm671, %v670
          %v676 = vld [vmem:[%s4] sm:$0xff]
          %677 = vst.msk [vmem:[#allocation2 + $0x10] sm:$0xff] %vm671, %v676
          %678 = vst.msk [vmem:[#allocation2 + $0x28] sm:$0xff] %vm671, %v676
        $region80: #{vit_forward.1} parent=75 // pred_fallthru
          _
        %v679 = vld [vmem:[#allocation2] sm:$0xff]
        %v680 = vld [vmem:[#allocation2 + $0x8] sm:$0xff]
        %v681 = vld [vmem:[#allocation2 + $0x10] sm:$0xff]
        %v682 = vld [vmem:[#allocation2 + $0x18] sm:$0xff]
        %v683 = vld [vmem:[#allocation2 + $0x20] sm:$0xff]
        %v684 = vld [vmem:[#allocation2 + $0x28] sm:$0xff]
        %v685 = vld [vmem:[%s579] sm:$0xff]
        %vm686 = vcmask 261120
        %v687 = vsel %vm686, %v679, 0.0
        %688 = vadd.xlane.f32.xlu0 %v687
        %v689 = vpop.xlane.xlu0 %688
        %v690 = vsel %vm686, %v680, 0.0
        %691 = vadd.xlane.f32.xlu0 %v690
        %v692 = vpop.xlane.xlu0 %691
        %v693 = vsel %vm686, %v681, 0.0
        %694 = vadd.xlane.f32.xlu0 %v693
        %v695 = vpop.xlane.xlu0 %694
        %v696 = vsel %vm686, %v682, 0.0
        %697 = vadd.xlane.f32.xlu0 %v696
        %v698 = vpop.xlane.xlu0 %697
        %v699 = vsel %vm686, %v683, 0.0
        %700 = vadd.xlane.f32.xlu0 %v699
        %v701 = vpop.xlane.xlu0 %700
        %v702 = vsel %vm686, %v684, 0.0
        %703 = vadd.xlane.f32.xlu0 %v702
        %v704 = vpop.xlane.xlu0 %703
        %v705 = vrcp.pop 32.0
        %v706 = vmul.f32 32.0, %v705
        %v707 = vsub.f32 1.0, %v706
        %v708 = vmul.f32 %v705, %v707
        %v709 = vadd.f32 %v705, %v708
        %vm710 = vweird.f32 %v705
        %v711 = vsel %vm710, %v705, %v709
        %v712 = vmul.f32 %v689, %v711
        %v713 = vmul.f32 %v692, %v711
        %v714 = vmul.f32 %v695, %v711
        %v715 = vmul.f32 %v698, %v711
        %v716 = vmul.f32 %v701, %v711
        %v717 = vmul.f32 %v704, %v711
        %v718 = vsub.f32 %v679, %v712
        %v719 = vsub.f32 %v680, %v713
        %v720 = vsub.f32 %v681, %v714
        %v721 = vsub.f32 %v682, %v715
        %v722 = vsub.f32 %v683, %v716
        %v723 = vsub.f32 %v684, %v717
        %v724 = vmul.f32 %v718, %v718
        %v725 = vmul.f32 %v719, %v719
        %v726 = vmul.f32 %v720, %v720
        %v727 = vmul.f32 %v721, %v721
        %v728 = vmul.f32 %v722, %v722
        %v729 = vmul.f32 %v723, %v723
        %v730 = vsel %vm686, %v724, 0.0
        %731 = vadd.xlane.f32.xlu0 %v730
        %v732 = vpop.xlane.xlu0 %731
        %v733 = vsel %vm686, %v725, 0.0
        %734 = vadd.xlane.f32.xlu0 %v733
        %v735 = vpop.xlane.xlu0 %734
        %v736 = vsel %vm686, %v726, 0.0
        %737 = vadd.xlane.f32.xlu0 %v736
        %v738 = vpop.xlane.xlu0 %737
        %v739 = vsel %vm686, %v727, 0.0
        %740 = vadd.xlane.f32.xlu0 %v739
        %v741 = vpop.xlane.xlu0 %740
        %v742 = vsel %vm686, %v728, 0.0
        %743 = vadd.xlane.f32.xlu0 %v742
        %v744 = vpop.xlane.xlu0 %743
        %v745 = vsel %vm686, %v729, 0.0
        %746 = vadd.xlane.f32.xlu0 %v745
        %v747 = vpop.xlane.xlu0 %746
        %v748 = vmul.f32 %v732, %v711
        %v749 = vmul.f32 %v735, %v711
        %v750 = vmul.f32 %v738, %v711
        %v751 = vmul.f32 %v741, %v711
        %v752 = vmul.f32 %v744, %v711
        %v753 = vmul.f32 %v747, %v711
        %v754 = vadd.f32 %v748, 1e-05
        %v755 = vadd.f32 %v749, 1e-05
        %v756 = vadd.f32 %v750, 1e-05
        %v757 = vadd.f32 %v751, 1e-05
        %v758 = vadd.f32 %v752, 1e-05
        %v759 = vadd.f32 %v753, 1e-05
        %v760 = vrsqrt.pop %v754
        %v761 = vmul.f32 %v760, %v754
        %v762 = vmul.f32 %v761, %v760
        %v763 = vmul.f32 0.5, %v762
        %v764 = vsub.f32 1.5, %v763
        %v765 = vmul.f32 %v760, %v764
        %vm766 = vweird.f32 %v754
        %vm767 = vweird.f32 %v760
        %vm768 = vmor %vm766, %vm767
        %v769 = vsel %vm768, %v760, %v765
        %v770 = vrsqrt.pop %v755
        %v771 = vmul.f32 %v770, %v755
        %v772 = vmul.f32 %v771, %v770
        %v773 = vmul.f32 0.5, %v772
        %v774 = vsub.f32 1.5, %v773
        %v775 = vmul.f32 %v770, %v774
        %vm776 = vweird.f32 %v755
        %vm777 = vweird.f32 %v770
        %vm778 = vmor %vm776, %vm777
        %v779 = vsel %vm778, %v770, %v775
        %v780 = vrsqrt.pop %v756
        %v781 = vmul.f32 %v780, %v756
        %v782 = vmul.f32 %v781, %v780
        %v783 = vmul.f32 0.5, %v782
        %v784 = vsub.f32 1.5, %v783
        %v785 = vmul.f32 %v780, %v784
        %vm786 = vweird.f32 %v756
        %vm787 = vweird.f32 %v780
        %vm788 = vmor %vm786, %vm787
        %v789 = vsel %vm788, %v780, %v785
        %v790 = vrsqrt.pop %v757
        %v791 = vmul.f32 %v790, %v757
        %v792 = vmul.f32 %v791, %v790
        %v793 = vmul.f32 0.5, %v792
        %v794 = vsub.f32 1.5, %v793
        %v795 = vmul.f32 %v790, %v794
        %vm796 = vweird.f32 %v757
        %vm797 = vweird.f32 %v790
        %vm798 = vmor %vm796, %vm797
        %v799 = vsel %vm798, %v790, %v795
        %v800 = vrsqrt.pop %v758
        %v801 = vmul.f32 %v800, %v758
        %v802 = vmul.f32 %v801, %v800
        %v803 = vmul.f32 0.5, %v802
        %v804 = vsub.f32 1.5, %v803
        %v805 = vmul.f32 %v800, %v804
        %vm806 = vweird.f32 %v758
        %vm807 = vweird.f32 %v800
        %vm808 = vmor %vm806, %vm807
        %v809 = vsel %vm808, %v800, %v805
        %v810 = vrsqrt.pop %v759
        %v811 = vmul.f32 %v810, %v759
        %v812 = vmul.f32 %v811, %v810
        %v813 = vmul.f32 0.5, %v812
        %v814 = vsub.f32 1.5, %v813
        %v815 = vmul.f32 %v810, %v814
        %vm816 = vweird.f32 %v759
        %vm817 = vweird.f32 %v810
        %vm818 = vmor %vm816, %vm817
        %v819 = vsel %vm818, %v810, %v815
        %v820 = vmul.f32 %v718, %v769
        %v821 = vmul.f32 %v719, %v779
        %v822 = vmul.f32 %v720, %v789
        %v823 = vmul.f32 %v721, %v799
        %v824 = vmul.f32 %v722, %v809
        %v825 = vmul.f32 %v723, %v819
        %v826 = vperm.slane %v685, 0
        %v827 = vmul.f32 %v820, %v826
        %v828 = vmul.f32 %v821, %v826
        %v829 = vmul.f32 %v822, %v826
        %v830 = vmul.f32 %v823, %v826
        %v831 = vmul.f32 %v824, %v826
        %v832 = vmul.f32 %v825, %v826
        %v833 = vperm.slane %v685, 1
        %v834 = vadd.f32 %v827, %v833
        %v835 = vadd.f32 %v828, %v833
        %v836 = vadd.f32 %v829, %v833
        %v837 = vadd.f32 %v830, %v833
        %v838 = vadd.f32 %v831, %v833
        %v839 = vadd.f32 %v832, %v833
        %v840 = vpack.c.bf16 %v835, %v834
        %v841 = vpack.c.bf16 %v837, %v836
        %v842 = vpack.c.bf16 %v839, %v838
        %v843 = vld [vmem:[%s560] sm:$0xf]
        %v844 = vld [vmem:[%s560 + $0x4] sm:$0xf]
        %v845 = vld [vmem:[%s560 + $0x8] sm:$0xf]
        %v846 = vld [vmem:[%s560 + $0xc] sm:$0xf]
        %v847 = vperm.slane %v685, 6
        %v852 = vunpack.c.l.b16 %v843
        %v853 = vunpack.c.l.b16 %v844
        %v854 = vunpack.c.l.b16 %v845
        %v855 = vunpack.c.l.b16 %v846
        %v856 = vpack.c.b16 %v853, %v852
        %v857 = vpack.c.b16 %v855, %v854
        %v861 = vsel %vm686, %v840, 0
        %v864 = vsel %vm686, %v841, 0
        %v867 = vsel %vm686, %v842, 0
        %869 = vmatpush.bf16.msra.mxu0 0
        %870 = vmatpush.bf16.msra.mxu0 0
        %871 = vmatpush.bf16.msra.mxu0 0
        %872 = vmatpush.bf16.msra.mxu0 0
        %873 = vmatpush.bf16.msra.mxu0 0
        %874 = vmatpush.bf16.msra.mxu0 0
        %875 = vmatpush.bf16.msra.mxu0 %v857
        %876 = vmatpush.bf16.msra.mxu0 %v856
        %877 = vmatmul.bf16.gmra.mxu0 %v861
        %v878 = vpop.f32.mrf.mxu0
        %v879 = vadd.f32 %v847, %v878
        %v880 = vpop.f32.mrf.mxu0
        %v881 = vadd.f32 %v847, %v880
        %882 = vmatmul.bf16.gmra.mxu0 %v864
        %v883 = vpop.f32.mrf.mxu0
        %v884 = vadd.f32 %v847, %v883
        %v885 = vpop.f32.mrf.mxu0
        %v886 = vadd.f32 %v847, %v885
        %887 = vmatmul.bf16.gmra.mxu0 %v867
        %v888 = vpop.f32.mrf.mxu0
        %v889 = vadd.f32 %v847, %v888
        %v890 = vpop.f32.mrf.mxu0
        %v891 = vadd.f32 %v847, %v890
        %892 = vdwg.mxu0
        %v893 = vpack.c.bf16 %v879, %v879
        %v894 = vpack.c.bf16 %v881, %v881
        %v895 = vpack.c.bf16 %v884, %v884
        %v896 = vpack.c.bf16 %v886, %v886
        %v897 = vpack.c.bf16 %v889, %v889
        %v898 = vpack.c.bf16 %v891, %v891
        %v902 = vunpack.c.l.b16 %v893
        %v903 = vunpack.c.l.b16 %v894
        %v904 = vunpack.c.l.b16 %v895
        %v905 = vpack.c.b16 %v903, %v902
        %v906 = vpack.c.b16 %v904, %v904
        %907 = vrot.lane.b32.xlu0 %v905, 96
        %v908 = vpop.permute.xlu0 %907
        %909 = vrot.lane.b32.xlu0 %v906, 96
        %v910 = vpop.permute.xlu0 %909
        %vm911 = vcmask 64512
        %v913 = vsel %vm911, %v905, 0
        %v916 = vsel %vm911, %v906, 0
        %v919 = vsel %vm911, %v908, 0
        %v922 = vsel %vm911, %v910, 0
        %924 = vmatpush.bf16.xpose.msra.mxu0 0
        %925 = vmatpush.bf16.xpose.msra.mxu0 0
        %926 = vmatpush.bf16.xpose.msra.mxu0 0
        %927 = vmatpush.bf16.xpose.msra.mxu0 0
        %928 = vmatpush.bf16.xpose.msra.mxu0 0
        %929 = vmatpush.bf16.xpose.msra.mxu0 0
        %930 = vmatpush.bf16.xpose.msra.mxu0 %v922
        %931 = vmatpush.bf16.xpose.msra.mxu0 %v919
        %932 = vmatmul.bf16.gmra.mxu0 %v913
        %v933 = vpop.f32.mrf.mxu0
        %v934 = vadd.f32 0.0, %v933
        %v935 = vpop.f32.mrf.mxu0
        %v936 = vadd.f32 0.0, %v935
        %937 = vmatmul.bf16.gmra.mxu0 %v916
        %v938 = vpop.f32.mrf.mxu0
        %v939 = vadd.f32 0.0, %v938
        %v940 = vpop.f32.mrf.mxu0
        %941 = vdwg.mxu0
        %v945 = vunpack.c.l.b16 %v896
        %v946 = vunpack.c.l.b16 %v897
        %v947 = vunpack.c.l.b16 %v898
        %v948 = vpack.c.b16 %v946, %v945
        %v949 = vpack.c.b16 %v947, %v947
        %950 = vrot.lane.b32.xlu0 %v948, 96
        %v951 = vpop.permute.xlu0 %950
        %952 = vrot.lane.b32.xlu0 %v949, 96
        %v953 = vpop.permute.xlu0 %952
        %v955 = vsel %vm911, %v948, 0
        %v958 = vsel %vm911, %v949, 0
        %v961 = vsel %vm911, %v951, 0
        %v964 = vsel %vm911, %v953, 0
        %966 = vmatpush.bf16.xpose.msra.mxu0 0
        %967 = vmatpush.bf16.xpose.msra.mxu0 0
        %968 = vmatpush.bf16.xpose.msra.mxu0 0
        %969 = vmatpush.bf16.xpose.msra.mxu0 0
        %970 = vmatpush.bf16.xpose.msra.mxu0 0
        %971 = vmatpush.bf16.xpose.msra.mxu0 0
        %972 = vmatpush.bf16.xpose.msra.mxu0 %v964
        %973 = vmatpush.bf16.xpose.msra.mxu0 %v961
        %974 = vmatmul.bf16.gmra.mxu0 %v955
        %v975 = vpop.f32.mrf.mxu0
        %v976 = vadd.f32 0.0, %v975
        %v977 = vpop.f32.mrf.mxu0
        %v978 = vadd.f32 0.0, %v977
        %979 = vmatmul.bf16.gmra.mxu0 %v958
        %v980 = vpop.f32.mrf.mxu0
        %v981 = vadd.f32 0.0, %v980
        %v982 = vpop.f32.mrf.mxu0
        %983 = vdwg.mxu0
        %v984 = vlaneseq
        %v985 = vand.u32 %v984, 127
        %vm986 = vcmp.lt.s32.totalorder %v985, 17
        %v987 = vsel %vm986, %v934, -1e+30
        %v988 = vsel %vm986, %v936, -1e+30
        %v989 = vsel %vm986, %v939, -1e+30
        %v990 = vsel %vm986, %v976, -1e+30
        %v991 = vsel %vm986, %v978, -1e+30
        %v992 = vsel %vm986, %v981, -1e+30
        %vm993 = vcmask 195584
        %v994 = vsel %vm993, %v987, -inf
        %995 = vmax.xlane.f32.xlu0 %v994
        %v996 = vpop.xlane.xlu0 %995
        %v997 = vsel %vm993, %v988, -inf
        %998 = vmax.xlane.f32.xlu0 %v997
        %v999 = vpop.xlane.xlu0 %998
        %v1000 = vsel %vm993, %v989, -inf
        %1001 = vmax.xlane.f32.xlu0 %v1000
        %v1002 = vpop.xlane.xlu0 %1001
        %v1003 = vsel %vm993, %v990, -inf
        %1004 = vmax.xlane.f32.xlu0 %v1003
        %v1005 = vpop.xlane.xlu0 %1004
        %v1006 = vsel %vm993, %v991, -inf
        %1007 = vmax.xlane.f32.xlu0 %v1006
        %v1008 = vpop.xlane.xlu0 %1007
        %v1009 = vsel %vm993, %v992, -inf
        %1010 = vmax.xlane.f32.xlu0 %v1009
        %v1011 = vpop.xlane.xlu0 %1010
        %v1012 = vsub.f32 %v987, %v996
        %v1013 = vsub.f32 %v988, %v999
        %v1014 = vsub.f32 %v989, %v1002
        %v1015 = vsub.f32 %v990, %v1005
        %v1016 = vsub.f32 %v991, %v1008
        %v1017 = vsub.f32 %v992, %v1011
        %v1018 = vmul.f32 %v1012, 1.442695
        %v1019 = vpow.pop %v1018
        %v1020 = vmul.f32 %v1013, 1.442695
        %v1021 = vpow.pop %v1020
        %v1022 = vmul.f32 %v1014, 1.442695
        %v1023 = vpow.pop %v1022
        %v1024 = vmul.f32 %v1015, 1.442695
        %v1025 = vpow.pop %v1024
        %v1026 = vmul.f32 %v1016, 1.442695
        %v1027 = vpow.pop %v1026
        %v1028 = vmul.f32 %v1017, 1.442695
        %v1029 = vpow.pop %v1028
        %v1030 = vsel %vm993, %v1019, 0.0
        %1031 = vadd.xlane.f32.xlu0 %v1030
        %v1032 = vpop.xlane.xlu0 %1031
        %v1033 = vsel %vm993, %v1021, 0.0
        %1034 = vadd.xlane.f32.xlu0 %v1033
        %v1035 = vpop.xlane.xlu0 %1034
        %v1036 = vsel %vm993, %v1023, 0.0
        %1037 = vadd.xlane.f32.xlu0 %v1036
        %v1038 = vpop.xlane.xlu0 %1037
        %v1039 = vsel %vm993, %v1025, 0.0
        %1040 = vadd.xlane.f32.xlu0 %v1039
        %v1041 = vpop.xlane.xlu0 %1040
        %v1042 = vsel %vm993, %v1027, 0.0
        %1043 = vadd.xlane.f32.xlu0 %v1042
        %v1044 = vpop.xlane.xlu0 %1043
        %v1045 = vsel %vm993, %v1029, 0.0
        %1046 = vadd.xlane.f32.xlu0 %v1045
        %v1047 = vpop.xlane.xlu0 %1046
        %v1048 = vrcp.pop %v1032
        %v1049 = vmul.f32 %v1032, %v1048
        %v1050 = vsub.f32 1.0, %v1049
        %v1051 = vmul.f32 %v1048, %v1050
        %v1052 = vadd.f32 %v1048, %v1051
        %vm1053 = vweird.f32 %v1032
        %vm1054 = vweird.f32 %v1048
        %vm1055 = vmor %vm1053, %vm1054
        %v1056 = vsel %vm1055, %v1048, %v1052
        %v1057 = vand.u32 2147483647, %v1032
        %vm1058 = vcmp.eq.f32.partialorder %v1057, 8.507059e+37
        %v1059 = vand.u32 %v1032, 2147483648
        %v1060 = vor.u32 1.1754944e-38, %v1059
        %v1061 = vsel %vm1058, %v1060, %v1056
        %v1062 = vmul.f32 %v1019, %v1061
        %v1063 = vrcp.pop %v1035
        %v1064 = vmul.f32 %v1035, %v1063
        %v1065 = vsub.f32 1.0, %v1064
        %v1066 = vmul.f32 %v1063, %v1065
        %v1067 = vadd.f32 %v1063, %v1066
        %vm1068 = vweird.f32 %v1035
        %vm1069 = vweird.f32 %v1063
        %vm1070 = vmor %vm1068, %vm1069
        %v1071 = vsel %vm1070, %v1063, %v1067
        %v1072 = vand.u32 2147483647, %v1035
        %vm1073 = vcmp.eq.f32.partialorder %v1072, 8.507059e+37
        %v1074 = vand.u32 %v1035, 2147483648
        %v1075 = vor.u32 1.1754944e-38, %v1074
        %v1076 = vsel %vm1073, %v1075, %v1071
        %v1077 = vmul.f32 %v1021, %v1076
        %v1078 = vrcp.pop %v1038
        %v1079 = vmul.f32 %v1038, %v1078
        %v1080 = vsub.f32 1.0, %v1079
        %v1081 = vmul.f32 %v1078, %v1080
        %v1082 = vadd.f32 %v1078, %v1081
        %vm1083 = vweird.f32 %v1038
        %vm1084 = vweird.f32 %v1078
        %vm1085 = vmor %vm1083, %vm1084
        %v1086 = vsel %vm1085, %v1078, %v1082
        %v1087 = vand.u32 2147483647, %v1038
        %vm1088 = vcmp.eq.f32.partialorder %v1087, 8.507059e+37
        %v1089 = vand.u32 %v1038, 2147483648
        %v1090 = vor.u32 1.1754944e-38, %v1089
        %v1091 = vsel %vm1088, %v1090, %v1086
        %v1092 = vmul.f32 %v1023, %v1091
        %v1093 = vrcp.pop %v1041
        %v1094 = vmul.f32 %v1041, %v1093
        %v1095 = vsub.f32 1.0, %v1094
        %v1096 = vmul.f32 %v1093, %v1095
        %v1097 = vadd.f32 %v1093, %v1096
        %vm1098 = vweird.f32 %v1041
        %vm1099 = vweird.f32 %v1093
        %vm1100 = vmor %vm1098, %vm1099
        %v1101 = vsel %vm1100, %v1093, %v1097
        %v1102 = vand.u32 2147483647, %v1041
        %vm1103 = vcmp.eq.f32.partialorder %v1102, 8.507059e+37
        %v1104 = vand.u32 %v1041, 2147483648
        %v1105 = vor.u32 1.1754944e-38, %v1104
        %v1106 = vsel %vm1103, %v1105, %v1101
        %v1107 = vmul.f32 %v1025, %v1106
        %v1108 = vrcp.pop %v1044
        %v1109 = vmul.f32 %v1044, %v1108
        %v1110 = vsub.f32 1.0, %v1109
        %v1111 = vmul.f32 %v1108, %v1110
        %v1112 = vadd.f32 %v1108, %v1111
        %vm1113 = vweird.f32 %v1044
        %vm1114 = vweird.f32 %v1108
        %vm1115 = vmor %vm1113, %vm1114
        %v1116 = vsel %vm1115, %v1108, %v1112
        %v1117 = vand.u32 2147483647, %v1044
        %vm1118 = vcmp.eq.f32.partialorder %v1117, 8.507059e+37
        %v1119 = vand.u32 %v1044, 2147483648
        %v1120 = vor.u32 1.1754944e-38, %v1119
        %v1121 = vsel %vm1118, %v1120, %v1116
        %v1122 = vmul.f32 %v1027, %v1121
        %v1123 = vrcp.pop %v1047
        %v1124 = vmul.f32 %v1047, %v1123
        %v1125 = vsub.f32 1.0, %v1124
        %v1126 = vmul.f32 %v1123, %v1125
        %v1127 = vadd.f32 %v1123, %v1126
        %vm1128 = vweird.f32 %v1047
        %vm1129 = vweird.f32 %v1123
        %vm1130 = vmor %vm1128, %vm1129
        %v1131 = vsel %vm1130, %v1123, %v1127
        %v1132 = vand.u32 2147483647, %v1047
        %vm1133 = vcmp.eq.f32.partialorder %v1132, 8.507059e+37
        %v1134 = vand.u32 %v1047, 2147483648
        %v1135 = vor.u32 1.1754944e-38, %v1134
        %v1136 = vsel %vm1133, %v1135, %v1131
        %v1137 = vmul.f32 %v1029, %v1136
        %v1138 = vpack.c.bf16 %v1062, %v1062
        %v1139 = vpack.c.bf16 %v1077, %v1077
        %v1140 = vpack.c.bf16 %v1092, %v1092
        %v1141 = vpack.c.bf16 %v1107, %v1107
        %v1142 = vpack.c.bf16 %v1122, %v1122
        %v1143 = vpack.c.bf16 %v1137, %v1137
        %v1147 = vunpack.c.l.b16 %v1138
        %v1148 = vunpack.c.l.b16 %v1139
        %v1149 = vunpack.c.l.b16 %v1140
        %v1150 = vpack.c.b16 %v1148, %v1147
        %v1151 = vpack.c.b16 %v1149, %v1149
        %1152 = vrot.lane.b32.xlu0 %v905, 64
        %v1153 = vpop.permute.xlu0 %1152
        %1154 = vrot.lane.b32.xlu0 %v906, 64
        %v1155 = vpop.permute.xlu0 %1154
        %v1158 = vsel %vm993, %v1150, 0
        %v1161 = vsel %vm993, %v1151, 0
        %vm1163 = vcmask 1043456
        %v1165 = vsel %vm1163, %v1155, 0
        %1167 = vmatpush.bf16.msra.mxu0 0
        %1168 = vmatpush.bf16.msra.mxu0 0
        %1169 = vmatpush.bf16.msra.mxu0 0
        %1170 = vmatpush.bf16.msra.mxu0 0
        %1171 = vmatpush.bf16.msra.mxu0 0
        %1172 = vmatpush.bf16.msra.mxu0 0
        %1173 = vmatpush.bf16.msra.mxu0 %v1165
        %1174 = vmatpush.bf16.msra.mxu0 %v1153
        %1175 = vmatmul.bf16.gmra.mxu0 %v1158
        %v1176 = vpop.f32.mrf.mxu0
        %v1177 = vadd.f32 0.0, %v1176
        %v1178 = vpop.f32.mrf.mxu0
        %v1179 = vadd.f32 0.0, %v1178
        %1180 = vmatmul.bf16.gmra.mxu0 %v1161
        %v1181 = vpop.f32.mrf.mxu0
        %v1182 = vadd.f32 0.0, %v1181
        %v1183 = vpop.f32.mrf.mxu0
        %1184 = vdwg.mxu0
        %v1188 = vunpack.c.l.b16 %v1141
        %v1189 = vunpack.c.l.b16 %v1142
        %v1190 = vunpack.c.l.b16 %v1143
        %v1191 = vpack.c.b16 %v1189, %v1188
        %v1192 = vpack.c.b16 %v1190, %v1190
        %1193 = vrot.lane.b32.xlu0 %v948, 64
        %v1194 = vpop.permute.xlu0 %1193
        %1195 = vrot.lane.b32.xlu0 %v949, 64
        %v1196 = vpop.permute.xlu0 %1195
        %v1199 = vsel %vm993, %v1191, 0
        %v1202 = vsel %vm993, %v1192, 0
        %v1205 = vsel %vm1163, %v1196, 0
        %1207 = vmatpush.bf16.msra.mxu0 0
        %1208 = vmatpush.bf16.msra.mxu0 0
        %1209 = vmatpush.bf16.msra.mxu0 0
        %1210 = vmatpush.bf16.msra.mxu0 0
        %1211 = vmatpush.bf16.msra.mxu0 0
        %1212 = vmatpush.bf16.msra.mxu0 0
        %1213 = vmatpush.bf16.msra.mxu0 %v1205
        %1214 = vmatpush.bf16.msra.mxu0 %v1194
        %1215 = vmatmul.bf16.gmra.mxu0 %v1199
        %v1216 = vpop.f32.mrf.mxu0
        %v1217 = vadd.f32 0.0, %v1216
        %v1218 = vpop.f32.mrf.mxu0
        %v1219 = vadd.f32 0.0, %v1218
        %1220 = vmatmul.bf16.gmra.mxu0 %v1202
        %v1221 = vpop.f32.mrf.mxu0
        %v1222 = vadd.f32 0.0, %v1221
        %v1223 = vpop.f32.mrf.mxu0
        %1224 = vdwg.mxu0
        %1225 = vrot.lane.b32.xlu0 %v905, 120
        %v1226 = vpop.permute.xlu0 %1225
        %1227 = vrot.lane.b32.xlu0 %v906, 120
        %v1228 = vpop.permute.xlu0 %1227
        %1229 = vrot.lane.b32.xlu0 %v905, 88
        %v1230 = vpop.permute.xlu0 %1229
        %1231 = vrot.lane.b32.xlu0 %v906, 88
        %v1232 = vpop.permute.xlu0 %1231
        %v1234 = vsel %vm911, %v1226, 0
        %v1237 = vsel %vm911, %v1228, 0
        %v1240 = vsel %vm911, %v1230, 0
        %v1243 = vsel %vm911, %v1232, 0
        %1245 = vmatpush.bf16.xpose.msra.mxu0 0
        %1246 = vmatpush.bf16.xpose.msra.mxu0 0
        %1247 = vmatpush.bf16.xpose.msra.mxu0 0
        %1248 = vmatpush.bf16.xpose.msra.mxu0 0
        %1249 = vmatpush.bf16.xpose.msra.mxu0 0
        %1250 = vmatpush.bf16.xpose.msra.mxu0 0
        %1251 = vmatpush.bf16.xpose.msra.mxu0 %v1243
        %1252 = vmatpush.bf16.xpose.msra.mxu0 %v1240
        %1253 = vmatmul.bf16.gmra.mxu0 %v1234
        %v1254 = vpop.f32.mrf.mxu0
        %v1255 = vadd.f32 0.0, %v1254
        %v1256 = vpop.f32.mrf.mxu0
        %v1257 = vadd.f32 0.0, %v1256
        %1258 = vmatmul.bf16.gmra.mxu0 %v1237
        %v1259 = vpop.f32.mrf.mxu0
        %v1260 = vadd.f32 0.0, %v1259
        %v1261 = vpop.f32.mrf.mxu0
        %1262 = vdwg.mxu0
        %1263 = vrot.lane.b32.xlu0 %v948, 120
        %v1264 = vpop.permute.xlu0 %1263
        %1265 = vrot.lane.b32.xlu0 %v949, 120
        %v1266 = vpop.permute.xlu0 %1265
        %1267 = vrot.lane.b32.xlu0 %v948, 88
        %v1268 = vpop.permute.xlu0 %1267
        %1269 = vrot.lane.b32.xlu0 %v949, 88
        %v1270 = vpop.permute.xlu0 %1269
        %v1272 = vsel %vm911, %v1264, 0
        %v1275 = vsel %vm911, %v1266, 0
        %v1278 = vsel %vm911, %v1268, 0
        %v1281 = vsel %vm911, %v1270, 0
        %1283 = vmatpush.bf16.xpose.msra.mxu0 0
        %1284 = vmatpush.bf16.xpose.msra.mxu0 0
        %1285 = vmatpush.bf16.xpose.msra.mxu0 0
        %1286 = vmatpush.bf16.xpose.msra.mxu0 0
        %1287 = vmatpush.bf16.xpose.msra.mxu0 0
        %1288 = vmatpush.bf16.xpose.msra.mxu0 0
        %1289 = vmatpush.bf16.xpose.msra.mxu0 %v1281
        %1290 = vmatpush.bf16.xpose.msra.mxu0 %v1278
        %1291 = vmatmul.bf16.gmra.mxu0 %v1272
        %v1292 = vpop.f32.mrf.mxu0
        %v1293 = vadd.f32 0.0, %v1292
        %v1294 = vpop.f32.mrf.mxu0
        %v1295 = vadd.f32 0.0, %v1294
        %1296 = vmatmul.bf16.gmra.mxu0 %v1275
        %v1297 = vpop.f32.mrf.mxu0
        %v1298 = vadd.f32 0.0, %v1297
        %v1299 = vpop.f32.mrf.mxu0
        %1300 = vdwg.mxu0
        %v1301 = vsel %vm986, %v1255, -1e+30
        %v1302 = vsel %vm986, %v1257, -1e+30
        %v1303 = vsel %vm986, %v1260, -1e+30
        %v1304 = vsel %vm986, %v1293, -1e+30
        %v1305 = vsel %vm986, %v1295, -1e+30
        %v1306 = vsel %vm986, %v1298, -1e+30
        %v1307 = vsel %vm993, %v1301, -inf
        %1308 = vmax.xlane.f32.xlu0 %v1307
        %v1309 = vpop.xlane.xlu0 %1308
        %v1310 = vsel %vm993, %v1302, -inf
        %1311 = vmax.xlane.f32.xlu0 %v1310
        %v1312 = vpop.xlane.xlu0 %1311
        %v1313 = vsel %vm993, %v1303, -inf
        %1314 = vmax.xlane.f32.xlu0 %v1313
        %v1315 = vpop.xlane.xlu0 %1314
        %v1316 = vsel %vm993, %v1304, -inf
        %1317 = vmax.xlane.f32.xlu0 %v1316
        %v1318 = vpop.xlane.xlu0 %1317
        %v1319 = vsel %vm993, %v1305, -inf
        %1320 = vmax.xlane.f32.xlu0 %v1319
        %v1321 = vpop.xlane.xlu0 %1320
        %v1322 = vsel %vm993, %v1306, -inf
        %1323 = vmax.xlane.f32.xlu0 %v1322
        %v1324 = vpop.xlane.xlu0 %1323
        %v1325 = vsub.f32 %v1301, %v1309
        %v1326 = vsub.f32 %v1302, %v1312
        %v1327 = vsub.f32 %v1303, %v1315
        %v1328 = vsub.f32 %v1304, %v1318
        %v1329 = vsub.f32 %v1305, %v1321
        %v1330 = vsub.f32 %v1306, %v1324
        %v1331 = vmul.f32 %v1325, 1.442695
        %v1332 = vpow.pop %v1331
        %v1333 = vmul.f32 %v1326, 1.442695
        %v1334 = vpow.pop %v1333
        %v1335 = vmul.f32 %v1327, 1.442695
        %v1336 = vpow.pop %v1335
        %v1337 = vmul.f32 %v1328, 1.442695
        %v1338 = vpow.pop %v1337
        %v1339 = vmul.f32 %v1329, 1.442695
        %v1340 = vpow.pop %v1339
        %v1341 = vmul.f32 %v1330, 1.442695
        %v1342 = vpow.pop %v1341
        %v1343 = vsel %vm993, %v1332, 0.0
        %1344 = vadd.xlane.f32.xlu0 %v1343
        %v1345 = vpop.xlane.xlu0 %1344
        %v1346 = vsel %vm993, %v1334, 0.0
        %1347 = vadd.xlane.f32.xlu0 %v1346
        %v1348 = vpop.xlane.xlu0 %1347
        %v1349 = vsel %vm993, %v1336, 0.0
        %1350 = vadd.xlane.f32.xlu0 %v1349
        %v1351 = vpop.xlane.xlu0 %1350
        %v1352 = vsel %vm993, %v1338, 0.0
        %1353 = vadd.xlane.f32.xlu0 %v1352
        %v1354 = vpop.xlane.xlu0 %1353
        %v1355 = vsel %vm993, %v1340, 0.0
        %1356 = vadd.xlane.f32.xlu0 %v1355
        %v1357 = vpop.xlane.xlu0 %1356
        %v1358 = vsel %vm993, %v1342, 0.0
        %1359 = vadd.xlane.f32.xlu0 %v1358
        %v1360 = vpop.xlane.xlu0 %1359
        %v1361 = vrcp.pop %v1345
        %v1362 = vmul.f32 %v1345, %v1361
        %v1363 = vsub.f32 1.0, %v1362
        %v1364 = vmul.f32 %v1361, %v1363
        %v1365 = vadd.f32 %v1361, %v1364
        %vm1366 = vweird.f32 %v1345
        %vm1367 = vweird.f32 %v1361
        %vm1368 = vmor %vm1366, %vm1367
        %v1369 = vsel %vm1368, %v1361, %v1365
        %v1370 = vand.u32 2147483647, %v1345
        %vm1371 = vcmp.eq.f32.partialorder %v1370, 8.507059e+37
        %v1372 = vand.u32 %v1345, 2147483648
        %v1373 = vor.u32 1.1754944e-38, %v1372
        %v1374 = vsel %vm1371, %v1373, %v1369
        %v1375 = vmul.f32 %v1332, %v1374
        %v1376 = vrcp.pop %v1348
        %v1377 = vmul.f32 %v1348, %v1376
        %v1378 = vsub.f32 1.0, %v1377
        %v1379 = vmul.f32 %v1376, %v1378
        %v1380 = vadd.f32 %v1376, %v1379
        %vm1381 = vweird.f32 %v1348
        %vm1382 = vweird.f32 %v1376
        %vm1383 = vmor %vm1381, %vm1382
        %v1384 = vsel %vm1383, %v1376, %v1380
        %v1385 = vand.u32 2147483647, %v1348
        %vm1386 = vcmp.eq.f32.partialorder %v1385, 8.507059e+37
        %v1387 = vand.u32 %v1348, 2147483648
        %v1388 = vor.u32 1.1754944e-38, %v1387
        %v1389 = vsel %vm1386, %v1388, %v1384
        %v1390 = vmul.f32 %v1334, %v1389
        %v1391 = vrcp.pop %v1351
        %v1392 = vmul.f32 %v1351, %v1391
        %v1393 = vsub.f32 1.0, %v1392
        %v1394 = vmul.f32 %v1391, %v1393
        %v1395 = vadd.f32 %v1391, %v1394
        %vm1396 = vweird.f32 %v1351
        %vm1397 = vweird.f32 %v1391
        %vm1398 = vmor %vm1396, %vm1397
        %v1399 = vsel %vm1398, %v1391, %v1395
        %v1400 = vand.u32 2147483647, %v1351
        %vm1401 = vcmp.eq.f32.partialorder %v1400, 8.507059e+37
        %v1402 = vand.u32 %v1351, 2147483648
        %v1403 = vor.u32 1.1754944e-38, %v1402
        %v1404 = vsel %vm1401, %v1403, %v1399
        %v1405 = vmul.f32 %v1336, %v1404
        %v1406 = vrcp.pop %v1354
        %v1407 = vmul.f32 %v1354, %v1406
        %v1408 = vsub.f32 1.0, %v1407
        %v1409 = vmul.f32 %v1406, %v1408
        %v1410 = vadd.f32 %v1406, %v1409
        %vm1411 = vweird.f32 %v1354
        %vm1412 = vweird.f32 %v1406
        %vm1413 = vmor %vm1411, %vm1412
        %v1414 = vsel %vm1413, %v1406, %v1410
        %v1415 = vand.u32 2147483647, %v1354
        %vm1416 = vcmp.eq.f32.partialorder %v1415, 8.507059e+37
        %v1417 = vand.u32 %v1354, 2147483648
        %v1418 = vor.u32 1.1754944e-38, %v1417
        %v1419 = vsel %vm1416, %v1418, %v1414
        %v1420 = vmul.f32 %v1338, %v1419
        %v1421 = vrcp.pop %v1357
        %v1422 = vmul.f32 %v1357, %v1421
        %v1423 = vsub.f32 1.0, %v1422
        %v1424 = vmul.f32 %v1421, %v1423
        %v1425 = vadd.f32 %v1421, %v1424
        %vm1426 = vweird.f32 %v1357
        %vm1427 = vweird.f32 %v1421
        %vm1428 = vmor %vm1426, %vm1427
        %v1429 = vsel %vm1428, %v1421, %v1425
        %v1430 = vand.u32 2147483647, %v1357
        %vm1431 = vcmp.eq.f32.partialorder %v1430, 8.507059e+37
        %v1432 = vand.u32 %v1357, 2147483648
        %v1433 = vor.u32 1.1754944e-38, %v1432
        %v1434 = vsel %vm1431, %v1433, %v1429
        %v1435 = vmul.f32 %v1340, %v1434
        %v1436 = vrcp.pop %v1360
        %v1437 = vmul.f32 %v1360, %v1436
        %v1438 = vsub.f32 1.0, %v1437
        %v1439 = vmul.f32 %v1436, %v1438
        %v1440 = vadd.f32 %v1436, %v1439
        %vm1441 = vweird.f32 %v1360
        %vm1442 = vweird.f32 %v1436
        %vm1443 = vmor %vm1441, %vm1442
        %v1444 = vsel %vm1443, %v1436, %v1440
        %v1445 = vand.u32 2147483647, %v1360
        %vm1446 = vcmp.eq.f32.partialorder %v1445, 8.507059e+37
        %v1447 = vand.u32 %v1360, 2147483648
        %v1448 = vor.u32 1.1754944e-38, %v1447
        %v1449 = vsel %vm1446, %v1448, %v1444
        %v1450 = vmul.f32 %v1342, %v1449
        %v1451 = vpack.c.bf16 %v1375, %v1375
        %v1452 = vpack.c.bf16 %v1390, %v1390
        %v1453 = vpack.c.bf16 %v1405, %v1405
        %v1454 = vpack.c.bf16 %v1420, %v1420
        %v1455 = vpack.c.bf16 %v1435, %v1435
        %v1456 = vpack.c.bf16 %v1450, %v1450
        %v1460 = vunpack.c.l.b16 %v1451
        %v1461 = vunpack.c.l.b16 %v1452
        %v1462 = vunpack.c.l.b16 %v1453
        %v1463 = vpack.c.b16 %v1461, %v1460
        %v1464 = vpack.c.b16 %v1462, %v1462
        %1465 = vrot.lane.b32.xlu0 %v905, 56
        %v1466 = vpop.permute.xlu0 %1465
        %1467 = vrot.lane.b32.xlu0 %v906, 56
        %v1468 = vpop.permute.xlu0 %1467
        %v1471 = vsel %vm993, %v1463, 0
        %v1474 = vsel %vm993, %v1464, 0
        %v1477 = vsel %vm1163, %v1468, 0
        %1479 = vmatpush.bf16.msra.mxu0 0
        %1480 = vmatpush.bf16.msra.mxu0 0
        %1481 = vmatpush.bf16.msra.mxu0 0
        %1482 = vmatpush.bf16.msra.mxu0 0
        %1483 = vmatpush.bf16.msra.mxu0 0
        %1484 = vmatpush.bf16.msra.mxu0 0
        %1485 = vmatpush.bf16.msra.mxu0 %v1477
        %1486 = vmatpush.bf16.msra.mxu0 %v1466
        %1487 = vmatmul.bf16.gmra.mxu0 %v1471
        %v1488 = vpop.f32.mrf.mxu0
        %v1489 = vadd.f32 0.0, %v1488
        %v1490 = vpop.f32.mrf.mxu0
        %v1491 = vadd.f32 0.0, %v1490
        %1492 = vmatmul.bf16.gmra.mxu0 %v1474
        %v1493 = vpop.f32.mrf.mxu0
        %v1494 = vadd.f32 0.0, %v1493
        %v1495 = vpop.f32.mrf.mxu0
        %1496 = vdwg.mxu0
        %v1500 = vunpack.c.l.b16 %v1454
        %v1501 = vunpack.c.l.b16 %v1455
        %v1502 = vunpack.c.l.b16 %v1456
        %v1503 = vpack.c.b16 %v1501, %v1500
        %v1504 = vpack.c.b16 %v1502, %v1502
        %1505 = vrot.lane.b32.xlu0 %v948, 56
        %v1506 = vpop.permute.xlu0 %1505
        %1507 = vrot.lane.b32.xlu0 %v949, 56
        %v1508 = vpop.permute.xlu0 %1507
        %v1511 = vsel %vm993, %v1503, 0
        %v1514 = vsel %vm993, %v1504, 0
        %v1517 = vsel %vm1163, %v1508, 0
        %1519 = vmatpush.bf16.msra.mxu0 0
        %1520 = vmatpush.bf16.msra.mxu0 0
        %1521 = vmatpush.bf16.msra.mxu0 0
        %1522 = vmatpush.bf16.msra.mxu0 0
        %1523 = vmatpush.bf16.msra.mxu0 0
        %1524 = vmatpush.bf16.msra.mxu0 0
        %1525 = vmatpush.bf16.msra.mxu0 %v1517
        %1526 = vmatpush.bf16.msra.mxu0 %v1506
        %1527 = vmatmul.bf16.gmra.mxu0 %v1511
        %v1528 = vpop.f32.mrf.mxu0
        %v1529 = vadd.f32 0.0, %v1528
        %v1530 = vpop.f32.mrf.mxu0
        %v1531 = vadd.f32 0.0, %v1530
        %1532 = vmatmul.bf16.gmra.mxu0 %v1514
        %v1533 = vpop.f32.mrf.mxu0
        %v1534 = vadd.f32 0.0, %v1533
        %v1535 = vpop.f32.mrf.mxu0
        %1536 = vdwg.mxu0
        %1537 = vrot.lane.b32.xlu0 %v905, 112
        %v1538 = vpop.permute.xlu0 %1537
        %1539 = vrot.lane.b32.xlu0 %v906, 112
        %v1540 = vpop.permute.xlu0 %1539
        %1541 = vrot.lane.b32.xlu0 %v905, 80
        %v1542 = vpop.permute.xlu0 %1541
        %1543 = vrot.lane.b32.xlu0 %v906, 80
        %v1544 = vpop.permute.xlu0 %1543
        %v1546 = vsel %vm911, %v1538, 0
        %v1549 = vsel %vm911, %v1540, 0
        %v1552 = vsel %vm911, %v1542, 0
        %v1555 = vsel %vm911, %v1544, 0
        %1557 = vmatpush.bf16.xpose.msra.mxu0 0
        %1558 = vmatpush.bf16.xpose.msra.mxu0 0
        %1559 = vmatpush.bf16.xpose.msra.mxu0 0
        %1560 = vmatpush.bf16.xpose.msra.mxu0 0
        %1561 = vmatpush.bf16.xpose.msra.mxu0 0
        %1562 = vmatpush.bf16.xpose.msra.mxu0 0
        %1563 = vmatpush.bf16.xpose.msra.mxu0 %v1555
        %1564 = vmatpush.bf16.xpose.msra.mxu0 %v1552
        %1565 = vmatmul.bf16.gmra.mxu0 %v1546
        %v1566 = vpop.f32.mrf.mxu0
        %v1567 = vadd.f32 0.0, %v1566
        %v1568 = vpop.f32.mrf.mxu0
        %v1569 = vadd.f32 0.0, %v1568
        %1570 = vmatmul.bf16.gmra.mxu0 %v1549
        %v1571 = vpop.f32.mrf.mxu0
        %v1572 = vadd.f32 0.0, %v1571
        %v1573 = vpop.f32.mrf.mxu0
        %1574 = vdwg.mxu0
        %1575 = vrot.lane.b32.xlu0 %v948, 112
        %v1576 = vpop.permute.xlu0 %1575
        %1577 = vrot.lane.b32.xlu0 %v949, 112
        %v1578 = vpop.permute.xlu0 %1577
        %1579 = vrot.lane.b32.xlu0 %v948, 80
        %v1580 = vpop.permute.xlu0 %1579
        %1581 = vrot.lane.b32.xlu0 %v949, 80
        %v1582 = vpop.permute.xlu0 %1581
        %v1584 = vsel %vm911, %v1576, 0
        %v1587 = vsel %vm911, %v1578, 0
        %v1590 = vsel %vm911, %v1580, 0
        %v1593 = vsel %vm911, %v1582, 0
        %1595 = vmatpush.bf16.xpose.msra.mxu0 0
        %1596 = vmatpush.bf16.xpose.msra.mxu0 0
        %1597 = vmatpush.bf16.xpose.msra.mxu0 0
        %1598 = vmatpush.bf16.xpose.msra.mxu0 0
        %1599 = vmatpush.bf16.xpose.msra.mxu0 0
        %1600 = vmatpush.bf16.xpose.msra.mxu0 0
        %1601 = vmatpush.bf16.xpose.msra.mxu0 %v1593
        %1602 = vmatpush.bf16.xpose.msra.mxu0 %v1590
        %1603 = vmatmul.bf16.gmra.mxu0 %v1584
        %v1604 = vpop.f32.mrf.mxu0
        %v1605 = vadd.f32 0.0, %v1604
        %v1606 = vpop.f32.mrf.mxu0
        %v1607 = vadd.f32 0.0, %v1606
        %1608 = vmatmul.bf16.gmra.mxu0 %v1587
        %v1609 = vpop.f32.mrf.mxu0
        %v1610 = vadd.f32 0.0, %v1609
        %v1611 = vpop.f32.mrf.mxu0
        %1612 = vdwg.mxu0
        %v1613 = vsel %vm986, %v1567, -1e+30
        %v1614 = vsel %vm986, %v1569, -1e+30
        %v1615 = vsel %vm986, %v1572, -1e+30
        %v1616 = vsel %vm986, %v1605, -1e+30
        %v1617 = vsel %vm986, %v1607, -1e+30
        %v1618 = vsel %vm986, %v1610, -1e+30
        %v1619 = vsel %vm993, %v1613, -inf
        %1620 = vmax.xlane.f32.xlu0 %v1619
        %v1621 = vpop.xlane.xlu0 %1620
        %v1622 = vsel %vm993, %v1614, -inf
        %1623 = vmax.xlane.f32.xlu0 %v1622
        %v1624 = vpop.xlane.xlu0 %1623
        %v1625 = vsel %vm993, %v1615, -inf
        %1626 = vmax.xlane.f32.xlu0 %v1625
        %v1627 = vpop.xlane.xlu0 %1626
        %v1628 = vsel %vm993, %v1616, -inf
        %1629 = vmax.xlane.f32.xlu0 %v1628
        %v1630 = vpop.xlane.xlu0 %1629
        %v1631 = vsel %vm993, %v1617, -inf
        %1632 = vmax.xlane.f32.xlu0 %v1631
        %v1633 = vpop.xlane.xlu0 %1632
        %v1634 = vsel %vm993, %v1618, -inf
        %1635 = vmax.xlane.f32.xlu0 %v1634
        %v1636 = vpop.xlane.xlu0 %1635
        %v1637 = vsub.f32 %v1613, %v1621
        %v1638 = vsub.f32 %v1614, %v1624
        %v1639 = vsub.f32 %v1615, %v1627
        %v1640 = vsub.f32 %v1616, %v1630
        %v1641 = vsub.f32 %v1617, %v1633
        %v1642 = vsub.f32 %v1618, %v1636
        %v1643 = vmul.f32 %v1637, 1.442695
        %v1644 = vpow.pop %v1643
        %v1645 = vmul.f32 %v1638, 1.442695
        %v1646 = vpow.pop %v1645
        %v1647 = vmul.f32 %v1639, 1.442695
        %v1648 = vpow.pop %v1647
        %v1649 = vmul.f32 %v1640, 1.442695
        %v1650 = vpow.pop %v1649
        %v1651 = vmul.f32 %v1641, 1.442695
        %v1652 = vpow.pop %v1651
        %v1653 = vmul.f32 %v1642, 1.442695
        %v1654 = vpow.pop %v1653
        %v1655 = vsel %vm993, %v1644, 0.0
        %1656 = vadd.xlane.f32.xlu0 %v1655
        %v1657 = vpop.xlane.xlu0 %1656
        %v1658 = vsel %vm993, %v1646, 0.0
        %1659 = vadd.xlane.f32.xlu0 %v1658
        %v1660 = vpop.xlane.xlu0 %1659
        %v1661 = vsel %vm993, %v1648, 0.0
        %1662 = vadd.xlane.f32.xlu0 %v1661
        %v1663 = vpop.xlane.xlu0 %1662
        %v1664 = vsel %vm993, %v1650, 0.0
        %1665 = vadd.xlane.f32.xlu0 %v1664
        %v1666 = vpop.xlane.xlu0 %1665
        %v1667 = vsel %vm993, %v1652, 0.0
        %1668 = vadd.xlane.f32.xlu0 %v1667
        %v1669 = vpop.xlane.xlu0 %1668
        %v1670 = vsel %vm993, %v1654, 0.0
        %1671 = vadd.xlane.f32.xlu0 %v1670
        %v1672 = vpop.xlane.xlu0 %1671
        %v1673 = vrcp.pop %v1657
        %v1674 = vmul.f32 %v1657, %v1673
        %v1675 = vsub.f32 1.0, %v1674
        %v1676 = vmul.f32 %v1673, %v1675
        %v1677 = vadd.f32 %v1673, %v1676
        %vm1678 = vweird.f32 %v1657
        %vm1679 = vweird.f32 %v1673
        %vm1680 = vmor %vm1678, %vm1679
        %v1681 = vsel %vm1680, %v1673, %v1677
        %v1682 = vand.u32 2147483647, %v1657
        %vm1683 = vcmp.eq.f32.partialorder %v1682, 8.507059e+37
        %v1684 = vand.u32 %v1657, 2147483648
        %v1685 = vor.u32 1.1754944e-38, %v1684
        %v1686 = vsel %vm1683, %v1685, %v1681
        %v1687 = vmul.f32 %v1644, %v1686
        %v1688 = vrcp.pop %v1660
        %v1689 = vmul.f32 %v1660, %v1688
        %v1690 = vsub.f32 1.0, %v1689
        %v1691 = vmul.f32 %v1688, %v1690
        %v1692 = vadd.f32 %v1688, %v1691
        %vm1693 = vweird.f32 %v1660
        %vm1694 = vweird.f32 %v1688
        %vm1695 = vmor %vm1693, %vm1694
        %v1696 = vsel %vm1695, %v1688, %v1692
        %v1697 = vand.u32 2147483647, %v1660
        %vm1698 = vcmp.eq.f32.partialorder %v1697, 8.507059e+37
        %v1699 = vand.u32 %v1660, 2147483648
        %v1700 = vor.u32 1.1754944e-38, %v1699
        %v1701 = vsel %vm1698, %v1700, %v1696
        %v1702 = vmul.f32 %v1646, %v1701
        %v1703 = vrcp.pop %v1663
        %v1704 = vmul.f32 %v1663, %v1703
        %v1705 = vsub.f32 1.0, %v1704
        %v1706 = vmul.f32 %v1703, %v1705
        %v1707 = vadd.f32 %v1703, %v1706
        %vm1708 = vweird.f32 %v1663
        %vm1709 = vweird.f32 %v1703
        %vm1710 = vmor %vm1708, %vm1709
        %v1711 = vsel %vm1710, %v1703, %v1707
        %v1712 = vand.u32 2147483647, %v1663
        %vm1713 = vcmp.eq.f32.partialorder %v1712, 8.507059e+37
        %v1714 = vand.u32 %v1663, 2147483648
        %v1715 = vor.u32 1.1754944e-38, %v1714
        %v1716 = vsel %vm1713, %v1715, %v1711
        %v1717 = vmul.f32 %v1648, %v1716
        %v1718 = vrcp.pop %v1666
        %v1719 = vmul.f32 %v1666, %v1718
        %v1720 = vsub.f32 1.0, %v1719
        %v1721 = vmul.f32 %v1718, %v1720
        %v1722 = vadd.f32 %v1718, %v1721
        %vm1723 = vweird.f32 %v1666
        %vm1724 = vweird.f32 %v1718
        %vm1725 = vmor %vm1723, %vm1724
        %v1726 = vsel %vm1725, %v1718, %v1722
        %v1727 = vand.u32 2147483647, %v1666
        %vm1728 = vcmp.eq.f32.partialorder %v1727, 8.507059e+37
        %v1729 = vand.u32 %v1666, 2147483648
        %v1730 = vor.u32 1.1754944e-38, %v1729
        %v1731 = vsel %vm1728, %v1730, %v1726
        %v1732 = vmul.f32 %v1650, %v1731
        %v1733 = vrcp.pop %v1669
        %v1734 = vmul.f32 %v1669, %v1733
        %v1735 = vsub.f32 1.0, %v1734
        %v1736 = vmul.f32 %v1733, %v1735
        %v1737 = vadd.f32 %v1733, %v1736
        %vm1738 = vweird.f32 %v1669
        %vm1739 = vweird.f32 %v1733
        %vm1740 = vmor %vm1738, %vm1739
        %v1741 = vsel %vm1740, %v1733, %v1737
        %v1742 = vand.u32 2147483647, %v1669
        %vm1743 = vcmp.eq.f32.partialorder %v1742, 8.507059e+37
        %v1744 = vand.u32 %v1669, 2147483648
        %v1745 = vor.u32 1.1754944e-38, %v1744
        %v1746 = vsel %vm1743, %v1745, %v1741
        %v1747 = vmul.f32 %v1652, %v1746
        %v1748 = vrcp.pop %v1672
        %v1749 = vmul.f32 %v1672, %v1748
        %v1750 = vsub.f32 1.0, %v1749
        %v1751 = vmul.f32 %v1748, %v1750
        %v1752 = vadd.f32 %v1748, %v1751
        %vm1753 = vweird.f32 %v1672
        %vm1754 = vweird.f32 %v1748
        %vm1755 = vmor %vm1753, %vm1754
        %v1756 = vsel %vm1755, %v1748, %v1752
        %v1757 = vand.u32 2147483647, %v1672
        %vm1758 = vcmp.eq.f32.partialorder %v1757, 8.507059e+37
        %v1759 = vand.u32 %v1672, 2147483648
        %v1760 = vor.u32 1.1754944e-38, %v1759
        %v1761 = vsel %vm1758, %v1760, %v1756
        %v1762 = vmul.f32 %v1654, %v1761
        %v1763 = vpack.c.bf16 %v1687, %v1687
        %v1764 = vpack.c.bf16 %v1702, %v1702
        %v1765 = vpack.c.bf16 %v1717, %v1717
        %v1766 = vpack.c.bf16 %v1732, %v1732
        %v1767 = vpack.c.bf16 %v1747, %v1747
        %v1768 = vpack.c.bf16 %v1762, %v1762
        %v1772 = vunpack.c.l.b16 %v1763
        %v1773 = vunpack.c.l.b16 %v1764
        %v1774 = vunpack.c.l.b16 %v1765
        %v1775 = vpack.c.b16 %v1773, %v1772
        %v1776 = vpack.c.b16 %v1774, %v1774
        %1777 = vrot.lane.b32.xlu0 %v905, 48
        %v1778 = vpop.permute.xlu0 %1777
        %1779 = vrot.lane.b32.xlu0 %v906, 48
        %v1780 = vpop.permute.xlu0 %1779
        %v1783 = vsel %vm993, %v1775, 0
        %v1786 = vsel %vm993, %v1776, 0
        %v1789 = vsel %vm1163, %v1780, 0
        %1791 = vmatpush.bf16.msra.mxu0 0
        %1792 = vmatpush.bf16.msra.mxu0 0
        %1793 = vmatpush.bf16.msra.mxu0 0
        %1794 = vmatpush.bf16.msra.mxu0 0
        %1795 = vmatpush.bf16.msra.mxu0 0
        %1796 = vmatpush.bf16.msra.mxu0 0
        %1797 = vmatpush.bf16.msra.mxu0 %v1789
        %1798 = vmatpush.bf16.msra.mxu0 %v1778
        %1799 = vmatmul.bf16.gmra.mxu0 %v1783
        %v1800 = vpop.f32.mrf.mxu0
        %v1801 = vadd.f32 0.0, %v1800
        %v1802 = vpop.f32.mrf.mxu0
        %v1803 = vadd.f32 0.0, %v1802
        %1804 = vmatmul.bf16.gmra.mxu0 %v1786
        %v1805 = vpop.f32.mrf.mxu0
        %v1806 = vadd.f32 0.0, %v1805
        %v1807 = vpop.f32.mrf.mxu0
        %1808 = vdwg.mxu0
        %v1812 = vunpack.c.l.b16 %v1766
        %v1813 = vunpack.c.l.b16 %v1767
        %v1814 = vunpack.c.l.b16 %v1768
        %v1815 = vpack.c.b16 %v1813, %v1812
        %v1816 = vpack.c.b16 %v1814, %v1814
        %1817 = vrot.lane.b32.xlu0 %v948, 48
        %v1818 = vpop.permute.xlu0 %1817
        %1819 = vrot.lane.b32.xlu0 %v949, 48
        %v1820 = vpop.permute.xlu0 %1819
        %v1823 = vsel %vm993, %v1815, 0
        %v1826 = vsel %vm993, %v1816, 0
        %v1829 = vsel %vm1163, %v1820, 0
        %1831 = vmatpush.bf16.msra.mxu0 0
        %1832 = vmatpush.bf16.msra.mxu0 0
        %1833 = vmatpush.bf16.msra.mxu0 0
        %1834 = vmatpush.bf16.msra.mxu0 0
        %1835 = vmatpush.bf16.msra.mxu0 0
        %1836 = vmatpush.bf16.msra.mxu0 0
        %1837 = vmatpush.bf16.msra.mxu0 %v1829
        %1838 = vmatpush.bf16.msra.mxu0 %v1818
        %1839 = vmatmul.bf16.gmra.mxu0 %v1823
        %v1840 = vpop.f32.mrf.mxu0
        %v1841 = vadd.f32 0.0, %v1840
        %v1842 = vpop.f32.mrf.mxu0
        %v1843 = vadd.f32 0.0, %v1842
        %1844 = vmatmul.bf16.gmra.mxu0 %v1826
        %v1845 = vpop.f32.mrf.mxu0
        %v1846 = vadd.f32 0.0, %v1845
        %v1847 = vpop.f32.mrf.mxu0
        %1848 = vdwg.mxu0
        %1849 = vrot.lane.b32.xlu0 %v905, 104
        %v1850 = vpop.permute.xlu0 %1849
        %1851 = vrot.lane.b32.xlu0 %v906, 104
        %v1852 = vpop.permute.xlu0 %1851
        %1853 = vrot.lane.b32.xlu0 %v905, 72
        %v1854 = vpop.permute.xlu0 %1853
        %1855 = vrot.lane.b32.xlu0 %v906, 72
        %v1856 = vpop.permute.xlu0 %1855
        %v1858 = vsel %vm911, %v1850, 0
        %v1861 = vsel %vm911, %v1852, 0
        %v1864 = vsel %vm911, %v1854, 0
        %v1867 = vsel %vm911, %v1856, 0
        %1869 = vmatpush.bf16.xpose.msra.mxu0 0
        %1870 = vmatpush.bf16.xpose.msra.mxu0 0
        %1871 = vmatpush.bf16.xpose.msra.mxu0 0
        %1872 = vmatpush.bf16.xpose.msra.mxu0 0
        %1873 = vmatpush.bf16.xpose.msra.mxu0 0
        %1874 = vmatpush.bf16.xpose.msra.mxu0 0
        %1875 = vmatpush.bf16.xpose.msra.mxu0 %v1867
        %1876 = vmatpush.bf16.xpose.msra.mxu0 %v1864
        %1877 = vmatmul.bf16.gmra.mxu0 %v1858
        %v1878 = vpop.f32.mrf.mxu0
        %v1879 = vadd.f32 0.0, %v1878
        %v1880 = vpop.f32.mrf.mxu0
        %v1881 = vadd.f32 0.0, %v1880
        %1882 = vmatmul.bf16.gmra.mxu0 %v1861
        %v1883 = vpop.f32.mrf.mxu0
        %v1884 = vadd.f32 0.0, %v1883
        %v1885 = vpop.f32.mrf.mxu0
        %1886 = vdwg.mxu0
        %1887 = vrot.lane.b32.xlu0 %v948, 104
        %v1888 = vpop.permute.xlu0 %1887
        %1889 = vrot.lane.b32.xlu0 %v949, 104
        %v1890 = vpop.permute.xlu0 %1889
        %1891 = vrot.lane.b32.xlu0 %v948, 72
        %v1892 = vpop.permute.xlu0 %1891
        %1893 = vrot.lane.b32.xlu0 %v949, 72
        %v1894 = vpop.permute.xlu0 %1893
        %v1896 = vsel %vm911, %v1888, 0
        %v1899 = vsel %vm911, %v1890, 0
        %v1902 = vsel %vm911, %v1892, 0
        %v1905 = vsel %vm911, %v1894, 0
        %1907 = vmatpush.bf16.xpose.msra.mxu0 0
        %1908 = vmatpush.bf16.xpose.msra.mxu0 0
        %1909 = vmatpush.bf16.xpose.msra.mxu0 0
        %1910 = vmatpush.bf16.xpose.msra.mxu0 0
        %1911 = vmatpush.bf16.xpose.msra.mxu0 0
        %1912 = vmatpush.bf16.xpose.msra.mxu0 0
        %1913 = vmatpush.bf16.xpose.msra.mxu0 %v1905
        %1914 = vmatpush.bf16.xpose.msra.mxu0 %v1902
        %1915 = vmatmul.bf16.gmra.mxu0 %v1896
        %v1916 = vpop.f32.mrf.mxu0
        %v1917 = vadd.f32 0.0, %v1916
        %v1918 = vpop.f32.mrf.mxu0
        %v1919 = vadd.f32 0.0, %v1918
        %1920 = vmatmul.bf16.gmra.mxu0 %v1899
        %v1921 = vpop.f32.mrf.mxu0
        %v1922 = vadd.f32 0.0, %v1921
        %v1923 = vpop.f32.mrf.mxu0
        %1924 = vdwg.mxu0
        %v1925 = vsel %vm986, %v1879, -1e+30
        %v1926 = vsel %vm986, %v1881, -1e+30
        %v1927 = vsel %vm986, %v1884, -1e+30
        %v1928 = vsel %vm986, %v1917, -1e+30
        %v1929 = vsel %vm986, %v1919, -1e+30
        %v1930 = vsel %vm986, %v1922, -1e+30
        %v1931 = vsel %vm993, %v1925, -inf
        %1932 = vmax.xlane.f32.xlu0 %v1931
        %v1933 = vpop.xlane.xlu0 %1932
        %v1934 = vsel %vm993, %v1926, -inf
        %1935 = vmax.xlane.f32.xlu0 %v1934
        %v1936 = vpop.xlane.xlu0 %1935
        %v1937 = vsel %vm993, %v1927, -inf
        %1938 = vmax.xlane.f32.xlu0 %v1937
        %v1939 = vpop.xlane.xlu0 %1938
        %v1940 = vsel %vm993, %v1928, -inf
        %1941 = vmax.xlane.f32.xlu0 %v1940
        %v1942 = vpop.xlane.xlu0 %1941
        %v1943 = vsel %vm993, %v1929, -inf
        %1944 = vmax.xlane.f32.xlu0 %v1943
        %v1945 = vpop.xlane.xlu0 %1944
        %v1946 = vsel %vm993, %v1930, -inf
        %1947 = vmax.xlane.f32.xlu0 %v1946
        %v1948 = vpop.xlane.xlu0 %1947
        %v1949 = vsub.f32 %v1925, %v1933
        %v1950 = vsub.f32 %v1926, %v1936
        %v1951 = vsub.f32 %v1927, %v1939
        %v1952 = vsub.f32 %v1928, %v1942
        %v1953 = vsub.f32 %v1929, %v1945
        %v1954 = vsub.f32 %v1930, %v1948
        %v1955 = vmul.f32 %v1949, 1.442695
        %v1956 = vpow.pop %v1955
        %v1957 = vmul.f32 %v1950, 1.442695
        %v1958 = vpow.pop %v1957
        %v1959 = vmul.f32 %v1951, 1.442695
        %v1960 = vpow.pop %v1959
        %v1961 = vmul.f32 %v1952, 1.442695
        %v1962 = vpow.pop %v1961
        %v1963 = vmul.f32 %v1953, 1.442695
        %v1964 = vpow.pop %v1963
        %v1965 = vmul.f32 %v1954, 1.442695
        %v1966 = vpow.pop %v1965
        %v1967 = vsel %vm993, %v1956, 0.0
        %1968 = vadd.xlane.f32.xlu0 %v1967
        %v1969 = vpop.xlane.xlu0 %1968
        %v1970 = vsel %vm993, %v1958, 0.0
        %1971 = vadd.xlane.f32.xlu0 %v1970
        %v1972 = vpop.xlane.xlu0 %1971
        %v1973 = vsel %vm993, %v1960, 0.0
        %1974 = vadd.xlane.f32.xlu0 %v1973
        %v1975 = vpop.xlane.xlu0 %1974
        %v1976 = vsel %vm993, %v1962, 0.0
        %1977 = vadd.xlane.f32.xlu0 %v1976
        %v1978 = vpop.xlane.xlu0 %1977
        %v1979 = vsel %vm993, %v1964, 0.0
        %1980 = vadd.xlane.f32.xlu0 %v1979
        %v1981 = vpop.xlane.xlu0 %1980
        %v1982 = vsel %vm993, %v1966, 0.0
        %1983 = vadd.xlane.f32.xlu0 %v1982
        %v1984 = vpop.xlane.xlu0 %1983
        %v1985 = vrcp.pop %v1969
        %v1986 = vmul.f32 %v1969, %v1985
        %v1987 = vsub.f32 1.0, %v1986
        %v1988 = vmul.f32 %v1985, %v1987
        %v1989 = vadd.f32 %v1985, %v1988
        %vm1990 = vweird.f32 %v1969
        %vm1991 = vweird.f32 %v1985
        %vm1992 = vmor %vm1990, %vm1991
        %v1993 = vsel %vm1992, %v1985, %v1989
        %v1994 = vand.u32 2147483647, %v1969
        %vm1995 = vcmp.eq.f32.partialorder %v1994, 8.507059e+37
        %v1996 = vand.u32 %v1969, 2147483648
        %v1997 = vor.u32 1.1754944e-38, %v1996
        %v1998 = vsel %vm1995, %v1997, %v1993
        %v1999 = vmul.f32 %v1956, %v1998
        %v2000 = vrcp.pop %v1972
        %v2001 = vmul.f32 %v1972, %v2000
        %v2002 = vsub.f32 1.0, %v2001
        %v2003 = vmul.f32 %v2000, %v2002
        %v2004 = vadd.f32 %v2000, %v2003
        %vm2005 = vweird.f32 %v1972
        %vm2006 = vweird.f32 %v2000
        %vm2007 = vmor %vm2005, %vm2006
        %v2008 = vsel %vm2007, %v2000, %v2004
        %v2009 = vand.u32 2147483647, %v1972
        %vm2010 = vcmp.eq.f32.partialorder %v2009, 8.507059e+37
        %v2011 = vand.u32 %v1972, 2147483648
        %v2012 = vor.u32 1.1754944e-38, %v2011
        %v2013 = vsel %vm2010, %v2012, %v2008
        %v2014 = vmul.f32 %v1958, %v2013
        %v2015 = vrcp.pop %v1975
        %v2016 = vmul.f32 %v1975, %v2015
        %v2017 = vsub.f32 1.0, %v2016
        %v2018 = vmul.f32 %v2015, %v2017
        %v2019 = vadd.f32 %v2015, %v2018
        %vm2020 = vweird.f32 %v1975
        %vm2021 = vweird.f32 %v2015
        %vm2022 = vmor %vm2020, %vm2021
        %v2023 = vsel %vm2022, %v2015, %v2019
        %v2024 = vand.u32 2147483647, %v1975
        %vm2025 = vcmp.eq.f32.partialorder %v2024, 8.507059e+37
        %v2026 = vand.u32 %v1975, 2147483648
        %v2027 = vor.u32 1.1754944e-38, %v2026
        %v2028 = vsel %vm2025, %v2027, %v2023
        %v2029 = vmul.f32 %v1960, %v2028
        %v2030 = vrcp.pop %v1978
        %v2031 = vmul.f32 %v1978, %v2030
        %v2032 = vsub.f32 1.0, %v2031
        %v2033 = vmul.f32 %v2030, %v2032
        %v2034 = vadd.f32 %v2030, %v2033
        %vm2035 = vweird.f32 %v1978
        %vm2036 = vweird.f32 %v2030
        %vm2037 = vmor %vm2035, %vm2036
        %v2038 = vsel %vm2037, %v2030, %v2034
        %v2039 = vand.u32 2147483647, %v1978
        %vm2040 = vcmp.eq.f32.partialorder %v2039, 8.507059e+37
        %v2041 = vand.u32 %v1978, 2147483648
        %v2042 = vor.u32 1.1754944e-38, %v2041
        %v2043 = vsel %vm2040, %v2042, %v2038
        %v2044 = vmul.f32 %v1962, %v2043
        %v2045 = vrcp.pop %v1981
        %v2046 = vmul.f32 %v1981, %v2045
        %v2047 = vsub.f32 1.0, %v2046
        %v2048 = vmul.f32 %v2045, %v2047
        %v2049 = vadd.f32 %v2045, %v2048
        %vm2050 = vweird.f32 %v1981
        %vm2051 = vweird.f32 %v2045
        %vm2052 = vmor %vm2050, %vm2051
        %v2053 = vsel %vm2052, %v2045, %v2049
        %v2054 = vand.u32 2147483647, %v1981
        %vm2055 = vcmp.eq.f32.partialorder %v2054, 8.507059e+37
        %v2056 = vand.u32 %v1981, 2147483648
        %v2057 = vor.u32 1.1754944e-38, %v2056
        %v2058 = vsel %vm2055, %v2057, %v2053
        %v2059 = vmul.f32 %v1964, %v2058
        %v2060 = vrcp.pop %v1984
        %v2061 = vmul.f32 %v1984, %v2060
        %v2062 = vsub.f32 1.0, %v2061
        %v2063 = vmul.f32 %v2060, %v2062
        %v2064 = vadd.f32 %v2060, %v2063
        %vm2065 = vweird.f32 %v1984
        %vm2066 = vweird.f32 %v2060
        %vm2067 = vmor %vm2065, %vm2066
        %v2068 = vsel %vm2067, %v2060, %v2064
        %v2069 = vand.u32 2147483647, %v1984
        %vm2070 = vcmp.eq.f32.partialorder %v2069, 8.507059e+37
        %v2071 = vand.u32 %v1984, 2147483648
        %v2072 = vor.u32 1.1754944e-38, %v2071
        %v2073 = vsel %vm2070, %v2072, %v2068
        %v2074 = vmul.f32 %v1966, %v2073
        %v2075 = vpack.c.bf16 %v1999, %v1999
        %v2076 = vpack.c.bf16 %v2014, %v2014
        %v2077 = vpack.c.bf16 %v2029, %v2029
        %v2078 = vpack.c.bf16 %v2044, %v2044
        %v2079 = vpack.c.bf16 %v2059, %v2059
        %v2080 = vpack.c.bf16 %v2074, %v2074
        %v2084 = vunpack.c.l.b16 %v2075
        %v2085 = vunpack.c.l.b16 %v2076
        %v2086 = vunpack.c.l.b16 %v2077
        %v2087 = vpack.c.b16 %v2085, %v2084
        %v2088 = vpack.c.b16 %v2086, %v2086
        %2089 = vrot.lane.b32.xlu0 %v905, 40
        %v2090 = vpop.permute.xlu0 %2089
        %2091 = vrot.lane.b32.xlu0 %v906, 40
        %v2092 = vpop.permute.xlu0 %2091
        %v2095 = vsel %vm993, %v2087, 0
        %v2098 = vsel %vm993, %v2088, 0
        %v2101 = vsel %vm1163, %v2092, 0
        %2103 = vmatpush.bf16.msra.mxu0 0
        %2104 = vmatpush.bf16.msra.mxu0 0
        %2105 = vmatpush.bf16.msra.mxu0 0
        %2106 = vmatpush.bf16.msra.mxu0 0
        %2107 = vmatpush.bf16.msra.mxu0 0
        %2108 = vmatpush.bf16.msra.mxu0 0
        %2109 = vmatpush.bf16.msra.mxu0 %v2101
        %2110 = vmatpush.bf16.msra.mxu0 %v2090
        %2111 = vmatmul.bf16.gmra.mxu0 %v2095
        %v2112 = vpop.f32.mrf.mxu0
        %v2113 = vadd.f32 0.0, %v2112
        %v2114 = vpop.f32.mrf.mxu0
        %v2115 = vadd.f32 0.0, %v2114
        %2116 = vmatmul.bf16.gmra.mxu0 %v2098
        %v2117 = vpop.f32.mrf.mxu0
        %v2118 = vadd.f32 0.0, %v2117
        %v2119 = vpop.f32.mrf.mxu0
        %2120 = vdwg.mxu0
        %v2124 = vunpack.c.l.b16 %v2078
        %v2125 = vunpack.c.l.b16 %v2079
        %v2126 = vunpack.c.l.b16 %v2080
        %v2127 = vpack.c.b16 %v2125, %v2124
        %v2128 = vpack.c.b16 %v2126, %v2126
        %2129 = vrot.lane.b32.xlu0 %v948, 40
        %v2130 = vpop.permute.xlu0 %2129
        %2131 = vrot.lane.b32.xlu0 %v949, 40
        %v2132 = vpop.permute.xlu0 %2131
        %v2135 = vsel %vm993, %v2127, 0
        %v2138 = vsel %vm993, %v2128, 0
        %v2141 = vsel %vm1163, %v2132, 0
        %2143 = vmatpush.bf16.msra.mxu0 0
        %2144 = vmatpush.bf16.msra.mxu0 0
        %2145 = vmatpush.bf16.msra.mxu0 0
        %2146 = vmatpush.bf16.msra.mxu0 0
        %2147 = vmatpush.bf16.msra.mxu0 0
        %2148 = vmatpush.bf16.msra.mxu0 0
        %2149 = vmatpush.bf16.msra.mxu0 %v2141
        %2150 = vmatpush.bf16.msra.mxu0 %v2130
        %2151 = vmatmul.bf16.gmra.mxu0 %v2135
        %v2152 = vpop.f32.mrf.mxu0
        %v2153 = vadd.f32 0.0, %v2152
        %v2154 = vpop.f32.mrf.mxu0
        %v2155 = vadd.f32 0.0, %v2154
        %2156 = vmatmul.bf16.gmra.mxu0 %v2138
        %v2157 = vpop.f32.mrf.mxu0
        %v2158 = vadd.f32 0.0, %v2157
        %v2159 = vpop.f32.mrf.mxu0
        %2160 = vdwg.mxu0
        %2167 = vrot.lane.b32.xlu0 %v1489, 8
        %v2168 = vpop.permute.xlu0 %2167
        %2169 = vrot.lane.b32.xlu0 %v1491, 8
        %v2170 = vpop.permute.xlu0 %2169
        %2171 = vrot.lane.b32.xlu0 %v1494, 8
        %v2172 = vpop.permute.xlu0 %2171
        %2173 = vrot.lane.b32.xlu0 %v1529, 8
        %v2174 = vpop.permute.xlu0 %2173
        %2175 = vrot.lane.b32.xlu0 %v1531, 8
        %v2176 = vpop.permute.xlu0 %2175
        %2177 = vrot.lane.b32.xlu0 %v1534, 8
        %v2178 = vpop.permute.xlu0 %2177
        %2191 = vrot.lane.b32.xlu0 %v1801, 16
        %v2192 = vpop.permute.xlu0 %2191
        %2193 = vrot.lane.b32.xlu0 %v1803, 16
        %v2194 = vpop.permute.xlu0 %2193
        %2195 = vrot.lane.b32.xlu0 %v1806, 16
        %v2196 = vpop.permute.xlu0 %2195
        %2197 = vrot.lane.b32.xlu0 %v1841, 16
        %v2198 = vpop.permute.xlu0 %2197
        %2199 = vrot.lane.b32.xlu0 %v1843, 16
        %v2200 = vpop.permute.xlu0 %2199
        %2201 = vrot.lane.b32.xlu0 %v1846, 16
        %v2202 = vpop.permute.xlu0 %2201
        %2215 = vrot.lane.b32.xlu0 %v2113, 24
        %v2216 = vpop.permute.xlu0 %2215
        %2217 = vrot.lane.b32.xlu0 %v2115, 24
        %v2218 = vpop.permute.xlu0 %2217
        %2219 = vrot.lane.b32.xlu0 %v2118, 24
        %v2220 = vpop.permute.xlu0 %2219
        %2221 = vrot.lane.b32.xlu0 %v2153, 24
        %v2222 = vpop.permute.xlu0 %2221
        %2223 = vrot.lane.b32.xlu0 %v2155, 24
        %v2224 = vpop.permute.xlu0 %2223
        %2225 = vrot.lane.b32.xlu0 %v2158, 24
        %v2226 = vpop.permute.xlu0 %2225
        %v2233 = vsel %vm911, %v1177, %v2168
        %v2234 = vsel %vm911, %v1179, %v2170
        %v2235 = vsel %vm911, %v1182, %v2172
        %v2236 = vsel %vm911, %v1217, %v2174
        %v2237 = vsel %vm911, %v1219, %v2176
        %v2238 = vsel %vm911, %v1222, %v2178
        %vm2239 = vcmask 130048
        %v2240 = vsel %vm2239, %v2233, %v2192
        %v2241 = vsel %vm2239, %v2234, %v2194
        %v2242 = vsel %vm2239, %v2235, %v2196
        %v2243 = vsel %vm2239, %v2236, %v2198
        %v2244 = vsel %vm2239, %v2237, %v2200
        %v2245 = vsel %vm2239, %v2238, %v2202
        %v2246 = vsel %vm993, %v2240, %v2216
        %v2247 = vsel %vm993, %v2241, %v2218
        %v2248 = vsel %vm993, %v2242, %v2220
        %v2249 = vsel %vm993, %v2243, %v2222
        %v2250 = vsel %vm993, %v2244, %v2224
        %v2251 = vsel %vm993, %v2245, %v2226
        %v2252 = vpack.c.bf16 %v2247, %v2246
        %v2253 = vpack.c.bf16 %v2249, %v2248
        %v2254 = vpack.c.bf16 %v2251, %v2250
        %v2255 = vld [vmem:[%s565] sm:$0xf]
        %v2256 = vld [vmem:[%s565 + $0x4] sm:$0xf]
        %v2257 = vld [vmem:[%s565 + $0x8] sm:$0xf]
        %v2258 = vld [vmem:[%s565 + $0xc] sm:$0xf]
        %v2259 = vperm.slane %v685, 4
        %v2264 = vunpack.c.l.b16 %v2255
        %v2265 = vunpack.c.l.b16 %v2256
        %v2266 = vunpack.c.l.b16 %v2257
        %v2267 = vunpack.c.l.b16 %v2258
        %v2268 = vpack.c.b16 %v2265, %v2264
        %v2269 = vpack.c.b16 %v2267, %v2266
        %v2273 = vsel %vm686, %v2252, 0
        %v2276 = vsel %vm686, %v2253, 0
        %v2279 = vsel %vm686, %v2254, 0
        %2281 = vmatpush.bf16.msra.mxu0 0
        %2282 = vmatpush.bf16.msra.mxu0 0
        %2283 = vmatpush.bf16.msra.mxu0 0
        %2284 = vmatpush.bf16.msra.mxu0 0
        %2285 = vmatpush.bf16.msra.mxu0 0
        %2286 = vmatpush.bf16.msra.mxu0 0
        %2287 = vmatpush.bf16.msra.mxu0 %v2269
        %2288 = vmatpush.bf16.msra.mxu0 %v2268
        %2289 = vmatmul.bf16.gmra.mxu0 %v2273
        %v2290 = vpop.f32.mrf.mxu0
        %v2291 = vadd.f32 %v2259, %v2290
        %v2292 = vpop.f32.mrf.mxu0
        %v2293 = vadd.f32 %v2259, %v2292
        %2294 = vmatmul.bf16.gmra.mxu0 %v2276
        %v2295 = vpop.f32.mrf.mxu0
        %v2296 = vadd.f32 %v2259, %v2295
        %v2297 = vpop.f32.mrf.mxu0
        %v2298 = vadd.f32 %v2259, %v2297
        %2299 = vmatmul.bf16.gmra.mxu0 %v2279
        %v2300 = vpop.f32.mrf.mxu0
        %v2301 = vadd.f32 %v2259, %v2300
        %v2302 = vpop.f32.mrf.mxu0
        %v2303 = vadd.f32 %v2259, %v2302
        %2304 = vdwg.mxu0
        %v2305 = vadd.f32 %v679, %v2291
        %v2306 = vadd.f32 %v680, %v2293
        %v2307 = vadd.f32 %v681, %v2296
        %v2308 = vadd.f32 %v682, %v2298
        %v2309 = vadd.f32 %v683, %v2301
        %v2310 = vadd.f32 %v684, %v2303
        %v2311 = vsel %vm686, %v2305, 0.0
        %2312 = vadd.xlane.f32.xlu0 %v2311
        %v2313 = vpop.xlane.xlu0 %2312
        %v2314 = vsel %vm686, %v2306, 0.0
        %2315 = vadd.xlane.f32.xlu0 %v2314
        %v2316 = vpop.xlane.xlu0 %2315
        %v2317 = vsel %vm686, %v2307, 0.0
        %2318 = vadd.xlane.f32.xlu0 %v2317
        %v2319 = vpop.xlane.xlu0 %2318
        %v2320 = vsel %vm686, %v2308, 0.0
        %2321 = vadd.xlane.f32.xlu0 %v2320
        %v2322 = vpop.xlane.xlu0 %2321
        %v2323 = vsel %vm686, %v2309, 0.0
        %2324 = vadd.xlane.f32.xlu0 %v2323
        %v2325 = vpop.xlane.xlu0 %2324
        %v2326 = vsel %vm686, %v2310, 0.0
        %2327 = vadd.xlane.f32.xlu0 %v2326
        %v2328 = vpop.xlane.xlu0 %2327
        %v2329 = vmul.f32 %v2313, %v711
        %v2330 = vmul.f32 %v2316, %v711
        %v2331 = vmul.f32 %v2319, %v711
        %v2332 = vmul.f32 %v2322, %v711
        %v2333 = vmul.f32 %v2325, %v711
        %v2334 = vmul.f32 %v2328, %v711
        %v2335 = vsub.f32 %v2305, %v2329
        %v2336 = vsub.f32 %v2306, %v2330
        %v2337 = vsub.f32 %v2307, %v2331
        %v2338 = vsub.f32 %v2308, %v2332
        %v2339 = vsub.f32 %v2309, %v2333
        %v2340 = vsub.f32 %v2310, %v2334
        %v2341 = vmul.f32 %v2335, %v2335
        %v2342 = vmul.f32 %v2336, %v2336
        %v2343 = vmul.f32 %v2337, %v2337
        %v2344 = vmul.f32 %v2338, %v2338
        %v2345 = vmul.f32 %v2339, %v2339
        %v2346 = vmul.f32 %v2340, %v2340
        %v2347 = vsel %vm686, %v2341, 0.0
        %2348 = vadd.xlane.f32.xlu0 %v2347
        %v2349 = vpop.xlane.xlu0 %2348
        %v2350 = vsel %vm686, %v2342, 0.0
        %2351 = vadd.xlane.f32.xlu0 %v2350
        %v2352 = vpop.xlane.xlu0 %2351
        %v2353 = vsel %vm686, %v2343, 0.0
        %2354 = vadd.xlane.f32.xlu0 %v2353
        %v2355 = vpop.xlane.xlu0 %2354
        %v2356 = vsel %vm686, %v2344, 0.0
        %2357 = vadd.xlane.f32.xlu0 %v2356
        %v2358 = vpop.xlane.xlu0 %2357
        %v2359 = vsel %vm686, %v2345, 0.0
        %2360 = vadd.xlane.f32.xlu0 %v2359
        %v2361 = vpop.xlane.xlu0 %2360
        %v2362 = vsel %vm686, %v2346, 0.0
        %2363 = vadd.xlane.f32.xlu0 %v2362
        %v2364 = vpop.xlane.xlu0 %2363
        %v2365 = vmul.f32 %v2349, %v711
        %v2366 = vmul.f32 %v2352, %v711
        %v2367 = vmul.f32 %v2355, %v711
        %v2368 = vmul.f32 %v2358, %v711
        %v2369 = vmul.f32 %v2361, %v711
        %v2370 = vmul.f32 %v2364, %v711
        %v2371 = vadd.f32 %v2365, 1e-05
        %v2372 = vadd.f32 %v2366, 1e-05
        %v2373 = vadd.f32 %v2367, 1e-05
        %v2374 = vadd.f32 %v2368, 1e-05
        %v2375 = vadd.f32 %v2369, 1e-05
        %v2376 = vadd.f32 %v2370, 1e-05
        %v2377 = vrsqrt.pop %v2371
        %v2378 = vmul.f32 %v2377, %v2371
        %v2379 = vmul.f32 %v2378, %v2377
        %v2380 = vmul.f32 0.5, %v2379
        %v2381 = vsub.f32 1.5, %v2380
        %v2382 = vmul.f32 %v2377, %v2381
        %vm2383 = vweird.f32 %v2371
        %vm2384 = vweird.f32 %v2377
        %vm2385 = vmor %vm2383, %vm2384
        %v2386 = vsel %vm2385, %v2377, %v2382
        %v2387 = vrsqrt.pop %v2372
        %v2388 = vmul.f32 %v2387, %v2372
        %v2389 = vmul.f32 %v2388, %v2387
        %v2390 = vmul.f32 0.5, %v2389
        %v2391 = vsub.f32 1.5, %v2390
        %v2392 = vmul.f32 %v2387, %v2391
        %vm2393 = vweird.f32 %v2372
        %vm2394 = vweird.f32 %v2387
        %vm2395 = vmor %vm2393, %vm2394
        %v2396 = vsel %vm2395, %v2387, %v2392
        %v2397 = vrsqrt.pop %v2373
        %v2398 = vmul.f32 %v2397, %v2373
        %v2399 = vmul.f32 %v2398, %v2397
        %v2400 = vmul.f32 0.5, %v2399
        %v2401 = vsub.f32 1.5, %v2400
        %v2402 = vmul.f32 %v2397, %v2401
        %vm2403 = vweird.f32 %v2373
        %vm2404 = vweird.f32 %v2397
        %vm2405 = vmor %vm2403, %vm2404
        %v2406 = vsel %vm2405, %v2397, %v2402
        %v2407 = vrsqrt.pop %v2374
        %v2408 = vmul.f32 %v2407, %v2374
        %v2409 = vmul.f32 %v2408, %v2407
        %v2410 = vmul.f32 0.5, %v2409
        %v2411 = vsub.f32 1.5, %v2410
        %v2412 = vmul.f32 %v2407, %v2411
        %vm2413 = vweird.f32 %v2374
        %vm2414 = vweird.f32 %v2407
        %vm2415 = vmor %vm2413, %vm2414
        %v2416 = vsel %vm2415, %v2407, %v2412
        %v2417 = vrsqrt.pop %v2375
        %v2418 = vmul.f32 %v2417, %v2375
        %v2419 = vmul.f32 %v2418, %v2417
        %v2420 = vmul.f32 0.5, %v2419
        %v2421 = vsub.f32 1.5, %v2420
        %v2422 = vmul.f32 %v2417, %v2421
        %vm2423 = vweird.f32 %v2375
        %vm2424 = vweird.f32 %v2417
        %vm2425 = vmor %vm2423, %vm2424
        %v2426 = vsel %vm2425, %v2417, %v2422
        %v2427 = vrsqrt.pop %v2376
        %v2428 = vmul.f32 %v2427, %v2376
        %v2429 = vmul.f32 %v2428, %v2427
        %v2430 = vmul.f32 0.5, %v2429
        %v2431 = vsub.f32 1.5, %v2430
        %v2432 = vmul.f32 %v2427, %v2431
        %vm2433 = vweird.f32 %v2376
        %vm2434 = vweird.f32 %v2427
        %vm2435 = vmor %vm2433, %vm2434
        %v2436 = vsel %vm2435, %v2427, %v2432
        %v2437 = vmul.f32 %v2335, %v2386
        %v2438 = vmul.f32 %v2336, %v2396
        %v2439 = vmul.f32 %v2337, %v2406
        %v2440 = vmul.f32 %v2338, %v2416
        %v2441 = vmul.f32 %v2339, %v2426
        %v2442 = vmul.f32 %v2340, %v2436
        %v2443 = vperm.slane %v685, 2
        %v2444 = vmul.f32 %v2437, %v2443
        %v2445 = vmul.f32 %v2438, %v2443
        %v2446 = vmul.f32 %v2439, %v2443
        %v2447 = vmul.f32 %v2440, %v2443
        %v2448 = vmul.f32 %v2441, %v2443
        %v2449 = vmul.f32 %v2442, %v2443
        %v2450 = vperm.slane %v685, 3
        %v2451 = vadd.f32 %v2444, %v2450
        %v2452 = vadd.f32 %v2445, %v2450
        %v2453 = vadd.f32 %v2446, %v2450
        %v2454 = vadd.f32 %v2447, %v2450
        %v2455 = vadd.f32 %v2448, %v2450
        %v2456 = vadd.f32 %v2449, %v2450
        %v2457 = vpack.c.bf16 %v2452, %v2451
        %v2458 = vpack.c.bf16 %v2454, %v2453
        %v2459 = vpack.c.bf16 %v2456, %v2455
        %v2460 = vld [vmem:[%s570] sm:$0xf]
        %v2461 = vld [vmem:[%s570 + $0x4] sm:$0xf]
        %v2462 = vld [vmem:[%s570 + $0x8] sm:$0xf]
        %v2463 = vld [vmem:[%s570 + $0xc] sm:$0xf]
        %v2464 = vperm.slane %v685, 7
        %v2469 = vunpack.c.l.b16 %v2460
        %v2470 = vunpack.c.l.b16 %v2461
        %v2471 = vunpack.c.l.b16 %v2462
        %v2472 = vunpack.c.l.b16 %v2463
        %v2473 = vpack.c.b16 %v2470, %v2469
        %v2474 = vpack.c.b16 %v2472, %v2471
        %v2478 = vsel %vm686, %v2457, 0
        %v2481 = vsel %vm686, %v2458, 0
        %v2484 = vsel %vm686, %v2459, 0
        %2486 = vmatpush.bf16.msra.mxu0 0
        %2487 = vmatpush.bf16.msra.mxu0 0
        %2488 = vmatpush.bf16.msra.mxu0 0
        %2489 = vmatpush.bf16.msra.mxu0 0
        %2490 = vmatpush.bf16.msra.mxu0 0
        %2491 = vmatpush.bf16.msra.mxu0 0
        %2492 = vmatpush.bf16.msra.mxu0 %v2474
        %2493 = vmatpush.bf16.msra.mxu0 %v2473
        %2494 = vmatmul.bf16.gmra.mxu0 %v2478
        %v2495 = vpop.f32.mrf.mxu0
        %v2496 = vadd.f32 %v2464, %v2495
        %v2497 = vpop.f32.mrf.mxu0
        %v2498 = vadd.f32 %v2464, %v2497
        %2499 = vmatmul.bf16.gmra.mxu0 %v2481
        %v2500 = vpop.f32.mrf.mxu0
        %v2501 = vadd.f32 %v2464, %v2500
        %v2502 = vpop.f32.mrf.mxu0
        %v2503 = vadd.f32 %v2464, %v2502
        %2504 = vmatmul.bf16.gmra.mxu0 %v2484
        %v2505 = vpop.f32.mrf.mxu0
        %v2506 = vadd.f32 %v2464, %v2505
        %v2507 = vpop.f32.mrf.mxu0
        %v2508 = vadd.f32 %v2464, %v2507
        %2509 = vdwg.mxu0
        %v2510 = vmul.f32 %v2496, 0.5
        %v2511 = vmul.f32 %v2498, 0.5
        %v2512 = vmul.f32 %v2501, 0.5
        %v2513 = vmul.f32 %v2503, 0.5
        %v2514 = vmul.f32 %v2506, 0.5
        %v2515 = vmul.f32 %v2508, 0.5
        %v2516 = vmul.f32 %v2496, 0.044715
        %v2517 = vmul.f32 %v2498, 0.044715
        %v2518 = vmul.f32 %v2501, 0.044715
        %v2519 = vmul.f32 %v2503, 0.044715
        %v2520 = vmul.f32 %v2506, 0.044715
        %v2521 = vmul.f32 %v2508, 0.044715
        %v2522 = vmul.f32 %v2516, %v2496
        %v2523 = vmul.f32 %v2517, %v2498
        %v2524 = vmul.f32 %v2518, %v2501
        %v2525 = vmul.f32 %v2519, %v2503
        %v2526 = vmul.f32 %v2520, %v2506
        %v2527 = vmul.f32 %v2521, %v2508
        %v2528 = vmul.f32 %v2522, %v2496
        %v2529 = vmul.f32 %v2523, %v2498
        %v2530 = vmul.f32 %v2524, %v2501
        %v2531 = vmul.f32 %v2525, %v2503
        %v2532 = vmul.f32 %v2526, %v2506
        %v2533 = vmul.f32 %v2527, %v2508
        %v2534 = vadd.f32 %v2496, %v2528
        %v2535 = vadd.f32 %v2498, %v2529
        %v2536 = vadd.f32 %v2501, %v2530
        %v2537 = vadd.f32 %v2503, %v2531
        %v2538 = vadd.f32 %v2506, %v2532
        %v2539 = vadd.f32 %v2508, %v2533
        %v2540 = vmul.f32 %v2534, 0.7978846
        %v2541 = vmul.f32 %v2535, 0.7978846
        %v2542 = vmul.f32 %v2536, 0.7978846
        %v2543 = vmul.f32 %v2537, 0.7978846
        %v2544 = vmul.f32 %v2538, 0.7978846
        %v2545 = vmul.f32 %v2539, 0.7978846
        %v2546 = vtanh.pop %v2540
        %v2547 = vtanh.pop %v2541
        %v2548 = vtanh.pop %v2542
        %v2549 = vtanh.pop %v2543
        %v2550 = vtanh.pop %v2544
        %v2551 = vtanh.pop %v2545
        %v2552 = vadd.f32 %v2546, 1.0
        %v2553 = vadd.f32 %v2547, 1.0
        %v2554 = vadd.f32 %v2548, 1.0
        %v2555 = vadd.f32 %v2549, 1.0
        %v2556 = vadd.f32 %v2550, 1.0
        %v2557 = vadd.f32 %v2551, 1.0
        %v2558 = vmul.f32 %v2510, %v2552
        %v2559 = vmul.f32 %v2511, %v2553
        %v2560 = vmul.f32 %v2512, %v2554
        %v2561 = vmul.f32 %v2513, %v2555
        %v2562 = vmul.f32 %v2514, %v2556
        %v2563 = vmul.f32 %v2515, %v2557
        %v2564 = vpack.c.bf16 %v2559, %v2558
        %v2565 = vpack.c.bf16 %v2561, %v2560
        %v2566 = vpack.c.bf16 %v2563, %v2562
        %v2567 = vld [vmem:[%s575] sm:$0xf]
        %v2568 = vld [vmem:[%s575 + $0x4] sm:$0xf]
        %v2569 = vld [vmem:[%s575 + $0x8] sm:$0xf]
        %v2570 = vld [vmem:[%s575 + $0xc] sm:$0xf]
        %v2571 = vld [vmem:[%s575 + $0x10] sm:$0xf]
        %v2572 = vld [vmem:[%s575 + $0x14] sm:$0xf]
        %v2573 = vld [vmem:[%s575 + $0x18] sm:$0xf]
        %v2574 = vld [vmem:[%s575 + $0x1c] sm:$0xf]
        %v2575 = vld [vmem:[%s575 + $0x20] sm:$0xf]
        %v2576 = vld [vmem:[%s575 + $0x24] sm:$0xf]
        %v2577 = vld [vmem:[%s575 + $0x28] sm:$0xf]
        %v2578 = vld [vmem:[%s575 + $0x2c] sm:$0xf]
        %v2579 = vld [vmem:[%s575 + $0x30] sm:$0xf]
        %v2580 = vld [vmem:[%s575 + $0x34] sm:$0xf]
        %v2581 = vld [vmem:[%s575 + $0x38] sm:$0xf]
        %v2582 = vld [vmem:[%s575 + $0x3c] sm:$0xf]
        %v2583 = vperm.slane %v685, 5
        %v2600 = vunpack.c.l.b16 %v2567
        %v2601 = vunpack.c.l.b16 %v2568
        %v2602 = vunpack.c.l.b16 %v2569
        %v2603 = vunpack.c.l.b16 %v2570
        %v2604 = vunpack.c.l.b16 %v2571
        %v2605 = vunpack.c.l.b16 %v2572
        %v2606 = vunpack.c.l.b16 %v2573
        %v2607 = vunpack.c.l.b16 %v2574
        %v2608 = vunpack.c.l.b16 %v2575
        %v2609 = vunpack.c.l.b16 %v2576
        %v2610 = vunpack.c.l.b16 %v2577
        %v2611 = vunpack.c.l.b16 %v2578
        %v2612 = vunpack.c.l.b16 %v2579
        %v2613 = vunpack.c.l.b16 %v2580
        %v2614 = vunpack.c.l.b16 %v2581
        %v2615 = vunpack.c.l.b16 %v2582
        %v2616 = vpack.c.b16 %v2601, %v2600
        %v2617 = vpack.c.b16 %v2603, %v2602
        %v2618 = vpack.c.b16 %v2605, %v2604
        %v2619 = vpack.c.b16 %v2607, %v2606
        %v2620 = vpack.c.b16 %v2609, %v2608
        %v2621 = vpack.c.b16 %v2611, %v2610
        %v2622 = vpack.c.b16 %v2613, %v2612
        %v2623 = vpack.c.b16 %v2615, %v2614
        %2632 = vmatpush.bf16.msra.mxu0 %v2623
        %2633 = vmatpush.bf16.msra.mxu0 %v2622
        %2634 = vmatpush.bf16.msra.mxu0 %v2621
        %2635 = vmatpush.bf16.msra.mxu0 %v2620
        %2636 = vmatpush.bf16.msra.mxu0 %v2619
        %2637 = vmatpush.bf16.msra.mxu0 %v2618
        %2638 = vmatpush.bf16.msra.mxu0 %v2617
        %2639 = vmatpush.bf16.msra.mxu0 %v2616
        %2640 = vmatmul.bf16.gmra.mxu0 %v2564
        %v2641 = vpop.f32.mrf.mxu0
        %v2642 = vadd.f32 %v2583, %v2641
        %v2643 = vpop.f32.mrf.mxu0
        %v2644 = vadd.f32 %v2583, %v2643
        %2645 = vmatmul.bf16.gmra.mxu0 %v2565
        %v2646 = vpop.f32.mrf.mxu0
        %v2647 = vadd.f32 %v2583, %v2646
        %v2648 = vpop.f32.mrf.mxu0
        %v2649 = vadd.f32 %v2583, %v2648
        %2650 = vmatmul.bf16.gmra.mxu0 %v2566
        %v2651 = vpop.f32.mrf.mxu0
        %v2652 = vadd.f32 %v2583, %v2651
        %v2653 = vpop.f32.mrf.mxu0
        %v2654 = vadd.f32 %v2583, %v2653
        %2655 = vdwg.mxu0
        %v2656 = vadd.f32 %v2305, %v2642
        %v2657 = vadd.f32 %v2306, %v2644
        %v2658 = vadd.f32 %v2307, %v2647
        %v2659 = vadd.f32 %v2308, %v2649
        %v2660 = vadd.f32 %v2309, %v2652
        %v2661 = vadd.f32 %v2310, %v2654
        %2662 = vst.msk [vmem:[#allocation2] sm:$0xff] %vm686, %v2656
        %2663 = vst.msk [vmem:[#allocation2 + $0x8] sm:$0xff] %vm686, %v2657
        %2664 = vst.msk [vmem:[#allocation2 + $0x10] sm:$0xff] %vm686, %v2658
        %2665 = vst.msk [vmem:[#allocation2 + $0x18] sm:$0xff] %vm686, %v2659
        %2666 = vst.msk [vmem:[#allocation2 + $0x20] sm:$0xff] %vm686, %v2660
        %2667 = vst.msk [vmem:[#allocation2 + $0x28] sm:$0xff] %vm686, %v2661
        %p2668 = scmp.eq.s32.totalorder %s33, 1
        // Predicated region
        $region81: #{vit_forward.1} parent=75 // pred_check
          %p2669 = pneg %p2668
        $region82: #{vit_forward.1} parent=75 // pred_check_branch
          %2671 = sbr.rel (%p2669) target = $region84
        $region83: #{vit_forward.1} parent=75 // pred_region
          %v2673 = vrot.slane %v2661, 7
          %vm2675 = vcmask 1040384
          %v2676 = vsel %vm2675, %v2658, %v2673
          %v2677 = vld [vmem:[%s10] sm:$0x1]
          %v2678 = vld [vmem:[%s11] sm:$0x1]
          %vm2679 = vcmask 254976
          %v2680 = vsel %vm2679, %v2676, 0.0
          %2681 = vadd.xlane.f32.xlu0 %v2680
          %v2682 = vpop.xlane.xlu0 %2681
          %v2683 = vmul.f32 %v2682, %v711
          %v2684 = vsub.f32 %v2676, %v2683
          %v2685 = vmul.f32 %v2684, %v2684
          %v2686 = vsel %vm2679, %v2685, 0.0
          %2687 = vadd.xlane.f32.xlu0 %v2686
          %v2688 = vpop.xlane.xlu0 %2687
          %v2689 = vmul.f32 %v2688, %v711
          %v2690 = vadd.f32 %v2689, 1e-05
          %v2691 = vrsqrt.pop %v2690
          %v2692 = vmul.f32 %v2691, %v2690
          %v2693 = vmul.f32 %v2692, %v2691
          %v2694 = vmul.f32 0.5, %v2693
          %v2695 = vsub.f32 1.5, %v2694
          %v2696 = vmul.f32 %v2691, %v2695
          %vm2697 = vweird.f32 %v2690
          %vm2698 = vweird.f32 %v2691
          %vm2699 = vmor %vm2697, %vm2698
          %v2700 = vsel %vm2699, %v2691, %v2696
          %v2701 = vmul.f32 %v2684, %v2700
          %v2703 = vperm.slane %v2677, 0
          %v2705 = vmul.f32 %v2701, %v2703
          %v2707 = vperm.slane %v2678, 0
          %v2709 = vadd.f32 %v2705, %v2707
          %v2710 = vpack.c.bf16 %v2709, %v2709
          %v2711 = vld [vmem:[%s12] sm:$0xf]
          %v2712 = vld [vmem:[%s12 + $0x4] sm:$0xf]
          %v2713 = vld [vmem:[%s12 + $0x8] sm:$0xf]
          %v2714 = vld [vmem:[%s12 + $0xc] sm:$0xf]
          %v2715 = vld [vmem:[%s13] sm:$0x1]
          %v2717 = vperm.slane %v2715, 0
          %v2723 = vunpack.c.l.b16 %v2711
          %v2724 = vunpack.c.l.b16 %v2712
          %v2725 = vunpack.c.l.b16 %v2713
          %v2726 = vunpack.c.l.b16 %v2714
          %v2727 = vpack.c.b16 %v2724, %v2723
          %v2728 = vpack.c.b16 %v2726, %v2725
          %v2732 = vsel %vm686, %v2710, 0
          %2734 = vmatpush.bf16.msra.mxu0 0
          %2735 = vmatpush.bf16.msra.mxu0 0
          %2736 = vmatpush.bf16.msra.mxu0 0
          %2737 = vmatpush.bf16.msra.mxu0 0
          %2738 = vmatpush.bf16.msra.mxu0 0
          %2739 = vmatpush.bf16.msra.mxu0 0
          %2740 = vmatpush.bf16.msra.mxu0 %v2728
          %2741 = vmatpush.bf16.msra.mxu0 %v2727
          %2742 = vmatmul.bf16.gmra.mxu0 %v2732
          %v2743 = vpop.f32.mrf.mxu0
          %v2744 = vadd.f32 %v2717, %v2743
          %v2745 = vpop.f32.mrf.mxu0
          %2746 = vdwg.mxu0
          %2747 = vst [vmem:[%s548] sm:$0x3] %v2744
        $region84: #{vit_forward.1} parent=75 // pred_fallthru
          _
        %s2748 = sand.u32 %s372, 1
        %s2749 = scalar_lea.sflag [#allocation4], %s2748
        %s2750 = sand.u32 %s372, 1
        %s2751 = smul.addr %s2750, 2
        %s2752 = scalar_lea.vmem [#allocation3], %s2751
        // Predicated region
        $region85: #{vit_forward.1} parent=75 // pred_check
          %p2753 = pneg %p382
        $region86: #{vit_forward.1} parent=75 // pred_check_branch
          %2755 = sbr.rel (%p2753) target = $region88
        $region87: #{vit_forward.1} parent=75 // pred_region
          %2757 = vsyncadd %s2749, 0
          %s2758 = smul.addr %s32, 2
          %s2759 = scalar_lea.hbm %s14, %s2758
          %s2761 = sshll.u32 %s2752, 4
          %s2762 = int_to_ptr.vmem [resolvable:$true] %s2761
          %s2763 = sshll.u32 %s2759, 4
          %s2764 = int_to_ptr.hbm [resolvable:$true] %s2763
          %2766 = dma.vmem_to_hbm [thread:$0]  %s2762, 32, %s2764, %s2749
        $region88: #{vit_forward.1} parent=75 // pred_fallthru
          _
      $region76: #{vit_forward.1} parent=5 // pred_fallthru
        _
      %p2767 = scmp.le.s32.totalorder 2, %s23
      // Predicated region
      $region89: #{vit_forward.1} parent=5 // pred_check
        %p2768 = pneg %p2767
      $region90: #{vit_forward.1} parent=5 // pred_check_branch
        %2770 = sbr.rel (%p2768) target = $region92
      $region91: #{vit_forward.1} parent=5 // pred_region
        %s2771 = ssub.s32 %s23, 2
        // Predicated region
        $region93: #{vit_forward.1} parent=91 // pred_check
          %p2772 = pneg %p388
        $region94: #{vit_forward.1} parent=91 // pred_check_branch
          %2774 = sbr.rel (%p2772) target = $region96
        $region95: #{vit_forward.1} parent=91 // pred_region
          %s2775 = sand.u32 %s373, 1
          %s2776 = scalar_lea.sflag [#allocation4], %s2775
          %s2777 = sand.u32 %s373, 1
          %s2778 = smul.addr %s2777, 2
          %s2779 = scalar_lea.vmem [#allocation3], %s2778
          %2781 = dma.done %s2776, 32
        $region96: #{vit_forward.1} parent=91 // pred_fallthru
          _
      $region92: #{vit_forward.1} parent=5 // pred_fallthru
        _
    $region6: #{vit_forward.1} parent=1 // loop_footer
      %s27 = sadd.s32 1, %s23
    $region7: #{vit_forward.1} parent=1 // loop_footer_branch
      %22 = sbr.rel target = $region3
    $region8: #{vit_forward.1} parent=1 // loop_exit
      _
    %2782 = vsyncpa [#allocation4], 1
    %s2783 = scalar_lea.sflag [#allocation4], 1
    %2784 = vsyncpa %s2783, 1

</llo_original>
